<compile_context>
chip_gen: v7x
topology: tpu7x:2x2x1
jax: 0.10.0
libtpu: 0.0.40
codegen_flags: <defaults>
</compile_context>

<pallas_src>
import functools

import jax
import jax.numpy as jnp
import numpy as np
from jax.experimental import pallas as pl
from jax.experimental.pallas import tpu as pltpu

# filter spec hard-coded in the PyTorch module
FILTERS = [(1, 32), (2, 32), (3, 64), (4, 128), (5, 256), (6, 512), (7, 1024)]
N_FILTERS = sum(n for _, n in FILTERS)   # 2048
MAX_WIDTH = max(w for w, _ in FILTERS)   # 7
N_HIGHWAY = 2

TILE_F_CONV = 1024   # char-CNN output-column tile (2 tiles -> 2nd parallel axis)
TILE_F_HW = 512      # highway in-kernel column tile (fused [nl|gate] dot: 1024 wide)
TILE_N_MAX = 256     # max row-block size
H_PAD = 128          # projection output padded to a lane-dense width
NEG_BIG = -1e30      # "minus infinity" for the max-over-time column mask


def _round_up(a, b):
    return (a + b - 1) // b * b


def _pick_row_block(n, lo=128, hi=TILE_N_MAX):
    """Row-block size: multiple of 16 (bf16 sublane pack), minimal padding waste."""
    n16 = _round_up(n, 16)
    if n16 <= hi:
        return n16
    best_tn, best_pad = hi, _round_up(n, hi) - n
    for tn in range(hi - 16, lo - 1, -16):
        pad = _round_up(n, tn) - n
        if pad < best_pad:
            best_tn, best_pad = tn, pad
    return best_tn


# ----------------------------------------------------------------------------
# Kernel 1: fused char-CNN — conv (as im2col matmul) + max-over-time + ReLU.
# Grid: (row blocks, F column tiles), both parallel.
# ----------------------------------------------------------------------------
def _char_cnn_kernel(xw_ref, w_ref, b_ref, nmask_ref, o_ref, m_ref, *, t_steps):
    # xw_ref: (T, tn, Kdim) bf16 im2col windows (one per time position)
    # w_ref:  (Kdim, tf) bf16 fused conv weight column tile
    # b_ref:  (1, tf) f32; nmask_ref: (MAX_WIDTH-1, tf) f32 (0 valid / -1e30 invalid)
    # o_ref:  (tn, tf) bf16 output; m_ref: (tn, tf) f32 running-max VMEM scratch
    t_main = t_steps - (MAX_WIDTH - 1)   # positions where every filter is valid

    # position 0 (always fully valid since T >= MAX_WIDTH) seeds the running max
    m_ref[...] = jnp.dot(xw_ref[0], w_ref[...], preferred_element_type=jnp.float32)

    # positions 1 .. T-7: every filter width is valid -> plain max, no mask
    @pl.loop(1, t_main)
    def _(s):
        m_ref[...] = jnp.maximum(
            m_ref[...],
            jnp.dot(xw_ref[s], w_ref[...], preferred_element_type=jnp.float32))

    # last MAX_WIDTH-1 positions: wide filters run off the word end; add a
    # precomputed 0/-1e30 row per step (cheaper than a per-element select).
    for r in range(MAX_WIDTH - 2, -1, -1):      # r = remaining_chars - 1
        s = t_steps - 1 - r
        acc = jnp.dot(xw_ref[s], w_ref[...], preferred_element_type=jnp.float32)
        m_ref[...] = jnp.maximum(m_ref[...], acc + nmask_ref[r:r + 1, :])

    # bias is time-invariant: max_t(conv) + b == max_t(conv + b); ReLU after max
    o_ref[...] = jnp.maximum(m_ref[...] + b_ref[...], 0.0).astype(o_ref.dtype)


def char_cnn(x_win, w_all, b_all, nmask, *, tn, tf):
    t, n_pad, k_dim = x_win.shape
    f = w_all.shape[1]
    kernel = functools.partial(_char_cnn_kernel, t_steps=t)
    return pl.pallas_call(
        kernel,
        out_shape=jax.ShapeDtypeStruct((n_pad, f), jnp.bfloat16),
        grid=(n_pad // tn, f // tf),
        in_specs=[
            # windows: invariant along the inner column axis -> DMA'd once/row block
            pl.BlockSpec((t, tn, k_dim), lambda i, j: (0, i, 0)),
            pl.BlockSpec((k_dim, tf), lambda i, j: (0, j)),         # conv weight tile
            pl.BlockSpec((1, tf), lambda i, j: (0, j)),             # conv bias tile
            pl.BlockSpec((MAX_WIDTH - 1, tf), lambda i, j: (0, j)),  # tail-step mask
        ],
        out_specs=pl.BlockSpec((tn, tf), lambda i, j: (i, j)),      # lane-dense
        scratch_shapes=[pltpu.VMEM((tn, tf), jnp.float32)],         # running max
        compiler_params=pltpu.CompilerParams(
            dimension_semantics=("parallel", "parallel"),
            vmem_limit_bytes=32 * 1024 * 1024),
    )(x_win, w_all, b_all, nmask)


# ----------------------------------------------------------------------------
# Kernel 2: Highway layer 1 + Highway layer 2 + projection, fused.
# Grid over row blocks only; both 16 MiB highway weights (and the projection
# weight) are VMEM-resident, so each weight is read from HBM exactly once.
# Highway: out = g * x + (1 - g) * relu(W_nl x + b_nl), g = sigmoid(W_g x + b_g).
# ----------------------------------------------------------------------------
def _highway_stack_kernel(x_ref, w1_ref, b1_ref, w2_ref, b2_ref, pw_ref, pb_ref,
                          o_ref, h1_ref, *, f, tf):
    n_tiles = f // tf
    two_tf = 2 * tf

    # ---------- highway layer 1: column tiles -> bf16 VMEM scratch ----------
    @pl.loop(0, n_tiles)
    def _(j):
        c0 = pl.multiple_of(j * two_tf, two_tf)   # [W_nl_j | W_g_j] tile offset
        x0 = pl.multiple_of(j * tf, tf)
        y = (jnp.dot(x_ref[...], w1_ref[:, pl.ds(c0, two_tf)],
                     preferred_element_type=jnp.float32)
             + b1_ref[:, pl.ds(c0, two_tf)])
        nl = jnp.maximum(y[:, :tf], 0.0)
        g = jax.nn.sigmoid(y[:, tf:])
        xj = x_ref[:, pl.ds(x0, tf)].astype(jnp.float32)
        h1_ref[:, pl.ds(x0, tf)] = (g * xj + (1.0 - g) * nl).astype(h1_ref.dtype)

    # ---------- highway layer 2 fused with the projection (accum in o_ref) ----------
    o_ref[...] = jnp.broadcast_to(pb_ref[...], o_ref.shape)

    @pl.loop(0, n_tiles)
    def _(j):
        c0 = pl.multiple_of(j * two_tf, two_tf)
        x0 = pl.multiple_of(j * tf, tf)
        y = (jnp.dot(h1_ref[...], w2_ref[:, pl.ds(c0, two_tf)],
                     preferred_element_type=jnp.float32)
             + b2_ref[:, pl.ds(c0, two_tf)])
        nl = jnp.maximum(y[:, :tf], 0.0)
        g = jax.nn.sigmoid(y[:, tf:])
        hj = h1_ref[:, pl.ds(x0, tf)].astype(jnp.float32)
        feat = g * hj + (1.0 - g) * nl                       # highway-2 output tile
        o_ref[...] += jnp.dot(feat.astype(pw_ref.dtype),
                              pw_ref[pl.ds(x0, tf), :],
                              preferred_element_type=jnp.float32)


def highway_stack(x, w1, b1, w2, b2, proj_w, proj_b, *, tn, tf):
    n, f = x.shape
    h = proj_w.shape[1]
    kernel = functools.partial(_highway_stack_kernel, f=f, tf=tf)

    def resident():
        return pl.BlockSpec(memory_space=pltpu.MemorySpace.VMEM)

    return pl.pallas_call(
        kernel,
        out_shape=jax.ShapeDtypeStruct((n, h), jnp.float32),
        grid=(n // tn,),
        in_specs=[
            pl.BlockSpec((tn, f), lambda i: (i, 0)),   # activations (row block)
            resident(), resident(),                    # W1 | b1  (VMEM-resident)
            resident(), resident(),                    # W2 | b2  (VMEM-resident)
            resident(), resident(),                    # proj W | proj b
        ],
        out_specs=pl.BlockSpec((tn, h), lambda i: (i, 0)),   # lane-dense (tn, 128)
        scratch_shapes=[pltpu.VMEM((tn, f), jnp.bfloat16)],  # highway-1 output
        compiler_params=pltpu.CompilerParams(
            dimension_semantics=("parallel",),
            # ~33 MiB resident weights + pipelined blocks + bounded loop temps;
            # must be raised above the 32 MiB scoped default, stays < v7x 64 MiB.
            vmem_limit_bytes=50 * 1024 * 1024),
    )(x, w1, b1, w2, b2, proj_w, proj_b)


# ----------------------------------------------------------------------------
# Parameter init (deterministic, shapes/init ranges from CharEmb.__init__),
# assembled into kernel-friendly fused layouts.
# ----------------------------------------------------------------------------
def init_params(key, char_size, emb_size, hidden_size):
    keys = jax.random.split(key, 32)
    params = {}

    # nn.Embedding(char_size, emb_size), uniform(-r, r), r = 0.5 / char_size
    r = 0.5 / char_size
    params["char_emb"] = jax.random.uniform(
        keys[0], (char_size, emb_size), jnp.float32, -r, r)

    # Conv1d(emb_size -> num, kernel_size=width) per filter, fused into one
    # (Kdim, 2048) weight; rows ordered (tap k, channel c); taps >= width are 0.
    k_dim = _round_up(MAX_WIDTH * emb_size, 128)
    w_all = np.zeros((k_dim, N_FILTERS), np.float32)
    b_all = np.zeros((1, N_FILTERS), np.float32)
    nmask = np.zeros((MAX_WIDTH - 1, N_FILTERS), np.float32)
    col = 0
    for i, (width, num) in enumerate(FILTERS):
        bound = 1.0 / float(emb_size * width) ** 0.5
        w = jax.random.uniform(keys[1 + i], (width, emb_size, num),
                               jnp.float32, -bound, bound)
        b = jax.random.uniform(keys[8 + i], (1, num), jnp.float32, -bound, bound)
        w_all[:width * emb_size, col:col + num] = np.asarray(w).reshape(
            width * emb_size, num)
        b_all[:, col:col + num] = np.asarray(b)
        for rr in range(MAX_WIDTH - 1):      # rr = remaining_chars - 1
            if width > rr + 1:               # filter runs off the word end
                nmask[rr, col:col + num] = NEG_BIG
        col += num
    params["conv_w"] = jnp.asarray(w_all).astype(jnp.bfloat16)
    params["conv_b"] = jnp.asarray(b_all)
    params["conv_nmask"] = jnp.asarray(nmask)

    # Highway(2048, 2): each layer is Linear(F, 2F); columns interleaved per
    # TILE_F_HW so one weight slice carries [W_nl_j | W_gate_j].
    f = N_FILTERS
    nt = f // TILE_F_HW
    bound = 1.0 / float(f) ** 0.5
    hw = []
    for l in range(N_HIGHWAY):
        w_nl = jax.random.uniform(keys[16 + 2 * l], (f, f), jnp.float32, -bound, bound)
        w_g = jax.random.uniform(keys[17 + 2 * l], (f, f), jnp.float32, -bound, bound)
        b_nl = jax.random.uniform(keys[24 + l], (1, f), jnp.float32, -bound, bound)
        b_g = jnp.ones((1, f), jnp.float32)          # layer.bias[input_dim:].fill_(1)
        w_cat = jnp.stack(
            [w_nl.reshape(f, nt, TILE_F_HW), w_g.reshape(f, nt, TILE_F_HW)],
            axis=2).reshape(f, 2 * f).astype(jnp.bfloat16)
        b_cat = jnp.stack(
            [b_nl.reshape(1, nt, TILE_F_HW), b_g.reshape(1, nt, TILE_F_HW)],
            axis=2).reshape(1, 2 * f)
        hw.append((w_cat, b_cat))
    params["highway"] = hw

    # projection Linear(2048, hidden_size); columns zero-padded to a lane-dense 128
    h_pad = _round_up(hidden_size, H_PAD)
    pw = jax.random.uniform(keys[30], (f, hidden_size), jnp.float32, -bound, bound)
    pb = jax.random.uniform(keys[31], (1, hidden_size), jnp.float32, -bound, bound)
    params["proj_w"] = jnp.pad(
        pw, ((0, 0), (0, h_pad - hidden_size))).astype(jnp.bfloat16)
    params["proj_b"] = jnp.pad(pb, ((0, 0), (0, h_pad - hidden_size)))
    return params


# ----------------------------------------------------------------------------
# Forward pass (use_lstm=False path)
# ----------------------------------------------------------------------------
def char_emb_forward(params, sentence, max_word_size, hidden_size):
    # Guard the t_out <= 0 edge case (PyTorch Conv1d would raise).
    assert max_word_size >= MAX_WIDTH, (
        f"max_word_size must be >= largest filter width ({MAX_WIDTH})")

    bz, seq_len, t = sentence.shape
    n = bz * seq_len
    flat = sentence.reshape(n, t)
    c = params["char_emb"].shape[1]

    # row-block size shared by all kernels; pad N to a multiple of it
    tn = _pick_row_block(n)
    n_pad = _round_up(n, tn)

    # glue: embedding gather + im2col windows (layout plumbing, plain JAX)
    x = jnp.take(params["char_emb"], flat, axis=0)            # (N, T, C) f32
    if n_pad != n:
        x = jnp.pad(x, ((0, n_pad - n), (0, 0), (0, 0)))
    x = jnp.pad(x, ((0, 0), (0, MAX_WIDTH - 1), (0, 0)))      # zero-pad time
    k_dim = params["conv_w"].shape[0]
    wins = jnp.stack(
        [x[:, s:s + MAX_WIDTH, :].reshape(n_pad, MAX_WIDTH * c) for s in range(t)],
        axis=0)                                               # (T, Npad, 7*C)
    wins = jnp.pad(wins, ((0, 0), (0, 0), (0, k_dim - MAX_WIDTH * c)))
    x_win = wins.astype(jnp.bfloat16)
    # TODO(synk): for large N, build the 7-tap windows in-kernel from the raw
    # (Npad, T+6, C) embeddings to avoid the ~7x im2col HBM duplication.

    # fused char-CNN (conv + max-over-time + relu) -> (Npad, 2048) bf16
    feat = char_cnn(x_win, params["conv_w"], params["conv_b"],
                    params["conv_nmask"], tn=tn, tf=TILE_F_CONV)

    # highway-1 + highway-2 + projection, weights VMEM-resident -> (Npad, 128) f32
    w1, b1 = params["highway"][0]
    w2, b2 = params["highway"][1]
    out = highway_stack(feat, w1, b1, w2, b2,
                        params["proj_w"], params["proj_b"], tn=tn, tf=TILE_F_HW)

    out = out[:n, :hidden_size]
    # TODO(synk): use_lstm=True path (2-layer bidirectional nn.LSTM with randn
    # hidden state every forward) is not implemented; this models use_lstm=False.
    return out.reshape(bz, seq_len, hidden_size)


if __name__ == "__main__":
    char_size = 50
    max_word_size = 16
    emb_size = 16
    hidden_size = 32
    bz, seq_len = 2, 8

    key = jax.random.PRNGKey(0)
    k_params, k_sent = jax.random.split(key)
    params = init_params(k_params, char_size, emb_size, hidden_size)
    sentence = jax.random.randint(
        k_sent, (bz, seq_len, max_word_size), 0, char_size, dtype=jnp.int32)

    out = char_emb_forward(params, sentence, max_word_size, hidden_size)
    out = jax.block_until_ready(out)
    assert out.shape == (bz, seq_len, hidden_size), out.shape
    assert bool(jnp.all(jnp.isfinite(out))), "non-finite output"
    print("KERNEL_OK")
</pallas_src>

<mosaic_0001>
module attributes {stable_mosaic.version = 11 : i64} {
  func.func @_char_cnn_kernel(%arg0: i32, %arg1: i32, %arg2: memref<16x16x128xbf16, #tpu.memory_space<vmem>>, %arg3: memref<128x1024xbf16, #tpu.memory_space<vmem>>, %arg4: memref<1x1024xf32, #tpu.memory_space<vmem>>, %arg5: memref<6x1024xf32, #tpu.memory_space<vmem>>, %arg6: memref<16x1024xbf16, #tpu.memory_space<vmem>>, %arg7: memref<16x1024xf32, #tpu.memory_space<vmem>>) attributes {dimension_semantics = [#tpu.dimension_semantics<parallel>, #tpu.dimension_semantics<parallel>], iteration_bounds = array<i64: 1, 2>, scalar_prefetch = 0 : i64, scratch_operands = 1 : i64, tpu.core_type = #tpu.core_type<tc>, window_params = [{transform_indices = @transform_0, window_bounds = array<i64: 16, 16, 128>}, {transform_indices = @transform_1, window_bounds = array<i64: 128, 1024>}, {transform_indices = @transform_2, window_bounds = array<i64: 1, 1024>}, {transform_indices = @transform_3, window_bounds = array<i64: 6, 1024>}, {transform_indices = @transform_4, window_bounds = array<i64: 16, 1024>}]} {
    %c0 = arith.constant 0 : index
    %c0_0 = arith.constant 0 : index
    %c0_1 = arith.constant 0 : index
    %0 = vector.load %arg2[%c0, %c0_0, %c0_1] : memref<16x16x128xbf16, #tpu.memory_space<vmem>>, vector<1x16x128xbf16>
    %1 = vector.shape_cast %0 : vector<1x16x128xbf16> to vector<16x128xbf16>
    %c0_2 = arith.constant 0 : index
    %c0_3 = arith.constant 0 : index
    %2 = vector.load %arg3[%c0_2, %c0_3] : memref<128x1024xbf16, #tpu.memory_space<vmem>>, vector<128x1024xbf16>
    %cst = arith.constant dense<0.000000e+00> : vector<16x1024xf32>
    %3 = tpu.matmul %1, %2, %cst {dimension_numbers = #tpu.dot_dimension_numbers<[1], [0], [0], [1], [0, 0, 1, 1], [], []>} : vector<16x128xbf16>, vector<128x1024xbf16>, vector<16x1024xf32> -> vector<16x1024xf32>
    %c0_4 = arith.constant 0 : index
    %c0_5 = arith.constant 0 : index
    %4 = vector.load %arg7[%c0_4, %c0_5] : memref<16x1024xf32, #tpu.memory_space<vmem>>, vector<16x1024xf32>
    tpu.vector_store %arg7[%c0_4, %c0_5], %3 {strides = array<i32>} : memref<16x1024xf32, #tpu.memory_space<vmem>>, vector<16x1024xf32>,
    %c0_i32 = arith.constant 0 : i32
    %c9_i32 = arith.constant 9 : i32
    %5 = arith.addi %c0_i32, %c9_i32 : i32
    %c1_i32 = arith.constant 1 : i32
    scf.for %arg8 = %c0_i32 to %5 step %c1_i32  : i32 {
      %c1_i32_75 = arith.constant 1 : i32
      %74 = arith.muli %arg8, %c1_i32_75 : i32
      %c1_i32_76 = arith.constant 1 : i32
      %75 = arith.addi %c1_i32_76, %74 : i32
      %c0_77 = arith.constant 0 : index
      %c0_78 = arith.constant 0 : index
      %76 = vector.load %arg7[%c0_77, %c0_78] : memref<16x1024xf32, #tpu.memory_space<vmem>>, vector<16x1024xf32>
      %77 = arith.index_cast %75 : i32 to index
      %c0_79 = arith.constant 0 : index
      %c0_80 = arith.constant 0 : index
      %78 = vector.load %arg2[%77, %c0_79, %c0_80] : memref<16x16x128xbf16, #tpu.memory_space<vmem>>, vector<1x16x128xbf16>
      %79 = vector.shape_cast %78 : vector<1x16x128xbf16> to vector<16x128xbf16>
      %c0_81 = arith.constant 0 : index
      %c0_82 = arith.constant 0 : index
      %80 = vector.load %arg3[%c0_81, %c0_82] : memref<128x1024xbf16, #tpu.memory_space<vmem>>, vector<128x1024xbf16>
      %cst_83 = arith.constant dense<0.000000e+00> : vector<16x1024xf32>
      %81 = tpu.matmul %79, %80, %cst_83 {dimension_numbers = #tpu.dot_dimension_numbers<[1], [0], [0], [1], [0, 0, 1, 1], [], []>} : vector<16x128xbf16>, vector<128x1024xbf16>, vector<16x1024xf32> -> vector<16x1024xf32>
      %82 = arith.maximumf %76, %81 : vector<16x1024xf32>
      %c0_84 = arith.constant 0 : index
      %c0_85 = arith.constant 0 : index
      %83 = vector.load %arg7[%c0_84, %c0_85] : memref<16x1024xf32, #tpu.memory_space<vmem>>, vector<16x1024xf32>
      tpu.vector_store %arg7[%c0_84, %c0_85], %82 {strides = array<i32>} : memref<16x1024xf32, #tpu.memory_space<vmem>>, vector<16x1024xf32>,
    }
    %c9_i32_6 = arith.constant 9 : i32
    %c10 = arith.constant 10 : index
    %c0_7 = arith.constant 0 : index
    %c0_8 = arith.constant 0 : index
    %6 = vector.load %arg2[%c10, %c0_7, %c0_8] : memref<16x16x128xbf16, #tpu.memory_space<vmem>>, vector<1x16x128xbf16>
    %7 = vector.shape_cast %6 : vector<1x16x128xbf16> to vector<16x128xbf16>
    %c0_9 = arith.constant 0 : index
    %c0_10 = arith.constant 0 : index
    %8 = vector.load %arg3[%c0_9, %c0_10] : memref<128x1024xbf16, #tpu.memory_space<vmem>>, vector<128x1024xbf16>
    %cst_11 = arith.constant dense<0.000000e+00> : vector<16x1024xf32>
    %9 = tpu.matmul %7, %8, %cst_11 {dimension_numbers = #tpu.dot_dimension_numbers<[1], [0], [0], [1], [0, 0, 1, 1], [], []>} : vector<16x128xbf16>, vector<128x1024xbf16>, vector<16x1024xf32> -> vector<16x1024xf32>
    %c0_12 = arith.constant 0 : index
    %c0_13 = arith.constant 0 : index
    %10 = vector.load %arg7[%c0_12, %c0_13] : memref<16x1024xf32, #tpu.memory_space<vmem>>, vector<16x1024xf32>
    %c5 = arith.constant 5 : index
    %c0_14 = arith.constant 0 : index
    %11 = vector.load %arg5[%c5, %c0_14] : memref<6x1024xf32, #tpu.memory_space<vmem>>, vector<1x1024xf32>
    %12 = vector.broadcast %11 : vector<1x1024xf32> to vector<16x1024xf32>
    %13 = arith.addf %9, %12 : vector<16x1024xf32>
    %14 = arith.maximumf %10, %13 : vector<16x1024xf32>
    %c0_15 = arith.constant 0 : index
    %c0_16 = arith.constant 0 : index
    %15 = vector.load %arg7[%c0_15, %c0_16] : memref<16x1024xf32, #tpu.memory_space<vmem>>, vector<16x1024xf32>
    tpu.vector_store %arg7[%c0_15, %c0_16], %14 {strides = array<i32>} : memref<16x1024xf32, #tpu.memory_space<vmem>>, vector<16x1024xf32>,
    %c11 = arith.constant 11 : index
    %c0_17 = arith.constant 0 : index
    %c0_18 = arith.constant 0 : index
    %16 = vector.load %arg2[%c11, %c0_17, %c0_18] : memref<16x16x128xbf16, #tpu.memory_space<vmem>>, vector<1x16x128xbf16>
    %17 = vector.shape_cast %16 : vector<1x16x128xbf16> to vector<16x128xbf16>
    %c0_19 = arith.constant 0 : index
    %c0_20 = arith.constant 0 : index
    %18 = vector.load %arg3[%c0_19, %c0_20] : memref<128x1024xbf16, #tpu.memory_space<vmem>>, vector<128x1024xbf16>
    %cst_21 = arith.constant dense<0.000000e+00> : vector<16x1024xf32>
    %19 = tpu.matmul %17, %18, %cst_21 {dimension_numbers = #tpu.dot_dimension_numbers<[1], [0], [0], [1], [0, 0, 1, 1], [], []>} : vector<16x128xbf16>, vector<128x1024xbf16>, vector<16x1024xf32> -> vector<16x1024xf32>
    %c0_22 = arith.constant 0 : index
    %c0_23 = arith.constant 0 : index
    %20 = vector.load %arg7[%c0_22, %c0_23] : memref<16x1024xf32, #tpu.memory_space<vmem>>, vector<16x1024xf32>
    %c4 = arith.constant 4 : index
    %c0_24 = arith.constant 0 : index
    %21 = vector.load %arg5[%c4, %c0_24] : memref<6x1024xf32, #tpu.memory_space<vmem>>, vector<1x1024xf32>
    %22 = vector.broadcast %21 : vector<1x1024xf32> to vector<16x1024xf32>
    %23 = arith.addf %19, %22 : vector<16x1024xf32>
    %24 = arith.maximumf %20, %23 : vector<16x1024xf32>
    %c0_25 = arith.constant 0 : index
    %c0_26 = arith.constant 0 : index
    %25 = vector.load %arg7[%c0_25, %c0_26] : memref<16x1024xf32, #tpu.memory_space<vmem>>, vector<16x1024xf32>
    tpu.vector_store %arg7[%c0_25, %c0_26], %24 {strides = array<i32>} : memref<16x1024xf32, #tpu.memory_space<vmem>>, vector<16x1024xf32>,
    %c12 = arith.constant 12 : index
    %c0_27 = arith.constant 0 : index
    %c0_28 = arith.constant 0 : index
    %26 = vector.load %arg2[%c12, %c0_27, %c0_28] : memref<16x16x128xbf16, #tpu.memory_space<vmem>>, vector<1x16x128xbf16>
    %27 = vector.shape_cast %26 : vector<1x16x128xbf16> to vector<16x128xbf16>
    %c0_29 = arith.constant 0 : index
    %c0_30 = arith.constant 0 : index
    %28 = vector.load %arg3[%c0_29, %c0_30] : memref<128x1024xbf16, #tpu.memory_space<vmem>>, vector<128x1024xbf16>
    %cst_31 = arith.constant dense<0.000000e+00> : vector<16x1024xf32>
    %29 = tpu.matmul %27, %28, %cst_31 {dimension_numbers = #tpu.dot_dimension_numbers<[1], [0], [0], [1], [0, 0, 1, 1], [], []>} : vector<16x128xbf16>, vector<128x1024xbf16>, vector<16x1024xf32> -> vector<16x1024xf32>
    %c0_32 = arith.constant 0 : index
    %c0_33 = arith.constant 0 : index
    %30 = vector.load %arg7[%c0_32, %c0_33] : memref<16x1024xf32, #tpu.memory_space<vmem>>, vector<16x1024xf32>
    %c3 = arith.constant 3 : index
    %c0_34 = arith.constant 0 : index
    %31 = vector.load %arg5[%c3, %c0_34] : memref<6x1024xf32, #tpu.memory_space<vmem>>, vector<1x1024xf32>
    %32 = vector.broadcast %31 : vector<1x1024xf32> to vector<16x1024xf32>
    %33 = arith.addf %29, %32 : vector<16x1024xf32>
    %34 = arith.maximumf %30, %33 : vector<16x1024xf32>
    %c0_35 = arith.constant 0 : index
    %c0_36 = arith.constant 0 : index
    %35 = vector.load %arg7[%c0_35, %c0_36] : memref<16x1024xf32, #tpu.memory_space<vmem>>, vector<16x1024xf32>
    tpu.vector_store %arg7[%c0_35, %c0_36], %34 {strides = array<i32>} : memref<16x1024xf32, #tpu.memory_space<vmem>>, vector<16x1024xf32>,
    %c13 = arith.constant 13 : index
    %c0_37 = arith.constant 0 : index
    %c0_38 = arith.constant 0 : index
    %36 = vector.load %arg2[%c13, %c0_37, %c0_38] : memref<16x16x128xbf16, #tpu.memory_space<vmem>>, vector<1x16x128xbf16>
    %37 = vector.shape_cast %36 : vector<1x16x128xbf16> to vector<16x128xbf16>
    %c0_39 = arith.constant 0 : index
    %c0_40 = arith.constant 0 : index
    %38 = vector.load %arg3[%c0_39, %c0_40] : memref<128x1024xbf16, #tpu.memory_space<vmem>>, vector<128x1024xbf16>
    %cst_41 = arith.constant dense<0.000000e+00> : vector<16x1024xf32>
    %39 = tpu.matmul %37, %38, %cst_41 {dimension_numbers = #tpu.dot_dimension_numbers<[1], [0], [0], [1], [0, 0, 1, 1], [], []>} : vector<16x128xbf16>, vector<128x1024xbf16>, vector<16x1024xf32> -> vector<16x1024xf32>
    %c0_42 = arith.constant 0 : index
    %c0_43 = arith.constant 0 : index
    %40 = vector.load %arg7[%c0_42, %c0_43] : memref<16x1024xf32, #tpu.memory_space<vmem>>, vector<16x1024xf32>
    %c2 = arith.constant 2 : index
    %c0_44 = arith.constant 0 : index
    %41 = vector.load %arg5[%c2, %c0_44] : memref<6x1024xf32, #tpu.memory_space<vmem>>, vector<1x1024xf32>
    %42 = vector.broadcast %41 : vector<1x1024xf32> to vector<16x1024xf32>
    %43 = arith.addf %39, %42 : vector<16x1024xf32>
    %44 = arith.maximumf %40, %43 : vector<16x1024xf32>
    %c0_45 = arith.constant 0 : index
    %c0_46 = arith.constant 0 : index
    %45 = vector.load %arg7[%c0_45, %c0_46] : memref<16x1024xf32, #tpu.memory_space<vmem>>, vector<16x1024xf32>
    tpu.vector_store %arg7[%c0_45, %c0_46], %44 {strides = array<i32>} : memref<16x1024xf32, #tpu.memory_space<vmem>>, vector<16x1024xf32>,
    %c14 = arith.constant 14 : index
    %c0_47 = arith.constant 0 : index
    %c0_48 = arith.constant 0 : index
    %46 = vector.load %arg2[%c14, %c0_47, %c0_48] : memref<16x16x128xbf16, #tpu.memory_space<vmem>>, vector<1x16x128xbf16>
    %47 = vector.shape_cast %46 : vector<1x16x128xbf16> to vector<16x128xbf16>
    %c0_49 = arith.constant 0 : index
    %c0_50 = arith.constant 0 : index
    %48 = vector.load %arg3[%c0_49, %c0_50] : memref<128x1024xbf16, #tpu.memory_space<vmem>>, vector<128x1024xbf16>
    %cst_51 = arith.constant dense<0.000000e+00> : vector<16x1024xf32>
    %49 = tpu.matmul %47, %48, %cst_51 {dimension_numbers = #tpu.dot_dimension_numbers<[1], [0], [0], [1], [0, 0, 1, 1], [], []>} : vector<16x128xbf16>, vector<128x1024xbf16>, vector<16x1024xf32> -> vector<16x1024xf32>
    %c0_52 = arith.constant 0 : index
    %c0_53 = arith.constant 0 : index
    %50 = vector.load %arg7[%c0_52, %c0_53] : memref<16x1024xf32, #tpu.memory_space<vmem>>, vector<16x1024xf32>
    %c1 = arith.constant 1 : index
    %c0_54 = arith.constant 0 : index
    %51 = vector.load %arg5[%c1, %c0_54] : memref<6x1024xf32, #tpu.memory_space<vmem>>, vector<1x1024xf32>
    %52 = vector.broadcast %51 : vector<1x1024xf32> to vector<16x1024xf32>
    %53 = arith.addf %49, %52 : vector<16x1024xf32>
    %54 = arith.maximumf %50, %53 : vector<16x1024xf32>
    %c0_55 = arith.constant 0 : index
    %c0_56 = arith.constant 0 : index
    %55 = vector.load %arg7[%c0_55, %c0_56] : memref<16x1024xf32, #tpu.memory_space<vmem>>, vector<16x1024xf32>
    tpu.vector_store %arg7[%c0_55, %c0_56], %54 {strides = array<i32>} : memref<16x1024xf32, #tpu.memory_space<vmem>>, vector<16x1024xf32>,
    %c15 = arith.constant 15 : index
    %c0_57 = arith.constant 0 : index
    %c0_58 = arith.constant 0 : index
    %56 = vector.load %arg2[%c15, %c0_57, %c0_58] : memref<16x16x128xbf16, #tpu.memory_space<vmem>>, vector<1x16x128xbf16>
    %57 = vector.shape_cast %56 : vector<1x16x128xbf16> to vector<16x128xbf16>
    %c0_59 = arith.constant 0 : index
    %c0_60 = arith.constant 0 : index
    %58 = vector.load %arg3[%c0_59, %c0_60] : memref<128x1024xbf16, #tpu.memory_space<vmem>>, vector<128x1024xbf16>
    %cst_61 = arith.constant dense<0.000000e+00> : vector<16x1024xf32>
    %59 = tpu.matmul %57, %58, %cst_61 {dimension_numbers = #tpu.dot_dimension_numbers<[1], [0], [0], [1], [0, 0, 1, 1], [], []>} : vector<16x128xbf16>, vector<128x1024xbf16>, vector<16x1024xf32> -> vector<16x1024xf32>
    %c0_62 = arith.constant 0 : index
    %c0_63 = arith.constant 0 : index
    %60 = vector.load %arg7[%c0_62, %c0_63] : memref<16x1024xf32, #tpu.memory_space<vmem>>, vector<16x1024xf32>
    %c0_64 = arith.constant 0 : index
    %c0_65 = arith.constant 0 : index
    %61 = vector.load %arg5[%c0_64, %c0_65] : memref<6x1024xf32, #tpu.memory_space<vmem>>, vector<1x1024xf32>
    %62 = vector.broadcast %61 : vector<1x1024xf32> to vector<16x1024xf32>
    %63 = arith.addf %59, %62 : vector<16x1024xf32>
    %64 = arith.maximumf %60, %63 : vector<16x1024xf32>
    %c0_66 = arith.constant 0 : index
    %c0_67 = arith.constant 0 : index
    %65 = vector.load %arg7[%c0_66, %c0_67] : memref<16x1024xf32, #tpu.memory_space<vmem>>, vector<16x1024xf32>
    tpu.vector_store %arg7[%c0_66, %c0_67], %64 {strides = array<i32>} : memref<16x1024xf32, #tpu.memory_space<vmem>>, vector<16x1024xf32>,
    %c0_68 = arith.constant 0 : index
    %c0_69 = arith.constant 0 : index
    %66 = vector.load %arg7[%c0_68, %c0_69] : memref<16x1024xf32, #tpu.memory_space<vmem>>, vector<16x1024xf32>
    %c0_70 = arith.constant 0 : index
    %c0_71 = arith.constant 0 : index
    %67 = vector.load %arg4[%c0_70, %c0_71] : memref<1x1024xf32, #tpu.memory_space<vmem>>, vector<1x1024xf32>
    %68 = vector.broadcast %67 : vector<1x1024xf32> to vector<16x1024xf32>
    %69 = arith.addf %66, %68 : vector<16x1024xf32>
    %cst_72 = arith.constant 0.000000e+00 : f32
    %70 = vector.broadcast %cst_72 : f32 to vector<16x1024xf32>
    %71 = arith.maximumf %69, %70 : vector<16x1024xf32>
    %72 = arith.truncf %71 : vector<16x1024xf32> to vector<16x1024xbf16>
    %c0_73 = arith.constant 0 : index
    %c0_74 = arith.constant 0 : index
    %73 = vector.load %arg6[%c0_73, %c0_74] : memref<16x1024xbf16, #tpu.memory_space<vmem>>, vector<16x1024xbf16>
    tpu.vector_store %arg6[%c0_73, %c0_74], %72 {strides = array<i32>} : memref<16x1024xbf16, #tpu.memory_space<vmem>>, vector<16x1024xbf16>,
    return
  }
  func.func @transform_0(%arg0: i32, %arg1: i32) -> (i32, i32, i32) {
    %c0_i32 = arith.constant 0 : i32
    %c0_i32_0 = arith.constant 0 : i32
    %c0_i32_1 = arith.constant 0 : i32
    return %c0_i32, %arg0, %c0_i32_0 : i32, i32, i32
  }
  func.func @transform_1(%arg0: i32, %arg1: i32) -> (i32, i32) {
    %c0_i32 = arith.constant 0 : i32
    %c0_i32_0 = arith.constant 0 : i32
    return %c0_i32, %arg1 : i32, i32
  }
  func.func @transform_2(%arg0: i32, %arg1: i32) -> (i32, i32) {
    %c0_i32 = arith.constant 0 : i32
    %c0_i32_0 = arith.constant 0 : i32
    return %c0_i32, %arg1 : i32, i32
  }
  func.func @transform_3(%arg0: i32, %arg1: i32) -> (i32, i32) {
    %c0_i32 = arith.constant 0 : i32
    %c0_i32_0 = arith.constant 0 : i32
    return %c0_i32, %arg1 : i32, i32
  }
  func.func @transform_4(%arg0: i32, %arg1: i32) -> (i32, i32) {
    %c0_i32 = arith.constant 0 : i32
    return %arg0, %arg1 : i32, i32
  }
}

</mosaic_0001>

<llo_original>
// kernel: tpu_custom_call.1
$region0: #{tpu_custom_call.1}
  #allocation0 [shape = 'u32[]', space=smem, size = 0x4, offset = 0x4, fixed_abs, tag = 'smem constant byte address 0x4 - core index']
  #allocation1 [shape = 'u32[144,128]{1,0:T(1,128)}', space=vmem, size = 0x12000, scoped, tag = 'internal scratch']
  #allocation2 [shape = 'f32[16,1024]{1,0:T(8,128)}', space=vmem, size = 0x10000, scoped, tag = 'scratch operand']
  %s0 = inlined_call_operand.hbm [shape: bf16[16,16,128], index: 0, kind: input, shape index: {}]
  %s1 = inlined_call_operand.hbm [shape: bf16[128,2048], index: 1, kind: input, shape index: {}]
  %s2 = inlined_call_operand.hbm [shape: f32[1,2048], index: 2, kind: input, shape index: {}]
  %s3 = inlined_call_operand.hbm [shape: f32[6,2048], index: 3, kind: input, shape index: {}]
  %s4 = inlined_call_operand.hbm [shape: bf16[16,2048], index: 4, kind: output, shape index: {}]
  %s5 = sld [smem:[#allocation0]]
  $region72: #{tpu_custom_call.1} parent=0
    _
  %s7 = ssub.s32 1, %s5
  %s8 = scalar_select 0, %s7, %s5
  $region1: #{tpu_custom_call.1} parent=0
    #allocation3 [shape = 'u8[65536]{0}', space=vmem, size = 0x10000, scoped, tag = 'input window, operand 0, single buffered']
    #allocation4 [shape = 's32[2]{0}', space=sflag, size = 0x8, scoped, tag = 'scoped memory for tpu_custom_call.1']
    #allocation5 [shape = 's32[2]{0}', space=sflag, size = 0x8, scoped, tag = 'scoped memory for tpu_custom_call.1']
    #allocation6 [shape = 'u8[524288]{0}', space=vmem, size = 0x80000, scoped, tag = 'input window, operand 1']
    #allocation7 [shape = 's32[2]{0}', space=sflag, size = 0x8, scoped, tag = 'scoped memory for tpu_custom_call.1']
    #allocation8 [shape = 'u8[8192]{0}', space=vmem, size = 0x2000, scoped, tag = 'input window, operand 2']
    #allocation9 [shape = 'u8[65536]{0}', space=vmem, size = 0x10000, scoped, tag = 'input window, operand 3']
    #allocation10 [shape = 's32[2]{0}', space=sflag, size = 0x8, scoped, tag = 'scoped memory for tpu_custom_call.1']
    #allocation11 [shape = 'u8[65536]{0}', space=vmem, size = 0x10000, scoped, tag = 'output window, operand 0']
    %9 = vsyncpa [#allocation4], 0
    %10 = vsyncpa [#allocation7], 0
    %s11 = scalar_lea.sflag [#allocation7], 1
    %12 = vsyncpa %s11, 0
    %13 = vsyncpa [#allocation10], 0
    %s14 = scalar_lea.sflag [#allocation10], 1
    %15 = vsyncpa %s14, 0
    %16 = vsyncpa [#allocation5], 0
    %s17 = scalar_lea.sflag [#allocation5], 1
    %18 = vsyncpa %s17, 0
    loop: start=0, step=1, limit=4
    $region2: #{tpu_custom_call.1} parent=1 // loop_pre_header
      _
    $region3: #{tpu_custom_call.1} parent=1 // loop_header
      %s20 = sphi 0, %s24
      %p21 = scmp.ge.s32.totalorder %s20, 4
      %s27 = sphi 0, %s39
      %s28 = sphi 0, %s35
      %s29 = sphi 0, %s27
      %s30 = sphi 0, %s28
      %s31 = sphi 0, %s29
      %s32 = sphi 0, %s30
      %s42 = sphi 0, %s44
      %s45 = sphi 0, %s42
      %s46 = sphi 0, %s45
      %s62 = sphi 0, %s46
      %s68 = sphi 0, %s70
      %s71 = sphi 0, %s68
      %s72 = sphi 0, %s71
      %s88 = sphi 0, %s72
      %s94 = sphi 0, %s96
      %s97 = sphi 0, %s94
      %s98 = sphi 0, %s97
      %s114 = sphi 0, %s98
      %s120 = sphi 0, %s122
      %s123 = sphi 0, %s120
      %s124 = sphi 0, %s123
      %s140 = sphi 0, %s124
      %s148 = sphi 0, %s150
      %s151 = sphi 0, %s148
      %s152 = sphi 0, %s151
      %s168 = sphi 0, %s152
    $region4: #{tpu_custom_call.1} parent=1 // loop_header_branch
      %23 = sbr.rel (%p21) target = $region8
    $region5: #{tpu_custom_call.1} parent=1 // loop_body
      %s25 = ssub.s32 %s20, 1
      %s26 = ssub.s32 %s20, 2
      %s33 = sadd.s32 1, %s28
      %p34 = scmp.ge.s32.totalorder %s33, 2
      %s35 = scalar_select %p34, 0, %s33
      %s36 = sadd.s32 1, %s27
      %s37 = scalar_select %p34, %s36, %s27
      %p38 = scmp.ge.s32.totalorder %s37, 1
      %s39 = scalar_select %p38, 0, %s37
      %s40 = ssub.s32 %s27, %s39
      %p41 = scmp.eq.s32.totalorder %s40, 0
      %s43 = sadd.s32 %s42, 1
      %s44 = scalar_select %p41, %s42, %s43
      %p47 = pneg %p41
      %p48 = scmp.eq.s32.totalorder %s20, 1
      %p49 = por %p47, %p48
      %p50 = scmp.ne.s32.totalorder %s42, %s45
      %p51 = scmp.eq.s32.totalorder %s20, 0
      %p52 = por %p50, %p51
      %p53 = scmp.ne.s32.totalorder %s42, %s45
      %p54 = scmp.eq.s32.totalorder %s25, 1
      %p55 = por %p53, %p54
      %p56 = scmp.ne.s32.totalorder %s45, %s46
      %p57 = scmp.eq.s32.totalorder %s25, 0
      %p58 = por %p56, %p57
      %p59 = scmp.ne.s32.totalorder %s45, %s46
      %p60 = scmp.eq.s32.totalorder %s26, 1
      %p61 = por %p59, %p60
      %p63 = scmp.ne.s32.totalorder %s46, %s62
      %p64 = scmp.eq.s32.totalorder %s26, 0
      %p65 = por %p63, %p64
      %s66 = ssub.s32 %s28, %s35
      %p67 = scmp.eq.s32.totalorder %s66, 0
      %s69 = sadd.s32 %s68, 1
      %s70 = scalar_select %p67, %s68, %s69
      %p73 = pneg %p67
      %p74 = scmp.eq.s32.totalorder %s20, 1
      %p75 = por %p73, %p74
      %p76 = scmp.ne.s32.totalorder %s68, %s71
      %p77 = scmp.eq.s32.totalorder %s20, 0
      %p78 = por %p76, %p77
      %p79 = scmp.ne.s32.totalorder %s68, %s71
      %p80 = scmp.eq.s32.totalorder %s25, 1
      %p81 = por %p79, %p80
      %p82 = scmp.ne.s32.totalorder %s71, %s72
      %p83 = scmp.eq.s32.totalorder %s25, 0
      %p84 = por %p82, %p83
      %p85 = scmp.ne.s32.totalorder %s71, %s72
      %p86 = scmp.eq.s32.totalorder %s26, 1
      %p87 = por %p85, %p86
      %p89 = scmp.ne.s32.totalorder %s72, %s88
      %p90 = scmp.eq.s32.totalorder %s26, 0
      %p91 = por %p89, %p90
      %s92 = ssub.s32 %s28, %s35
      %p93 = scmp.eq.s32.totalorder %s92, 0
      %s95 = sadd.s32 %s94, 1
      %s96 = scalar_select %p93, %s94, %s95
      %p99 = pneg %p93
      %p100 = scmp.eq.s32.totalorder %s20, 1
      %p101 = por %p99, %p100
      %p102 = scmp.ne.s32.totalorder %s94, %s97
      %p103 = scmp.eq.s32.totalorder %s20, 0
      %p104 = por %p102, %p103
      %p105 = scmp.ne.s32.totalorder %s94, %s97
      %p106 = scmp.eq.s32.totalorder %s25, 1
      %p107 = por %p105, %p106
      %p108 = scmp.ne.s32.totalorder %s97, %s98
      %p109 = scmp.eq.s32.totalorder %s25, 0
      %p110 = por %p108, %p109
      %p111 = scmp.ne.s32.totalorder %s97, %s98
      %p112 = scmp.eq.s32.totalorder %s26, 1
      %p113 = por %p111, %p112
      %p115 = scmp.ne.s32.totalorder %s98, %s114
      %p116 = scmp.eq.s32.totalorder %s26, 0
      %p117 = por %p115, %p116
      %s118 = ssub.s32 %s28, %s35
      %p119 = scmp.eq.s32.totalorder %s118, 0
      %s121 = sadd.s32 %s120, 1
      %s122 = scalar_select %p119, %s120, %s121
      %p125 = pneg %p119
      %p126 = scmp.eq.s32.totalorder %s20, 1
      %p127 = por %p125, %p126
      %p128 = scmp.ne.s32.totalorder %s120, %s123
      %p129 = scmp.eq.s32.totalorder %s20, 0
      %p130 = por %p128, %p129
      %p131 = scmp.ne.s32.totalorder %s120, %s123
      %p132 = scmp.eq.s32.totalorder %s25, 1
      %p133 = por %p131, %p132
      %p134 = scmp.ne.s32.totalorder %s123, %s124
      %p135 = scmp.eq.s32.totalorder %s25, 0
      %p136 = por %p134, %p135
      %p137 = scmp.ne.s32.totalorder %s123, %s124
      %p138 = scmp.eq.s32.totalorder %s26, 1
      %p139 = por %p137, %p138
      %p141 = scmp.ne.s32.totalorder %s124, %s140
      %p142 = scmp.eq.s32.totalorder %s26, 0
      %p143 = por %p141, %p142
      %s144 = ssub.s32 %s27, %s39
      %s145 = ssub.s32 %s28, %s35
      %s146 = sor.u32 %s144, %s145
      %p147 = scmp.eq.s32.totalorder %s146, 0
      %s149 = sadd.s32 %s148, 1
      %s150 = scalar_select %p147, %s148, %s149
      %p153 = pneg %p147
      %p154 = scmp.eq.s32.totalorder %s20, 1
      %p155 = por %p153, %p154
      %p156 = scmp.ne.s32.totalorder %s148, %s151
      %p157 = scmp.eq.s32.totalorder %s20, 0
      %p158 = por %p156, %p157
      %p159 = scmp.ne.s32.totalorder %s148, %s151
      %p160 = scmp.eq.s32.totalorder %s25, 1
      %p161 = por %p159, %p160
      %p162 = scmp.ne.s32.totalorder %s151, %s152
      %p163 = scmp.eq.s32.totalorder %s25, 0
      %p164 = por %p162, %p163
      %p165 = scmp.ne.s32.totalorder %s151, %s152
      %p166 = scmp.eq.s32.totalorder %s26, 1
      %p167 = por %p165, %p166
      %p169 = scmp.ne.s32.totalorder %s152, %s168
      %p170 = scmp.eq.s32.totalorder %s26, 0
      %p171 = por %p169, %p170
      %p172 = scmp.le.s32.totalorder 1, %s20
      %p173 = scmp.lt.s32.totalorder %s20, 3
      %p174 = pnand %p172, %p173
      %p175 = pneg %p174
      // Predicated region
      $region9: #{tpu_custom_call.1} parent=5 // pred_check
        _
      $region10: #{tpu_custom_call.1} parent=5 // pred_check_branch
        %177 = sbr.rel (%p174) target = $region12
      $region11: #{tpu_custom_call.1} parent=5 // pred_region
        %s178 = ssub.s32 %s20, 1
        // Predicated region
        $region13: #{tpu_custom_call.1} parent=11 // pred_check
          %p179 = pneg %p58
        $region14: #{tpu_custom_call.1} parent=11 // pred_check_branch
          %181 = sbr.rel (%p179) target = $region16
        $region15: #{tpu_custom_call.1} parent=11 // pred_region
          %s182 = smul.u32 2, %s29
          %s184 = ssub.s32 2048, 2048
          %185 = vsyncadd [#allocation4], %s184
          %s186 = smul.addr %s182, 64
          %s187 = scalar_lea.hbm %s0, %s186
          %s188 = sshll.u32 [#allocation3], 4
          %s189 = int_to_ptr.vmem [resolvable:$true] %s188
          %194 = dma.hbm_to_vmem [thread:$0]  %s187, 2048, %s189, [#allocation4], 64, 64, 4
        $region16: #{tpu_custom_call.1} parent=11 // pred_fallthru
          _
      $region12: #{tpu_custom_call.1} parent=5 // pred_fallthru
        _
      %p195 = scmp.lt.s32.totalorder %s20, 2
      // Predicated region
      $region17: #{tpu_custom_call.1} parent=5 // pred_check
        %p196 = pneg %p195
      $region18: #{tpu_custom_call.1} parent=5 // pred_check_branch
        %198 = sbr.rel (%p196) target = $region20
      $region19: #{tpu_custom_call.1} parent=5 // pred_region
        // Predicated region
        $region21: #{tpu_custom_call.1} parent=19 // pred_check
          %p199 = pneg %p78
        $region22: #{tpu_custom_call.1} parent=19 // pred_check_branch
          %201 = sbr.rel (%p199) target = $region24
        $region23: #{tpu_custom_call.1} parent=19 // pred_region
          %s202 = sand.u32 %s20, 1
          %s203 = scalar_lea.sflag [#allocation7], %s202
          %s204 = sand.u32 %s68, 1
          %s205 = smul.addr %s204, 512
          %s206 = scalar_lea.vmem [#allocation6], %s205
          %s207 = smul.u32 8, %s28
          %s209 = ssub.s32 8192, 8192
          %210 = vsyncadd %s203, %s209
          %s211 = smul.addr %s207, 64
          %s212 = scalar_lea.hbm %s1, %s211
          %s213 = sshll.u32 %s206, 4
          %s214 = int_to_ptr.vmem [resolvable:$true] %s213
          %219 = dma.hbm_to_vmem [thread:$0]  %s212, 8192, %s214, %s203, 1024, 512, 32
        $region24: #{tpu_custom_call.1} parent=19 // pred_fallthru
          _
        // Predicated region
        $region25: #{tpu_custom_call.1} parent=19 // pred_check
          %p220 = pneg %p104
        $region26: #{tpu_custom_call.1} parent=19 // pred_check_branch
          %222 = sbr.rel (%p220) target = $region28
        $region27: #{tpu_custom_call.1} parent=19 // pred_region
          %s223 = sand.u32 %s20, 1
          %s224 = scalar_lea.sflag [#allocation7], %s223
          %s225 = sand.u32 %s94, 1
          %s226 = smul.addr %s225, 8
          %s227 = scalar_lea.vmem [#allocation8], %s226
          %s228 = smul.u32 8, %s28
          %s230 = ssub.s32 128, 128
          %231 = vsyncadd %s224, %s230
          %s232 = smul.addr %s228, 16
          %s233 = scalar_lea.hbm %s2, %s232
          %s235 = sshll.u32 %s227, 4
          %s236 = int_to_ptr.vmem [resolvable:$true] %s235
          %238 = dma.hbm_to_vmem [thread:$0]  %s233, 128, %s236, %s224
        $region28: #{tpu_custom_call.1} parent=19 // pred_fallthru
          _
        // Predicated region
        $region29: #{tpu_custom_call.1} parent=19 // pred_check
          %p239 = pneg %p130
        $region30: #{tpu_custom_call.1} parent=19 // pred_check_branch
          %241 = sbr.rel (%p239) target = $region32
        $region31: #{tpu_custom_call.1} parent=19 // pred_region
          %s242 = sand.u32 %s120, 1
          %s243 = scalar_lea.sflag [#allocation10], %s242
          %s244 = sand.u32 %s120, 1
          %s245 = smul.addr %s244, 64
          %s246 = scalar_lea.vmem [#allocation9], %s245
          %s247 = smul.u32 8, %s28
          %s249 = ssub.s32 1024, 1024
          %250 = vsyncadd %s243, %s249
          %s251 = smul.addr %s247, 128
          %s252 = scalar_lea.hbm %s3, %s251
          %s254 = sshll.u32 %s246, 4
          %s255 = int_to_ptr.vmem [resolvable:$true] %s254
          %257 = dma.hbm_to_vmem [thread:$0]  %s252, 1024, %s255, %s243
        $region32: #{tpu_custom_call.1} parent=19 // pred_fallthru
          _
      $region20: #{tpu_custom_call.1} parent=5 // pred_fallthru
        _
      %p258 = scmp.le.s32.totalorder 1, %s20
      %p259 = scmp.lt.s32.totalorder %s20, 3
      %p260 = pnand %p258, %p259
      %p261 = pneg %p260
      // Predicated region
      $region33: #{tpu_custom_call.1} parent=5 // pred_check
        _
      $region34: #{tpu_custom_call.1} parent=5 // pred_check_branch
        %263 = sbr.rel (%p260) target = $region36
      $region35: #{tpu_custom_call.1} parent=5 // pred_region
        %s264 = ssub.s32 %s20, 1
        // Predicated region
        $region37: #{tpu_custom_call.1} parent=35 // pred_check
          %p265 = pneg %p58
        $region38: #{tpu_custom_call.1} parent=35 // pred_check_branch
          %267 = sbr.rel (%p265) target = $region40
        $region39: #{tpu_custom_call.1} parent=35 // pred_region
          %268 = dma.done [#allocation4], 2048
        $region40: #{tpu_custom_call.1} parent=35 // pred_fallthru
          _
        %s269 = sand.u32 %s25, 1
        %s270 = scalar_lea.sflag [#allocation7], %s269
        %s271 = sand.u32 %s71, 1
        %s272 = smul.addr %s271, 512
        %s273 = scalar_lea.vmem [#allocation6], %s272
        // Predicated region
        $region41: #{tpu_custom_call.1} parent=35 // pred_check
          %p274 = pneg %p84
        $region42: #{tpu_custom_call.1} parent=35 // pred_check_branch
          %276 = sbr.rel (%p274) target = $region44
        $region43: #{tpu_custom_call.1} parent=35 // pred_region
          %277 = dma.done %s270, 8192
        $region44: #{tpu_custom_call.1} parent=35 // pred_fallthru
          _
        %s278 = sand.u32 %s25, 1
        %s279 = scalar_lea.sflag [#allocation7], %s278
        %s280 = sand.u32 %s97, 1
        %s281 = smul.addr %s280, 8
        %s282 = scalar_lea.vmem [#allocation8], %s281
        // Predicated region
        $region45: #{tpu_custom_call.1} parent=35 // pred_check
          %p283 = pneg %p110
        $region46: #{tpu_custom_call.1} parent=35 // pred_check_branch
          %285 = sbr.rel (%p283) target = $region48
        $region47: #{tpu_custom_call.1} parent=35 // pred_region
          %286 = dma.done %s279, 128
        $region48: #{tpu_custom_call.1} parent=35 // pred_fallthru
          _
        %s287 = sand.u32 %s123, 1
        %s288 = scalar_lea.sflag [#allocation10], %s287
        %s289 = sand.u32 %s123, 1
        %s290 = smul.addr %s289, 64
        %s291 = scalar_lea.vmem [#allocation9], %s290
        // Predicated region
        $region49: #{tpu_custom_call.1} parent=35 // pred_check
          %p292 = pneg %p136
        $region50: #{tpu_custom_call.1} parent=35 // pred_check_branch
          %294 = sbr.rel (%p292) target = $region52
        $region51: #{tpu_custom_call.1} parent=35 // pred_region
          %295 = dma.done %s288, 1024
        $region52: #{tpu_custom_call.1} parent=35 // pred_fallthru
          _
        %p296 = pneg %p58
        %p297 = pneg %p55
        %s298 = sand.u32 %s25, 1
        %s299 = scalar_lea.sflag [#allocation7], %s298
        %s300 = sand.u32 %s71, 1
        %s301 = smul.addr %s300, 512
        %s302 = scalar_lea.vmem [#allocation6], %s301
        %p303 = pneg %p84
        %p304 = pneg %p81
        %s305 = sand.u32 %s25, 1
        %s306 = scalar_lea.sflag [#allocation7], %s305
        %s307 = sand.u32 %s97, 1
        %s308 = smul.addr %s307, 8
        %s309 = scalar_lea.vmem [#allocation8], %s308
        %p310 = pneg %p110
        %p311 = pneg %p107
        %s312 = sand.u32 %s123, 1
        %s313 = scalar_lea.sflag [#allocation10], %s312
        %s314 = sand.u32 %s123, 1
        %s315 = smul.addr %s314, 64
        %s316 = scalar_lea.vmem [#allocation9], %s315
        %p317 = pneg %p136
        %p318 = pneg %p133
        %p319 = pneg %p164
        %p320 = pneg %p161
        %s321 = sand.u32 %s151, 1
        %s322 = scalar_lea.sflag [#allocation5], %s321
        %s323 = sand.u32 %s151, 1
        %s324 = smul.addr %s323, 64
        %s325 = scalar_lea.vmem [#allocation11], %s324
        %s326 = smul.u32 2, %s29
        %s327 = smul.u32 8, %s30
        %s328 = smul.u32 8, %s30
        %s329 = smul.u32 8, %s30
        %s330 = smul.u32 2, %s29
        %s331 = smul.u32 8, %s30
        %v333 = vld [vmem:[#allocation3] sm:$0xf]
        %v334 = vld [vmem:[#allocation3 + $0x4] sm:$0xf]
        %v335 = vld [vmem:[%s273] sm:$0xff]
        %v336 = vld [vmem:[%s273 + $0x8] sm:$0xff]
        %v337 = vld [vmem:[%s273 + $0x10] sm:$0xff]
        %v338 = vld [vmem:[%s273 + $0x18] sm:$0xff]
        %v339 = vld [vmem:[%s273 + $0x20] sm:$0xff]
        %v340 = vld [vmem:[%s273 + $0x28] sm:$0xff]
        %v341 = vld [vmem:[%s273 + $0x30] sm:$0xff]
        %v342 = vld [vmem:[%s273 + $0x38] sm:$0xff]
        %v343 = vld [vmem:[%s273 + $0x40] sm:$0xff]
        %v344 = vld [vmem:[%s273 + $0x48] sm:$0xff]
        %v345 = vld [vmem:[%s273 + $0x50] sm:$0xff]
        %v346 = vld [vmem:[%s273 + $0x58] sm:$0xff]
        %v347 = vld [vmem:[%s273 + $0x60] sm:$0xff]
        %v348 = vld [vmem:[%s273 + $0x68] sm:$0xff]
        %v349 = vld [vmem:[%s273 + $0x70] sm:$0xff]
        %v350 = vld [vmem:[%s273 + $0x78] sm:$0xff]
        %v351 = vld [vmem:[%s273 + $0x80] sm:$0xff]
        %v352 = vld [vmem:[%s273 + $0x88] sm:$0xff]
        %v353 = vld [vmem:[%s273 + $0x90] sm:$0xff]
        %v354 = vld [vmem:[%s273 + $0x98] sm:$0xff]
        %v355 = vld [vmem:[%s273 + $0xa0] sm:$0xff]
        %v356 = vld [vmem:[%s273 + $0xa8] sm:$0xff]
        %v357 = vld [vmem:[%s273 + $0xb0] sm:$0xff]
        %v358 = vld [vmem:[%s273 + $0xb8] sm:$0xff]
        %v359 = vld [vmem:[%s273 + $0xc0] sm:$0xff]
        %v360 = vld [vmem:[%s273 + $0xc8] sm:$0xff]
        %v361 = vld [vmem:[%s273 + $0xd0] sm:$0xff]
        %v362 = vld [vmem:[%s273 + $0xd8] sm:$0xff]
        %v363 = vld [vmem:[%s273 + $0xe0] sm:$0xff]
        %v364 = vld [vmem:[%s273 + $0xe8] sm:$0xff]
        %v365 = vld [vmem:[%s273 + $0xf0] sm:$0xff]
        %v366 = vld [vmem:[%s273 + $0xf8] sm:$0xff]
        %v367 = vld [vmem:[%s273 + $0x100] sm:$0xff]
        %v368 = vld [vmem:[%s273 + $0x108] sm:$0xff]
        %v369 = vld [vmem:[%s273 + $0x110] sm:$0xff]
        %v370 = vld [vmem:[%s273 + $0x118] sm:$0xff]
        %v371 = vld [vmem:[%s273 + $0x120] sm:$0xff]
        %v372 = vld [vmem:[%s273 + $0x128] sm:$0xff]
        %v373 = vld [vmem:[%s273 + $0x130] sm:$0xff]
        %v374 = vld [vmem:[%s273 + $0x138] sm:$0xff]
        %v375 = vld [vmem:[%s273 + $0x140] sm:$0xff]
        %v376 = vld [vmem:[%s273 + $0x148] sm:$0xff]
        %v377 = vld [vmem:[%s273 + $0x150] sm:$0xff]
        %v378 = vld [vmem:[%s273 + $0x158] sm:$0xff]
        %v379 = vld [vmem:[%s273 + $0x160] sm:$0xff]
        %v380 = vld [vmem:[%s273 + $0x168] sm:$0xff]
        %v381 = vld [vmem:[%s273 + $0x170] sm:$0xff]
        %v382 = vld [vmem:[%s273 + $0x178] sm:$0xff]
        %v383 = vld [vmem:[%s273 + $0x180] sm:$0xff]
        %v384 = vld [vmem:[%s273 + $0x188] sm:$0xff]
        %v385 = vld [vmem:[%s273 + $0x190] sm:$0xff]
        %v386 = vld [vmem:[%s273 + $0x198] sm:$0xff]
        %v387 = vld [vmem:[%s273 + $0x1a0] sm:$0xff]
        %v388 = vld [vmem:[%s273 + $0x1a8] sm:$0xff]
        %v389 = vld [vmem:[%s273 + $0x1b0] sm:$0xff]
        %v390 = vld [vmem:[%s273 + $0x1b8] sm:$0xff]
        %v391 = vld [vmem:[%s273 + $0x1c0] sm:$0xff]
        %v392 = vld [vmem:[%s273 + $0x1c8] sm:$0xff]
        %v393 = vld [vmem:[%s273 + $0x1d0] sm:$0xff]
        %v394 = vld [vmem:[%s273 + $0x1d8] sm:$0xff]
        %v395 = vld [vmem:[%s273 + $0x1e0] sm:$0xff]
        %v396 = vld [vmem:[%s273 + $0x1e8] sm:$0xff]
        %v397 = vld [vmem:[%s273 + $0x1f0] sm:$0xff]
        %v398 = vld [vmem:[%s273 + $0x1f8] sm:$0xff]
        %v401 = vunpack.c.l.b16 %v333
        %v402 = vunpack.c.l.b16 %v334
        %v403 = vpack.c.b16 %v402, %v401
        %v469 = vunpack.c.l.b16 %v335
        %v470 = vunpack.c.h.b16 %v335
        %v471 = vunpack.c.l.b16 %v336
        %v472 = vunpack.c.h.b16 %v336
        %v473 = vunpack.c.l.b16 %v337
        %v474 = vunpack.c.h.b16 %v337
        %v475 = vunpack.c.l.b16 %v338
        %v476 = vunpack.c.h.b16 %v338
        %v477 = vunpack.c.l.b16 %v339
        %v478 = vunpack.c.h.b16 %v339
        %v479 = vunpack.c.l.b16 %v340
        %v480 = vunpack.c.h.b16 %v340
        %v481 = vunpack.c.l.b16 %v341
        %v482 = vunpack.c.h.b16 %v341
        %v483 = vunpack.c.l.b16 %v342
        %v484 = vunpack.c.h.b16 %v342
        %v485 = vunpack.c.l.b16 %v343
        %v486 = vunpack.c.h.b16 %v343
        %v487 = vunpack.c.l.b16 %v344
        %v488 = vunpack.c.h.b16 %v344
        %v489 = vunpack.c.l.b16 %v345
        %v490 = vunpack.c.h.b16 %v345
        %v491 = vunpack.c.l.b16 %v346
        %v492 = vunpack.c.h.b16 %v346
        %v493 = vunpack.c.l.b16 %v347
        %v494 = vunpack.c.h.b16 %v347
        %v495 = vunpack.c.l.b16 %v348
        %v496 = vunpack.c.h.b16 %v348
        %v497 = vunpack.c.l.b16 %v349
        %v498 = vunpack.c.h.b16 %v349
        %v499 = vunpack.c.l.b16 %v350
        %v500 = vunpack.c.h.b16 %v350
        %v501 = vunpack.c.l.b16 %v351
        %v502 = vunpack.c.h.b16 %v351
        %v503 = vunpack.c.l.b16 %v352
        %v504 = vunpack.c.h.b16 %v352
        %v505 = vunpack.c.l.b16 %v353
        %v506 = vunpack.c.h.b16 %v353
        %v507 = vunpack.c.l.b16 %v354
        %v508 = vunpack.c.h.b16 %v354
        %v509 = vunpack.c.l.b16 %v355
        %v510 = vunpack.c.h.b16 %v355
        %v511 = vunpack.c.l.b16 %v356
        %v512 = vunpack.c.h.b16 %v356
        %v513 = vunpack.c.l.b16 %v357
        %v514 = vunpack.c.h.b16 %v357
        %v515 = vunpack.c.l.b16 %v358
        %v516 = vunpack.c.h.b16 %v358
        %v517 = vunpack.c.l.b16 %v359
        %v518 = vunpack.c.h.b16 %v359
        %v519 = vunpack.c.l.b16 %v360
        %v520 = vunpack.c.h.b16 %v360
        %v521 = vunpack.c.l.b16 %v361
        %v522 = vunpack.c.h.b16 %v361
        %v523 = vunpack.c.l.b16 %v362
        %v524 = vunpack.c.h.b16 %v362
        %v525 = vunpack.c.l.b16 %v363
        %v526 = vunpack.c.h.b16 %v363
        %v527 = vunpack.c.l.b16 %v364
        %v528 = vunpack.c.h.b16 %v364
        %v529 = vunpack.c.l.b16 %v365
        %v530 = vunpack.c.h.b16 %v365
        %v531 = vunpack.c.l.b16 %v366
        %v532 = vunpack.c.h.b16 %v366
        %v533 = vunpack.c.l.b16 %v367
        %v534 = vunpack.c.h.b16 %v367
        %v535 = vunpack.c.l.b16 %v368
        %v536 = vunpack.c.h.b16 %v368
        %v537 = vunpack.c.l.b16 %v369
        %v538 = vunpack.c.h.b16 %v369
        %v539 = vunpack.c.l.b16 %v370
        %v540 = vunpack.c.h.b16 %v370
        %v541 = vunpack.c.l.b16 %v371
        %v542 = vunpack.c.h.b16 %v371
        %v543 = vunpack.c.l.b16 %v372
        %v544 = vunpack.c.h.b16 %v372
        %v545 = vunpack.c.l.b16 %v373
        %v546 = vunpack.c.h.b16 %v373
        %v547 = vunpack.c.l.b16 %v374
        %v548 = vunpack.c.h.b16 %v374
        %v549 = vunpack.c.l.b16 %v375
        %v550 = vunpack.c.h.b16 %v375
        %v551 = vunpack.c.l.b16 %v376
        %v552 = vunpack.c.h.b16 %v376
        %v553 = vunpack.c.l.b16 %v377
        %v554 = vunpack.c.h.b16 %v377
        %v555 = vunpack.c.l.b16 %v378
        %v556 = vunpack.c.h.b16 %v378
        %v557 = vunpack.c.l.b16 %v379
        %v558 = vunpack.c.h.b16 %v379
        %v559 = vunpack.c.l.b16 %v380
        %v560 = vunpack.c.h.b16 %v380
        %v561 = vunpack.c.l.b16 %v381
        %v562 = vunpack.c.h.b16 %v381
        %v563 = vunpack.c.l.b16 %v382
        %v564 = vunpack.c.h.b16 %v382
        %v565 = vunpack.c.l.b16 %v383
        %v566 = vunpack.c.h.b16 %v383
        %v567 = vunpack.c.l.b16 %v384
        %v568 = vunpack.c.h.b16 %v384
        %v569 = vunpack.c.l.b16 %v385
        %v570 = vunpack.c.h.b16 %v385
        %v571 = vunpack.c.l.b16 %v386
        %v572 = vunpack.c.h.b16 %v386
        %v573 = vunpack.c.l.b16 %v387
        %v574 = vunpack.c.h.b16 %v387
        %v575 = vunpack.c.l.b16 %v388
        %v576 = vunpack.c.h.b16 %v388
        %v577 = vunpack.c.l.b16 %v389
        %v578 = vunpack.c.h.b16 %v389
        %v579 = vunpack.c.l.b16 %v390
        %v580 = vunpack.c.h.b16 %v390
        %v581 = vunpack.c.l.b16 %v391
        %v582 = vunpack.c.h.b16 %v391
        %v583 = vunpack.c.l.b16 %v392
        %v584 = vunpack.c.h.b16 %v392
        %v585 = vunpack.c.l.b16 %v393
        %v586 = vunpack.c.h.b16 %v393
        %v587 = vunpack.c.l.b16 %v394
        %v588 = vunpack.c.h.b16 %v394
        %v589 = vunpack.c.l.b16 %v395
        %v590 = vunpack.c.h.b16 %v395
        %v591 = vunpack.c.l.b16 %v396
        %v592 = vunpack.c.h.b16 %v396
        %v593 = vunpack.c.l.b16 %v397
        %v594 = vunpack.c.h.b16 %v397
        %v595 = vunpack.c.l.b16 %v398
        %v596 = vunpack.c.h.b16 %v398
        %v597 = vpack.c.b16 %v477, %v469
        %v598 = vpack.c.b16 %v478, %v470
        %v599 = vpack.c.b16 %v479, %v471
        %v600 = vpack.c.b16 %v480, %v472
        %v601 = vpack.c.b16 %v481, %v473
        %v602 = vpack.c.b16 %v482, %v474
        %v603 = vpack.c.b16 %v483, %v475
        %v604 = vpack.c.b16 %v484, %v476
        %v605 = vpack.c.b16 %v493, %v485
        %v606 = vpack.c.b16 %v494, %v486
        %v607 = vpack.c.b16 %v495, %v487
        %v608 = vpack.c.b16 %v496, %v488
        %v609 = vpack.c.b16 %v497, %v489
        %v610 = vpack.c.b16 %v498, %v490
        %v611 = vpack.c.b16 %v499, %v491
        %v612 = vpack.c.b16 %v500, %v492
        %v613 = vpack.c.b16 %v509, %v501
        %v614 = vpack.c.b16 %v510, %v502
        %v615 = vpack.c.b16 %v511, %v503
        %v616 = vpack.c.b16 %v512, %v504
        %v617 = vpack.c.b16 %v513, %v505
        %v618 = vpack.c.b16 %v514, %v506
        %v619 = vpack.c.b16 %v515, %v507
        %v620 = vpack.c.b16 %v516, %v508
        %v621 = vpack.c.b16 %v525, %v517
        %v622 = vpack.c.b16 %v526, %v518
        %v623 = vpack.c.b16 %v527, %v519
        %v624 = vpack.c.b16 %v528, %v520
        %v625 = vpack.c.b16 %v529, %v521
        %v626 = vpack.c.b16 %v530, %v522
        %v627 = vpack.c.b16 %v531, %v523
        %v628 = vpack.c.b16 %v532, %v524
        %v629 = vpack.c.b16 %v541, %v533
        %v630 = vpack.c.b16 %v542, %v534
        %v631 = vpack.c.b16 %v543, %v535
        %v632 = vpack.c.b16 %v544, %v536
        %v633 = vpack.c.b16 %v545, %v537
        %v634 = vpack.c.b16 %v546, %v538
        %v635 = vpack.c.b16 %v547, %v539
        %v636 = vpack.c.b16 %v548, %v540
        %v637 = vpack.c.b16 %v557, %v549
        %v638 = vpack.c.b16 %v558, %v550
        %v639 = vpack.c.b16 %v559, %v551
        %v640 = vpack.c.b16 %v560, %v552
        %v641 = vpack.c.b16 %v561, %v553
        %v642 = vpack.c.b16 %v562, %v554
        %v643 = vpack.c.b16 %v563, %v555
        %v644 = vpack.c.b16 %v564, %v556
        %v645 = vpack.c.b16 %v573, %v565
        %v646 = vpack.c.b16 %v574, %v566
        %v647 = vpack.c.b16 %v575, %v567
        %v648 = vpack.c.b16 %v576, %v568
        %v649 = vpack.c.b16 %v577, %v569
        %v650 = vpack.c.b16 %v578, %v570
        %v651 = vpack.c.b16 %v579, %v571
        %v652 = vpack.c.b16 %v580, %v572
        %v653 = vpack.c.b16 %v589, %v581
        %v654 = vpack.c.b16 %v590, %v582
        %v655 = vpack.c.b16 %v591, %v583
        %v656 = vpack.c.b16 %v592, %v584
        %v657 = vpack.c.b16 %v593, %v585
        %v658 = vpack.c.b16 %v594, %v586
        %v659 = vpack.c.b16 %v595, %v587
        %v660 = vpack.c.b16 %v596, %v588
        %725 = vmatprep.subr.bf16.mxu0 %v598
        %726 = vmatpush1.bf16.msra.mxu0 %v597
        %727 = vmatprep.subr.bf16.mxu0 %v606
        %728 = vmatpush1.bf16.msra.mxu0 %v605
        %729 = vmatprep.subr.bf16.mxu0 %v614
        %730 = vmatpush1.bf16.msra.mxu0 %v613
        %731 = vmatprep.subr.bf16.mxu0 %v622
        %732 = vmatpush1.bf16.msra.mxu0 %v621
        %733 = vmatprep.subr.bf16.mxu0 %v630
        %734 = vmatpush1.bf16.msra.mxu0 %v629
        %735 = vmatprep.subr.bf16.mxu0 %v638
        %736 = vmatpush1.bf16.msra.mxu0 %v637
        %737 = vmatprep.subr.bf16.mxu0 %v646
        %738 = vmatpush1.bf16.msra.mxu0 %v645
        %739 = vmatprep.subr.bf16.mxu0 %v654
        %740 = vmatpush1.bf16.msra.mxu0 %v653
        %741 = vmatprep.subr.bf16.mxu0 0
        %742 = vmatpush1.bf16.msra.mxu0 0
        %743 = vmatprep.subr.bf16.mxu0 0
        %744 = vmatpush1.bf16.msra.mxu0 0
        %745 = vmatprep.subr.bf16.mxu0 0
        %746 = vmatpush1.bf16.msra.mxu0 0
        %747 = vmatprep.subr.bf16.mxu0 0
        %748 = vmatpush1.bf16.msra.mxu0 0
        %749 = vmatprep.subr.bf16.mxu0 0
        %750 = vmatpush1.bf16.msra.mxu0 0
        %751 = vmatprep.subr.bf16.mxu0 0
        %752 = vmatpush1.bf16.msra.mxu0 0
        %753 = vmatprep.subr.bf16.mxu0 0
        %754 = vmatpush1.bf16.msra.mxu0 0
        %755 = vmatprep.subr.bf16.mxu0 0
        %756 = vmatpush1.bf16.msra.mxu0 0
        %757 = vmatprep.mubr.bf16.mxu0 0
        %758 = vmatmul.mubr.bf16.gmra.mrb[0].mxu0 %v403
        %v759 = vpop.f32.mrb[0].mxu0
        %v760 = vadd.f32 0.0, %v759
        %v761 = vpop.f32.mrb[0].mxu0
        %v762 = vadd.f32 0.0, %v761
        %v763 = vpop.f32.mrb[0].mxu0
        %v764 = vadd.f32 0.0, %v763
        %v765 = vpop.f32.mrb[0].mxu0
        %v766 = vadd.f32 0.0, %v765
        %767 = vdwg.mxu0
        %768 = vmatprep.subr.bf16.mxu0 %v600
        %769 = vmatpush1.bf16.msra.mxu0 %v599
        %770 = vmatprep.subr.bf16.mxu0 %v608
        %771 = vmatpush1.bf16.msra.mxu0 %v607
        %772 = vmatprep.subr.bf16.mxu0 %v616
        %773 = vmatpush1.bf16.msra.mxu0 %v615
        %774 = vmatprep.subr.bf16.mxu0 %v624
        %775 = vmatpush1.bf16.msra.mxu0 %v623
        %776 = vmatprep.subr.bf16.mxu0 %v632
        %777 = vmatpush1.bf16.msra.mxu0 %v631
        %778 = vmatprep.subr.bf16.mxu0 %v640
        %779 = vmatpush1.bf16.msra.mxu0 %v639
        %780 = vmatprep.subr.bf16.mxu0 %v648
        %781 = vmatpush1.bf16.msra.mxu0 %v647
        %782 = vmatprep.subr.bf16.mxu0 %v656
        %783 = vmatpush1.bf16.msra.mxu0 %v655
        %784 = vmatprep.subr.bf16.mxu0 0
        %785 = vmatpush1.bf16.msra.mxu0 0
        %786 = vmatprep.subr.bf16.mxu0 0
        %787 = vmatpush1.bf16.msra.mxu0 0
        %788 = vmatprep.subr.bf16.mxu0 0
        %789 = vmatpush1.bf16.msra.mxu0 0
        %790 = vmatprep.subr.bf16.mxu0 0
        %791 = vmatpush1.bf16.msra.mxu0 0
        %792 = vmatprep.subr.bf16.mxu0 0
        %793 = vmatpush1.bf16.msra.mxu0 0
        %794 = vmatprep.subr.bf16.mxu0 0
        %795 = vmatpush1.bf16.msra.mxu0 0
        %796 = vmatprep.subr.bf16.mxu0 0
        %797 = vmatpush1.bf16.msra.mxu0 0
        %798 = vmatprep.subr.bf16.mxu0 0
        %799 = vmatpush1.bf16.msra.mxu0 0
        %800 = vmatprep.mubr.bf16.mxu0 0
        %801 = vmatmul.mubr.bf16.gmra.mrb[0].mxu0 %v403
        %v802 = vpop.f32.mrb[0].mxu0
        %v803 = vadd.f32 0.0, %v802
        %v804 = vpop.f32.mrb[0].mxu0
        %v805 = vadd.f32 0.0, %v804
        %v806 = vpop.f32.mrb[0].mxu0
        %v807 = vadd.f32 0.0, %v806
        %v808 = vpop.f32.mrb[0].mxu0
        %v809 = vadd.f32 0.0, %v808
        %810 = vdwg.mxu0
        %811 = vmatprep.subr.bf16.mxu0 %v602
        %812 = vmatpush1.bf16.msra.mxu0 %v601
        %813 = vmatprep.subr.bf16.mxu0 %v610
        %814 = vmatpush1.bf16.msra.mxu0 %v609
        %815 = vmatprep.subr.bf16.mxu0 %v618
        %816 = vmatpush1.bf16.msra.mxu0 %v617
        %817 = vmatprep.subr.bf16.mxu0 %v626
        %818 = vmatpush1.bf16.msra.mxu0 %v625
        %819 = vmatprep.subr.bf16.mxu0 %v634
        %820 = vmatpush1.bf16.msra.mxu0 %v633
        %821 = vmatprep.subr.bf16.mxu0 %v642
        %822 = vmatpush1.bf16.msra.mxu0 %v641
        %823 = vmatprep.subr.bf16.mxu0 %v650
        %824 = vmatpush1.bf16.msra.mxu0 %v649
        %825 = vmatprep.subr.bf16.mxu0 %v658
        %826 = vmatpush1.bf16.msra.mxu0 %v657
        %827 = vmatprep.subr.bf16.mxu0 0
        %828 = vmatpush1.bf16.msra.mxu0 0
        %829 = vmatprep.subr.bf16.mxu0 0
        %830 = vmatpush1.bf16.msra.mxu0 0
        %831 = vmatprep.subr.bf16.mxu0 0
        %832 = vmatpush1.bf16.msra.mxu0 0
        %833 = vmatprep.subr.bf16.mxu0 0
        %834 = vmatpush1.bf16.msra.mxu0 0
        %835 = vmatprep.subr.bf16.mxu0 0
        %836 = vmatpush1.bf16.msra.mxu0 0
        %837 = vmatprep.subr.bf16.mxu0 0
        %838 = vmatpush1.bf16.msra.mxu0 0
        %839 = vmatprep.subr.bf16.mxu0 0
        %840 = vmatpush1.bf16.msra.mxu0 0
        %841 = vmatprep.subr.bf16.mxu0 0
        %842 = vmatpush1.bf16.msra.mxu0 0
        %843 = vmatprep.mubr.bf16.mxu0 0
        %844 = vmatmul.mubr.bf16.gmra.mrb[0].mxu0 %v403
        %v845 = vpop.f32.mrb[0].mxu0
        %v846 = vadd.f32 0.0, %v845
        %v847 = vpop.f32.mrb[0].mxu0
        %v848 = vadd.f32 0.0, %v847
        %v849 = vpop.f32.mrb[0].mxu0
        %v850 = vadd.f32 0.0, %v849
        %v851 = vpop.f32.mrb[0].mxu0
        %v852 = vadd.f32 0.0, %v851
        %853 = vdwg.mxu0
        %854 = vmatprep.subr.bf16.mxu0 %v604
        %855 = vmatpush1.bf16.msra.mxu0 %v603
        %856 = vmatprep.subr.bf16.mxu0 %v612
        %857 = vmatpush1.bf16.msra.mxu0 %v611
        %858 = vmatprep.subr.bf16.mxu0 %v620
        %859 = vmatpush1.bf16.msra.mxu0 %v619
        %860 = vmatprep.subr.bf16.mxu0 %v628
        %861 = vmatpush1.bf16.msra.mxu0 %v627
        %862 = vmatprep.subr.bf16.mxu0 %v636
        %863 = vmatpush1.bf16.msra.mxu0 %v635
        %864 = vmatprep.subr.bf16.mxu0 %v644
        %865 = vmatpush1.bf16.msra.mxu0 %v643
        %866 = vmatprep.subr.bf16.mxu0 %v652
        %867 = vmatpush1.bf16.msra.mxu0 %v651
        %868 = vmatprep.subr.bf16.mxu0 %v660
        %869 = vmatpush1.bf16.msra.mxu0 %v659
        %870 = vmatprep.subr.bf16.mxu0 0
        %871 = vmatpush1.bf16.msra.mxu0 0
        %872 = vmatprep.subr.bf16.mxu0 0
        %873 = vmatpush1.bf16.msra.mxu0 0
        %874 = vmatprep.subr.bf16.mxu0 0
        %875 = vmatpush1.bf16.msra.mxu0 0
        %876 = vmatprep.subr.bf16.mxu0 0
        %877 = vmatpush1.bf16.msra.mxu0 0
        %878 = vmatprep.subr.bf16.mxu0 0
        %879 = vmatpush1.bf16.msra.mxu0 0
        %880 = vmatprep.subr.bf16.mxu0 0
        %881 = vmatpush1.bf16.msra.mxu0 0
        %882 = vmatprep.subr.bf16.mxu0 0
        %883 = vmatpush1.bf16.msra.mxu0 0
        %884 = vmatprep.subr.bf16.mxu0 0
        %885 = vmatpush1.bf16.msra.mxu0 0
        %886 = vmatprep.mubr.bf16.mxu0 0
        %887 = vmatmul.mubr.bf16.gmra.mrb[0].mxu0 %v403
        %v888 = vpop.f32.mrb[0].mxu0
        %v889 = vadd.f32 0.0, %v888
        %v890 = vpop.f32.mrb[0].mxu0
        %v891 = vadd.f32 0.0, %v890
        %v892 = vpop.f32.mrb[0].mxu0
        %v893 = vadd.f32 0.0, %v892
        %v894 = vpop.f32.mrb[0].mxu0
        %v895 = vadd.f32 0.0, %v894
        %896 = vdwg.mxu0
        %897 = vst [vmem:[#allocation2] sm:$0xff] %v760
        %898 = vst [vmem:[#allocation2 + $0x8] sm:$0xff] %v762
        %899 = vst [vmem:[#allocation2 + $0x10] sm:$0xff] %v803
        %900 = vst [vmem:[#allocation2 + $0x18] sm:$0xff] %v805
        %901 = vst [vmem:[#allocation2 + $0x20] sm:$0xff] %v846
        %902 = vst [vmem:[#allocation2 + $0x28] sm:$0xff] %v848
        %903 = vst [vmem:[#allocation2 + $0x30] sm:$0xff] %v889
        %904 = vst [vmem:[#allocation2 + $0x38] sm:$0xff] %v891
        %905 = vst [vmem:[#allocation2 + $0x40] sm:$0xff] %v764
        %906 = vst [vmem:[#allocation2 + $0x48] sm:$0xff] %v766
        %907 = vst [vmem:[#allocation2 + $0x50] sm:$0xff] %v807
        %908 = vst [vmem:[#allocation2 + $0x58] sm:$0xff] %v809
        %909 = vst [vmem:[#allocation2 + $0x60] sm:$0xff] %v850
        %910 = vst [vmem:[#allocation2 + $0x68] sm:$0xff] %v852
        %911 = vst [vmem:[#allocation2 + $0x70] sm:$0xff] %v893
        %912 = vst [vmem:[#allocation2 + $0x78] sm:$0xff] %v895
        loop: start=0, step=1, limit=9
        $region53: #{tpu_custom_call.1} parent=35 // loop_pre_header
          _
        $region54: #{tpu_custom_call.1} parent=35 // loop_header
          %s914 = sphi 0, %s918
          %p915 = scmp.ge.s32.totalorder %s914, 9
        $region55: #{tpu_custom_call.1} parent=35 // loop_header_branch
          %917 = sbr.rel (%p915) target = $region59
        $region56: #{tpu_custom_call.1} parent=35 // loop_body
          %s919 = sadd.s32 %s914, 1
          %v920 = vld [vmem:[#allocation2] sm:$0xff]
          %v921 = vld [vmem:[#allocation2 + $0x8] sm:$0xff]
          %v922 = vld [vmem:[#allocation2 + $0x10] sm:$0xff]
          %v923 = vld [vmem:[#allocation2 + $0x18] sm:$0xff]
          %v924 = vld [vmem:[#allocation2 + $0x20] sm:$0xff]
          %v925 = vld [vmem:[#allocation2 + $0x28] sm:$0xff]
          %v926 = vld [vmem:[#allocation2 + $0x30] sm:$0xff]
          %v927 = vld [vmem:[#allocation2 + $0x38] sm:$0xff]
          %v928 = vld [vmem:[#allocation2 + $0x40] sm:$0xff]
          %v929 = vld [vmem:[#allocation2 + $0x48] sm:$0xff]
          %v930 = vld [vmem:[#allocation2 + $0x50] sm:$0xff]
          %v931 = vld [vmem:[#allocation2 + $0x58] sm:$0xff]
          %v932 = vld [vmem:[#allocation2 + $0x60] sm:$0xff]
          %v933 = vld [vmem:[#allocation2 + $0x68] sm:$0xff]
          %v934 = vld [vmem:[#allocation2 + $0x70] sm:$0xff]
          %v935 = vld [vmem:[#allocation2 + $0x78] sm:$0xff]
          %s936 = smul.u32 %s919, 2
          %s937 = smul.addr %s936, 4
          %s938 = scalar_lea.vmem [#allocation3], %s937
          %v939 = vld [vmem:[%s938] sm:$0xf]
          %v940 = vld [vmem:[%s938 + $0x4] sm:$0xf]
          %v941 = vld [vmem:[%s273] sm:$0xff]
          %v942 = vld [vmem:[%s273 + $0x8] sm:$0xff]
          %v943 = vld [vmem:[%s273 + $0x10] sm:$0xff]
          %v944 = vld [vmem:[%s273 + $0x18] sm:$0xff]
          %v945 = vld [vmem:[%s273 + $0x20] sm:$0xff]
          %v946 = vld [vmem:[%s273 + $0x28] sm:$0xff]
          %v947 = vld [vmem:[%s273 + $0x30] sm:$0xff]
          %v948 = vld [vmem:[%s273 + $0x38] sm:$0xff]
          %v949 = vld [vmem:[%s273 + $0x40] sm:$0xff]
          %v950 = vld [vmem:[%s273 + $0x48] sm:$0xff]
          %v951 = vld [vmem:[%s273 + $0x50] sm:$0xff]
          %v952 = vld [vmem:[%s273 + $0x58] sm:$0xff]
          %v953 = vld [vmem:[%s273 + $0x60] sm:$0xff]
          %v954 = vld [vmem:[%s273 + $0x68] sm:$0xff]
          %v955 = vld [vmem:[%s273 + $0x70] sm:$0xff]
          %v956 = vld [vmem:[%s273 + $0x78] sm:$0xff]
          %v957 = vld [vmem:[%s273 + $0x80] sm:$0xff]
          %v958 = vld [vmem:[%s273 + $0x88] sm:$0xff]
          %v959 = vld [vmem:[%s273 + $0x90] sm:$0xff]
          %v960 = vld [vmem:[%s273 + $0x98] sm:$0xff]
          %v961 = vld [vmem:[%s273 + $0xa0] sm:$0xff]
          %v962 = vld [vmem:[%s273 + $0xa8] sm:$0xff]
          %v963 = vld [vmem:[%s273 + $0xb0] sm:$0xff]
          %v964 = vld [vmem:[%s273 + $0xb8] sm:$0xff]
          %v965 = vld [vmem:[%s273 + $0xc0] sm:$0xff]
          %v966 = vld [vmem:[%s273 + $0xc8] sm:$0xff]
          %v967 = vld [vmem:[%s273 + $0xd0] sm:$0xff]
          %v968 = vld [vmem:[%s273 + $0xd8] sm:$0xff]
          %v969 = vld [vmem:[%s273 + $0xe0] sm:$0xff]
          %v970 = vld [vmem:[%s273 + $0xe8] sm:$0xff]
          %v971 = vld [vmem:[%s273 + $0xf0] sm:$0xff]
          %v972 = vld [vmem:[%s273 + $0xf8] sm:$0xff]
          %v973 = vld [vmem:[%s273 + $0x100] sm:$0xff]
          %v974 = vld [vmem:[%s273 + $0x108] sm:$0xff]
          %v975 = vld [vmem:[%s273 + $0x110] sm:$0xff]
          %v976 = vld [vmem:[%s273 + $0x118] sm:$0xff]
          %v977 = vld [vmem:[%s273 + $0x120] sm:$0xff]
          %v978 = vld [vmem:[%s273 + $0x128] sm:$0xff]
          %v979 = vld [vmem:[%s273 + $0x130] sm:$0xff]
          %v980 = vld [vmem:[%s273 + $0x138] sm:$0xff]
          %v981 = vld [vmem:[%s273 + $0x140] sm:$0xff]
          %v982 = vld [vmem:[%s273 + $0x148] sm:$0xff]
          %v983 = vld [vmem:[%s273 + $0x150] sm:$0xff]
          %v984 = vld [vmem:[%s273 + $0x158] sm:$0xff]
          %v985 = vld [vmem:[%s273 + $0x160] sm:$0xff]
          %v986 = vld [vmem:[%s273 + $0x168] sm:$0xff]
          %v987 = vld [vmem:[%s273 + $0x170] sm:$0xff]
          %v988 = vld [vmem:[%s273 + $0x178] sm:$0xff]
          %v989 = vld [vmem:[%s273 + $0x180] sm:$0xff]
          %v990 = vld [vmem:[%s273 + $0x188] sm:$0xff]
          %v991 = vld [vmem:[%s273 + $0x190] sm:$0xff]
          %v992 = vld [vmem:[%s273 + $0x198] sm:$0xff]
          %v993 = vld [vmem:[%s273 + $0x1a0] sm:$0xff]
          %v994 = vld [vmem:[%s273 + $0x1a8] sm:$0xff]
          %v995 = vld [vmem:[%s273 + $0x1b0] sm:$0xff]
          %v996 = vld [vmem:[%s273 + $0x1b8] sm:$0xff]
          %v997 = vld [vmem:[%s273 + $0x1c0] sm:$0xff]
          %v998 = vld [vmem:[%s273 + $0x1c8] sm:$0xff]
          %v999 = vld [vmem:[%s273 + $0x1d0] sm:$0xff]
          %v1000 = vld [vmem:[%s273 + $0x1d8] sm:$0xff]
          %v1001 = vld [vmem:[%s273 + $0x1e0] sm:$0xff]
          %v1002 = vld [vmem:[%s273 + $0x1e8] sm:$0xff]
          %v1003 = vld [vmem:[%s273 + $0x1f0] sm:$0xff]
          %v1004 = vld [vmem:[%s273 + $0x1f8] sm:$0xff]
          %v1007 = vunpack.c.l.b16 %v939
          %v1008 = vunpack.c.l.b16 %v940
          %v1009 = vpack.c.b16 %v1008, %v1007
          %v1075 = vunpack.c.l.b16 %v941
          %v1076 = vunpack.c.h.b16 %v941
          %v1077 = vunpack.c.l.b16 %v942
          %v1078 = vunpack.c.h.b16 %v942
          %v1079 = vunpack.c.l.b16 %v943
          %v1080 = vunpack.c.h.b16 %v943
          %v1081 = vunpack.c.l.b16 %v944
          %v1082 = vunpack.c.h.b16 %v944
          %v1083 = vunpack.c.l.b16 %v945
          %v1084 = vunpack.c.h.b16 %v945
          %v1085 = vunpack.c.l.b16 %v946
          %v1086 = vunpack.c.h.b16 %v946
          %v1087 = vunpack.c.l.b16 %v947
          %v1088 = vunpack.c.h.b16 %v947
          %v1089 = vunpack.c.l.b16 %v948
          %v1090 = vunpack.c.h.b16 %v948
          %v1091 = vunpack.c.l.b16 %v949
          %v1092 = vunpack.c.h.b16 %v949
          %v1093 = vunpack.c.l.b16 %v950
          %v1094 = vunpack.c.h.b16 %v950
          %v1095 = vunpack.c.l.b16 %v951
          %v1096 = vunpack.c.h.b16 %v951
          %v1097 = vunpack.c.l.b16 %v952
          %v1098 = vunpack.c.h.b16 %v952
          %v1099 = vunpack.c.l.b16 %v953
          %v1100 = vunpack.c.h.b16 %v953
          %v1101 = vunpack.c.l.b16 %v954
          %v1102 = vunpack.c.h.b16 %v954
          %v1103 = vunpack.c.l.b16 %v955
          %v1104 = vunpack.c.h.b16 %v955
          %v1105 = vunpack.c.l.b16 %v956
          %v1106 = vunpack.c.h.b16 %v956
          %v1107 = vunpack.c.l.b16 %v957
          %v1108 = vunpack.c.h.b16 %v957
          %v1109 = vunpack.c.l.b16 %v958
          %v1110 = vunpack.c.h.b16 %v958
          %v1111 = vunpack.c.l.b16 %v959
          %v1112 = vunpack.c.h.b16 %v959
          %v1113 = vunpack.c.l.b16 %v960
          %v1114 = vunpack.c.h.b16 %v960
          %v1115 = vunpack.c.l.b16 %v961
          %v1116 = vunpack.c.h.b16 %v961
          %v1117 = vunpack.c.l.b16 %v962
          %v1118 = vunpack.c.h.b16 %v962
          %v1119 = vunpack.c.l.b16 %v963
          %v1120 = vunpack.c.h.b16 %v963
          %v1121 = vunpack.c.l.b16 %v964
          %v1122 = vunpack.c.h.b16 %v964
          %v1123 = vunpack.c.l.b16 %v965
          %v1124 = vunpack.c.h.b16 %v965
          %v1125 = vunpack.c.l.b16 %v966
          %v1126 = vunpack.c.h.b16 %v966
          %v1127 = vunpack.c.l.b16 %v967
          %v1128 = vunpack.c.h.b16 %v967
          %v1129 = vunpack.c.l.b16 %v968
          %v1130 = vunpack.c.h.b16 %v968
          %v1131 = vunpack.c.l.b16 %v969
          %v1132 = vunpack.c.h.b16 %v969
          %v1133 = vunpack.c.l.b16 %v970
          %v1134 = vunpack.c.h.b16 %v970
          %v1135 = vunpack.c.l.b16 %v971
          %v1136 = vunpack.c.h.b16 %v971
          %v1137 = vunpack.c.l.b16 %v972
          %v1138 = vunpack.c.h.b16 %v972
          %v1139 = vunpack.c.l.b16 %v973
          %v1140 = vunpack.c.h.b16 %v973
          %v1141 = vunpack.c.l.b16 %v974
          %v1142 = vunpack.c.h.b16 %v974
          %v1143 = vunpack.c.l.b16 %v975
          %v1144 = vunpack.c.h.b16 %v975
          %v1145 = vunpack.c.l.b16 %v976
          %v1146 = vunpack.c.h.b16 %v976
          %v1147 = vunpack.c.l.b16 %v977
          %v1148 = vunpack.c.h.b16 %v977
          %v1149 = vunpack.c.l.b16 %v978
          %v1150 = vunpack.c.h.b16 %v978
          %v1151 = vunpack.c.l.b16 %v979
          %v1152 = vunpack.c.h.b16 %v979
          %v1153 = vunpack.c.l.b16 %v980
          %v1154 = vunpack.c.h.b16 %v980
          %v1155 = vunpack.c.l.b16 %v981
          %v1156 = vunpack.c.h.b16 %v981
          %v1157 = vunpack.c.l.b16 %v982
          %v1158 = vunpack.c.h.b16 %v982
          %v1159 = vunpack.c.l.b16 %v983
          %v1160 = vunpack.c.h.b16 %v983
          %v1161 = vunpack.c.l.b16 %v984
          %v1162 = vunpack.c.h.b16 %v984
          %v1163 = vunpack.c.l.b16 %v985
          %v1164 = vunpack.c.h.b16 %v985
          %v1165 = vunpack.c.l.b16 %v986
          %v1166 = vunpack.c.h.b16 %v986
          %v1167 = vunpack.c.l.b16 %v987
          %v1168 = vunpack.c.h.b16 %v987
          %v1169 = vunpack.c.l.b16 %v988
          %v1170 = vunpack.c.h.b16 %v988
          %v1171 = vunpack.c.l.b16 %v989
          %v1172 = vunpack.c.h.b16 %v989
          %v1173 = vunpack.c.l.b16 %v990
          %v1174 = vunpack.c.h.b16 %v990
          %v1175 = vunpack.c.l.b16 %v991
          %v1176 = vunpack.c.h.b16 %v991
          %v1177 = vunpack.c.l.b16 %v992
          %v1178 = vunpack.c.h.b16 %v992
          %v1179 = vunpack.c.l.b16 %v993
          %v1180 = vunpack.c.h.b16 %v993
          %v1181 = vunpack.c.l.b16 %v994
          %v1182 = vunpack.c.h.b16 %v994
          %v1183 = vunpack.c.l.b16 %v995
          %v1184 = vunpack.c.h.b16 %v995
          %v1185 = vunpack.c.l.b16 %v996
          %v1186 = vunpack.c.h.b16 %v996
          %v1187 = vunpack.c.l.b16 %v997
          %v1188 = vunpack.c.h.b16 %v997
          %v1189 = vunpack.c.l.b16 %v998
          %v1190 = vunpack.c.h.b16 %v998
          %v1191 = vunpack.c.l.b16 %v999
          %v1192 = vunpack.c.h.b16 %v999
          %v1193 = vunpack.c.l.b16 %v1000
          %v1194 = vunpack.c.h.b16 %v1000
          %v1195 = vunpack.c.l.b16 %v1001
          %v1196 = vunpack.c.h.b16 %v1001
          %v1197 = vunpack.c.l.b16 %v1002
          %v1198 = vunpack.c.h.b16 %v1002
          %v1199 = vunpack.c.l.b16 %v1003
          %v1200 = vunpack.c.h.b16 %v1003
          %v1201 = vunpack.c.l.b16 %v1004
          %v1202 = vunpack.c.h.b16 %v1004
          %v1203 = vpack.c.b16 %v1083, %v1075
          %v1204 = vpack.c.b16 %v1084, %v1076
          %v1205 = vpack.c.b16 %v1085, %v1077
          %v1206 = vpack.c.b16 %v1086, %v1078
          %v1207 = vpack.c.b16 %v1087, %v1079
          %v1208 = vpack.c.b16 %v1088, %v1080
          %v1209 = vpack.c.b16 %v1089, %v1081
          %v1210 = vpack.c.b16 %v1090, %v1082
          %v1211 = vpack.c.b16 %v1099, %v1091
          %v1212 = vpack.c.b16 %v1100, %v1092
          %v1213 = vpack.c.b16 %v1101, %v1093
          %v1214 = vpack.c.b16 %v1102, %v1094
          %v1215 = vpack.c.b16 %v1103, %v1095
          %v1216 = vpack.c.b16 %v1104, %v1096
          %v1217 = vpack.c.b16 %v1105, %v1097
          %v1218 = vpack.c.b16 %v1106, %v1098
          %v1219 = vpack.c.b16 %v1115, %v1107
          %v1220 = vpack.c.b16 %v1116, %v1108
          %v1221 = vpack.c.b16 %v1117, %v1109
          %v1222 = vpack.c.b16 %v1118, %v1110
          %v1223 = vpack.c.b16 %v1119, %v1111
          %v1224 = vpack.c.b16 %v1120, %v1112
          %v1225 = vpack.c.b16 %v1121, %v1113
          %v1226 = vpack.c.b16 %v1122, %v1114
          %v1227 = vpack.c.b16 %v1131, %v1123
          %v1228 = vpack.c.b16 %v1132, %v1124
          %v1229 = vpack.c.b16 %v1133, %v1125
          %v1230 = vpack.c.b16 %v1134, %v1126
          %v1231 = vpack.c.b16 %v1135, %v1127
          %v1232 = vpack.c.b16 %v1136, %v1128
          %v1233 = vpack.c.b16 %v1137, %v1129
          %v1234 = vpack.c.b16 %v1138, %v1130
          %v1235 = vpack.c.b16 %v1147, %v1139
          %v1236 = vpack.c.b16 %v1148, %v1140
          %v1237 = vpack.c.b16 %v1149, %v1141
          %v1238 = vpack.c.b16 %v1150, %v1142
          %v1239 = vpack.c.b16 %v1151, %v1143
          %v1240 = vpack.c.b16 %v1152, %v1144
          %v1241 = vpack.c.b16 %v1153, %v1145
          %v1242 = vpack.c.b16 %v1154, %v1146
          %v1243 = vpack.c.b16 %v1163, %v1155
          %v1244 = vpack.c.b16 %v1164, %v1156
          %v1245 = vpack.c.b16 %v1165, %v1157
          %v1246 = vpack.c.b16 %v1166, %v1158
          %v1247 = vpack.c.b16 %v1167, %v1159
          %v1248 = vpack.c.b16 %v1168, %v1160
          %v1249 = vpack.c.b16 %v1169, %v1161
          %v1250 = vpack.c.b16 %v1170, %v1162
          %v1251 = vpack.c.b16 %v1179, %v1171
          %v1252 = vpack.c.b16 %v1180, %v1172
          %v1253 = vpack.c.b16 %v1181, %v1173
          %v1254 = vpack.c.b16 %v1182, %v1174
          %v1255 = vpack.c.b16 %v1183, %v1175
          %v1256 = vpack.c.b16 %v1184, %v1176
          %v1257 = vpack.c.b16 %v1185, %v1177
          %v1258 = vpack.c.b16 %v1186, %v1178
          %v1259 = vpack.c.b16 %v1195, %v1187
          %v1260 = vpack.c.b16 %v1196, %v1188
          %v1261 = vpack.c.b16 %v1197, %v1189
          %v1262 = vpack.c.b16 %v1198, %v1190
          %v1263 = vpack.c.b16 %v1199, %v1191
          %v1264 = vpack.c.b16 %v1200, %v1192
          %v1265 = vpack.c.b16 %v1201, %v1193
          %v1266 = vpack.c.b16 %v1202, %v1194
          %1331 = vmatprep.subr.bf16.mxu0 %v1204
          %1332 = vmatpush1.bf16.msra.mxu0 %v1203
          %1333 = vmatprep.subr.bf16.mxu0 %v1212
          %1334 = vmatpush1.bf16.msra.mxu0 %v1211
          %1335 = vmatprep.subr.bf16.mxu0 %v1220
          %1336 = vmatpush1.bf16.msra.mxu0 %v1219
          %1337 = vmatprep.subr.bf16.mxu0 %v1228
          %1338 = vmatpush1.bf16.msra.mxu0 %v1227
          %1339 = vmatprep.subr.bf16.mxu0 %v1236
          %1340 = vmatpush1.bf16.msra.mxu0 %v1235
          %1341 = vmatprep.subr.bf16.mxu0 %v1244
          %1342 = vmatpush1.bf16.msra.mxu0 %v1243
          %1343 = vmatprep.subr.bf16.mxu0 %v1252
          %1344 = vmatpush1.bf16.msra.mxu0 %v1251
          %1345 = vmatprep.subr.bf16.mxu0 %v1260
          %1346 = vmatpush1.bf16.msra.mxu0 %v1259
          %1347 = vmatprep.subr.bf16.mxu0 0
          %1348 = vmatpush1.bf16.msra.mxu0 0
          %1349 = vmatprep.subr.bf16.mxu0 0
          %1350 = vmatpush1.bf16.msra.mxu0 0
          %1351 = vmatprep.subr.bf16.mxu0 0
          %1352 = vmatpush1.bf16.msra.mxu0 0
          %1353 = vmatprep.subr.bf16.mxu0 0
          %1354 = vmatpush1.bf16.msra.mxu0 0
          %1355 = vmatprep.subr.bf16.mxu0 0
          %1356 = vmatpush1.bf16.msra.mxu0 0
          %1357 = vmatprep.subr.bf16.mxu0 0
          %1358 = vmatpush1.bf16.msra.mxu0 0
          %1359 = vmatprep.subr.bf16.mxu0 0
          %1360 = vmatpush1.bf16.msra.mxu0 0
          %1361 = vmatprep.subr.bf16.mxu0 0
          %1362 = vmatpush1.bf16.msra.mxu0 0
          %1363 = vmatprep.mubr.bf16.mxu0 0
          %1364 = vmatmul.mubr.bf16.gmra.mrb[0].mxu0 %v1009
          %v1365 = vpop.f32.mrb[0].mxu0
          %v1366 = vadd.f32 0.0, %v1365
          %v1367 = vpop.f32.mrb[0].mxu0
          %v1368 = vadd.f32 0.0, %v1367
          %v1369 = vpop.f32.mrb[0].mxu0
          %v1370 = vadd.f32 0.0, %v1369
          %v1371 = vpop.f32.mrb[0].mxu0
          %v1372 = vadd.f32 0.0, %v1371
          %1373 = vdwg.mxu0
          %1374 = vmatprep.subr.bf16.mxu0 %v1206
          %1375 = vmatpush1.bf16.msra.mxu0 %v1205
          %1376 = vmatprep.subr.bf16.mxu0 %v1214
          %1377 = vmatpush1.bf16.msra.mxu0 %v1213
          %1378 = vmatprep.subr.bf16.mxu0 %v1222
          %1379 = vmatpush1.bf16.msra.mxu0 %v1221
          %1380 = vmatprep.subr.bf16.mxu0 %v1230
          %1381 = vmatpush1.bf16.msra.mxu0 %v1229
          %1382 = vmatprep.subr.bf16.mxu0 %v1238
          %1383 = vmatpush1.bf16.msra.mxu0 %v1237
          %1384 = vmatprep.subr.bf16.mxu0 %v1246
          %1385 = vmatpush1.bf16.msra.mxu0 %v1245
          %1386 = vmatprep.subr.bf16.mxu0 %v1254
          %1387 = vmatpush1.bf16.msra.mxu0 %v1253
          %1388 = vmatprep.subr.bf16.mxu0 %v1262
          %1389 = vmatpush1.bf16.msra.mxu0 %v1261
          %1390 = vmatprep.subr.bf16.mxu0 0
          %1391 = vmatpush1.bf16.msra.mxu0 0
          %1392 = vmatprep.subr.bf16.mxu0 0
          %1393 = vmatpush1.bf16.msra.mxu0 0
          %1394 = vmatprep.subr.bf16.mxu0 0
          %1395 = vmatpush1.bf16.msra.mxu0 0
          %1396 = vmatprep.subr.bf16.mxu0 0
          %1397 = vmatpush1.bf16.msra.mxu0 0
          %1398 = vmatprep.subr.bf16.mxu0 0
          %1399 = vmatpush1.bf16.msra.mxu0 0
          %1400 = vmatprep.subr.bf16.mxu0 0
          %1401 = vmatpush1.bf16.msra.mxu0 0
          %1402 = vmatprep.subr.bf16.mxu0 0
          %1403 = vmatpush1.bf16.msra.mxu0 0
          %1404 = vmatprep.subr.bf16.mxu0 0
          %1405 = vmatpush1.bf16.msra.mxu0 0
          %1406 = vmatprep.mubr.bf16.mxu0 0
          %1407 = vmatmul.mubr.bf16.gmra.mrb[0].mxu0 %v1009
          %v1408 = vpop.f32.mrb[0].mxu0
          %v1409 = vadd.f32 0.0, %v1408
          %v1410 = vpop.f32.mrb[0].mxu0
          %v1411 = vadd.f32 0.0, %v1410
          %v1412 = vpop.f32.mrb[0].mxu0
          %v1413 = vadd.f32 0.0, %v1412
          %v1414 = vpop.f32.mrb[0].mxu0
          %v1415 = vadd.f32 0.0, %v1414
          %1416 = vdwg.mxu0
          %1417 = vmatprep.subr.bf16.mxu0 %v1208
          %1418 = vmatpush1.bf16.msra.mxu0 %v1207
          %1419 = vmatprep.subr.bf16.mxu0 %v1216
          %1420 = vmatpush1.bf16.msra.mxu0 %v1215
          %1421 = vmatprep.subr.bf16.mxu0 %v1224
          %1422 = vmatpush1.bf16.msra.mxu0 %v1223
          %1423 = vmatprep.subr.bf16.mxu0 %v1232
          %1424 = vmatpush1.bf16.msra.mxu0 %v1231
          %1425 = vmatprep.subr.bf16.mxu0 %v1240
          %1426 = vmatpush1.bf16.msra.mxu0 %v1239
          %1427 = vmatprep.subr.bf16.mxu0 %v1248
          %1428 = vmatpush1.bf16.msra.mxu0 %v1247
          %1429 = vmatprep.subr.bf16.mxu0 %v1256
          %1430 = vmatpush1.bf16.msra.mxu0 %v1255
          %1431 = vmatprep.subr.bf16.mxu0 %v1264
          %1432 = vmatpush1.bf16.msra.mxu0 %v1263
          %1433 = vmatprep.subr.bf16.mxu0 0
          %1434 = vmatpush1.bf16.msra.mxu0 0
          %1435 = vmatprep.subr.bf16.mxu0 0
          %1436 = vmatpush1.bf16.msra.mxu0 0
          %1437 = vmatprep.subr.bf16.mxu0 0
          %1438 = vmatpush1.bf16.msra.mxu0 0
          %1439 = vmatprep.subr.bf16.mxu0 0
          %1440 = vmatpush1.bf16.msra.mxu0 0
          %1441 = vmatprep.subr.bf16.mxu0 0
          %1442 = vmatpush1.bf16.msra.mxu0 0
          %1443 = vmatprep.subr.bf16.mxu0 0
          %1444 = vmatpush1.bf16.msra.mxu0 0
          %1445 = vmatprep.subr.bf16.mxu0 0
          %1446 = vmatpush1.bf16.msra.mxu0 0
          %1447 = vmatprep.subr.bf16.mxu0 0
          %1448 = vmatpush1.bf16.msra.mxu0 0
          %1449 = vmatprep.mubr.bf16.mxu0 0
          %1450 = vmatmul.mubr.bf16.gmra.mrb[0].mxu0 %v1009
          %v1451 = vpop.f32.mrb[0].mxu0
          %v1452 = vadd.f32 0.0, %v1451
          %v1453 = vpop.f32.mrb[0].mxu0
          %v1454 = vadd.f32 0.0, %v1453
          %v1455 = vpop.f32.mrb[0].mxu0
          %v1456 = vadd.f32 0.0, %v1455
          %v1457 = vpop.f32.mrb[0].mxu0
          %v1458 = vadd.f32 0.0, %v1457
          %1459 = vdwg.mxu0
          %1460 = vmatprep.subr.bf16.mxu0 %v1210
          %1461 = vmatpush1.bf16.msra.mxu0 %v1209
          %1462 = vmatprep.subr.bf16.mxu0 %v1218
          %1463 = vmatpush1.bf16.msra.mxu0 %v1217
          %1464 = vmatprep.subr.bf16.mxu0 %v1226
          %1465 = vmatpush1.bf16.msra.mxu0 %v1225
          %1466 = vmatprep.subr.bf16.mxu0 %v1234
          %1467 = vmatpush1.bf16.msra.mxu0 %v1233
          %1468 = vmatprep.subr.bf16.mxu0 %v1242
          %1469 = vmatpush1.bf16.msra.mxu0 %v1241
          %1470 = vmatprep.subr.bf16.mxu0 %v1250
          %1471 = vmatpush1.bf16.msra.mxu0 %v1249
          %1472 = vmatprep.subr.bf16.mxu0 %v1258
          %1473 = vmatpush1.bf16.msra.mxu0 %v1257
          %1474 = vmatprep.subr.bf16.mxu0 %v1266
          %1475 = vmatpush1.bf16.msra.mxu0 %v1265
          %1476 = vmatprep.subr.bf16.mxu0 0
          %1477 = vmatpush1.bf16.msra.mxu0 0
          %1478 = vmatprep.subr.bf16.mxu0 0
          %1479 = vmatpush1.bf16.msra.mxu0 0
          %1480 = vmatprep.subr.bf16.mxu0 0
          %1481 = vmatpush1.bf16.msra.mxu0 0
          %1482 = vmatprep.subr.bf16.mxu0 0
          %1483 = vmatpush1.bf16.msra.mxu0 0
          %1484 = vmatprep.subr.bf16.mxu0 0
          %1485 = vmatpush1.bf16.msra.mxu0 0
          %1486 = vmatprep.subr.bf16.mxu0 0
          %1487 = vmatpush1.bf16.msra.mxu0 0
          %1488 = vmatprep.subr.bf16.mxu0 0
          %1489 = vmatpush1.bf16.msra.mxu0 0
          %1490 = vmatprep.subr.bf16.mxu0 0
          %1491 = vmatpush1.bf16.msra.mxu0 0
          %1492 = vmatprep.mubr.bf16.mxu0 0
          %1493 = vmatmul.mubr.bf16.gmra.mrb[0].mxu0 %v1009
          %v1494 = vpop.f32.mrb[0].mxu0
          %v1495 = vadd.f32 0.0, %v1494
          %v1496 = vpop.f32.mrb[0].mxu0
          %v1497 = vadd.f32 0.0, %v1496
          %v1498 = vpop.f32.mrb[0].mxu0
          %v1499 = vadd.f32 0.0, %v1498
          %v1500 = vpop.f32.mrb[0].mxu0
          %v1501 = vadd.f32 0.0, %v1500
          %1502 = vdwg.mxu0
          %v1503 = vmax.f32 %v920, %v1366
          %v1504 = vmax.f32 %v921, %v1368
          %v1505 = vmax.f32 %v922, %v1409
          %v1506 = vmax.f32 %v923, %v1411
          %v1507 = vmax.f32 %v924, %v1452
          %v1508 = vmax.f32 %v925, %v1454
          %v1509 = vmax.f32 %v926, %v1495
          %v1510 = vmax.f32 %v927, %v1497
          %v1511 = vmax.f32 %v928, %v1370
          %v1512 = vmax.f32 %v929, %v1372
          %v1513 = vmax.f32 %v930, %v1413
          %v1514 = vmax.f32 %v931, %v1415
          %v1515 = vmax.f32 %v932, %v1456
          %v1516 = vmax.f32 %v933, %v1458
          %v1517 = vmax.f32 %v934, %v1499
          %v1518 = vmax.f32 %v935, %v1501
          %1519 = vst [vmem:[#allocation2] sm:$0xff] %v1503
          %1520 = vst [vmem:[#allocation2 + $0x8] sm:$0xff] %v1504
          %1521 = vst [vmem:[#allocation2 + $0x10] sm:$0xff] %v1505
          %1522 = vst [vmem:[#allocation2 + $0x18] sm:$0xff] %v1506
          %1523 = vst [vmem:[#allocation2 + $0x20] sm:$0xff] %v1507
          %1524 = vst [vmem:[#allocation2 + $0x28] sm:$0xff] %v1508
          %1525 = vst [vmem:[#allocation2 + $0x30] sm:$0xff] %v1509
          %1526 = vst [vmem:[#allocation2 + $0x38] sm:$0xff] %v1510
          %1527 = vst [vmem:[#allocation2 + $0x40] sm:$0xff] %v1511
          %1528 = vst [vmem:[#allocation2 + $0x48] sm:$0xff] %v1512
          %1529 = vst [vmem:[#allocation2 + $0x50] sm:$0xff] %v1513
          %1530 = vst [vmem:[#allocation2 + $0x58] sm:$0xff] %v1514
          %1531 = vst [vmem:[#allocation2 + $0x60] sm:$0xff] %v1515
          %1532 = vst [vmem:[#allocation2 + $0x68] sm:$0xff] %v1516
          %1533 = vst [vmem:[#allocation2 + $0x70] sm:$0xff] %v1517
          %1534 = vst [vmem:[#allocation2 + $0x78] sm:$0xff] %v1518
        $region57: #{tpu_custom_call.1} parent=35 // loop_footer
          %s918 = sadd.s32 1, %s914
        $region58: #{tpu_custom_call.1} parent=35 // loop_footer_branch
          %913 = sbr.rel target = $region54
        $region59: #{tpu_custom_call.1} parent=35 // loop_exit
          _
        %s1535 = scalar_lea.vmem [#allocation3], 80
        %v1536 = vld [vmem:[%s1535] sm:$0xf]
        %v1537 = vld [vmem:[%s1535 + $0x4] sm:$0xf]
        %v1538 = vld [vmem:[%s273] sm:$0xff]
        %v1539 = vld [vmem:[%s273 + $0x8] sm:$0xff]
        %v1540 = vld [vmem:[%s273 + $0x10] sm:$0xff]
        %v1541 = vld [vmem:[%s273 + $0x18] sm:$0xff]
        %v1542 = vld [vmem:[%s273 + $0x20] sm:$0xff]
        %v1543 = vld [vmem:[%s273 + $0x28] sm:$0xff]
        %v1544 = vld [vmem:[%s273 + $0x30] sm:$0xff]
        %v1545 = vld [vmem:[%s273 + $0x38] sm:$0xff]
        %v1546 = vld [vmem:[%s273 + $0x40] sm:$0xff]
        %v1547 = vld [vmem:[%s273 + $0x48] sm:$0xff]
        %v1548 = vld [vmem:[%s273 + $0x50] sm:$0xff]
        %v1549 = vld [vmem:[%s273 + $0x58] sm:$0xff]
        %v1550 = vld [vmem:[%s273 + $0x60] sm:$0xff]
        %v1551 = vld [vmem:[%s273 + $0x68] sm:$0xff]
        %v1552 = vld [vmem:[%s273 + $0x70] sm:$0xff]
        %v1553 = vld [vmem:[%s273 + $0x78] sm:$0xff]
        %v1554 = vld [vmem:[%s273 + $0x80] sm:$0xff]
        %v1555 = vld [vmem:[%s273 + $0x88] sm:$0xff]
        %v1556 = vld [vmem:[%s273 + $0x90] sm:$0xff]
        %v1557 = vld [vmem:[%s273 + $0x98] sm:$0xff]
        %v1558 = vld [vmem:[%s273 + $0xa0] sm:$0xff]
        %v1559 = vld [vmem:[%s273 + $0xa8] sm:$0xff]
        %v1560 = vld [vmem:[%s273 + $0xb0] sm:$0xff]
        %v1561 = vld [vmem:[%s273 + $0xb8] sm:$0xff]
        %v1562 = vld [vmem:[%s273 + $0xc0] sm:$0xff]
        %v1563 = vld [vmem:[%s273 + $0xc8] sm:$0xff]
        %v1564 = vld [vmem:[%s273 + $0xd0] sm:$0xff]
        %v1565 = vld [vmem:[%s273 + $0xd8] sm:$0xff]
        %v1566 = vld [vmem:[%s273 + $0xe0] sm:$0xff]
        %v1567 = vld [vmem:[%s273 + $0xe8] sm:$0xff]
        %v1568 = vld [vmem:[%s273 + $0xf0] sm:$0xff]
        %v1569 = vld [vmem:[%s273 + $0xf8] sm:$0xff]
        %v1570 = vld [vmem:[%s273 + $0x100] sm:$0xff]
        %v1571 = vld [vmem:[%s273 + $0x108] sm:$0xff]
        %v1572 = vld [vmem:[%s273 + $0x110] sm:$0xff]
        %v1573 = vld [vmem:[%s273 + $0x118] sm:$0xff]
        %v1574 = vld [vmem:[%s273 + $0x120] sm:$0xff]
        %v1575 = vld [vmem:[%s273 + $0x128] sm:$0xff]
        %v1576 = vld [vmem:[%s273 + $0x130] sm:$0xff]
        %v1577 = vld [vmem:[%s273 + $0x138] sm:$0xff]
        %v1578 = vld [vmem:[%s273 + $0x140] sm:$0xff]
        %v1579 = vld [vmem:[%s273 + $0x148] sm:$0xff]
        %v1580 = vld [vmem:[%s273 + $0x150] sm:$0xff]
        %v1581 = vld [vmem:[%s273 + $0x158] sm:$0xff]
        %v1582 = vld [vmem:[%s273 + $0x160] sm:$0xff]
        %v1583 = vld [vmem:[%s273 + $0x168] sm:$0xff]
        %v1584 = vld [vmem:[%s273 + $0x170] sm:$0xff]
        %v1585 = vld [vmem:[%s273 + $0x178] sm:$0xff]
        %v1586 = vld [vmem:[%s273 + $0x180] sm:$0xff]
        %v1587 = vld [vmem:[%s273 + $0x188] sm:$0xff]
        %v1588 = vld [vmem:[%s273 + $0x190] sm:$0xff]
        %v1589 = vld [vmem:[%s273 + $0x198] sm:$0xff]
        %v1590 = vld [vmem:[%s273 + $0x1a0] sm:$0xff]
        %v1591 = vld [vmem:[%s273 + $0x1a8] sm:$0xff]
        %v1592 = vld [vmem:[%s273 + $0x1b0] sm:$0xff]
        %v1593 = vld [vmem:[%s273 + $0x1b8] sm:$0xff]
        %v1594 = vld [vmem:[%s273 + $0x1c0] sm:$0xff]
        %v1595 = vld [vmem:[%s273 + $0x1c8] sm:$0xff]
        %v1596 = vld [vmem:[%s273 + $0x1d0] sm:$0xff]
        %v1597 = vld [vmem:[%s273 + $0x1d8] sm:$0xff]
        %v1598 = vld [vmem:[%s273 + $0x1e0] sm:$0xff]
        %v1599 = vld [vmem:[%s273 + $0x1e8] sm:$0xff]
        %v1600 = vld [vmem:[%s273 + $0x1f0] sm:$0xff]
        %v1601 = vld [vmem:[%s273 + $0x1f8] sm:$0xff]
        %v1602 = vld [vmem:[#allocation2] sm:$0xff]
        %v1603 = vld [vmem:[#allocation2 + $0x8] sm:$0xff]
        %v1604 = vld [vmem:[#allocation2 + $0x10] sm:$0xff]
        %v1605 = vld [vmem:[#allocation2 + $0x18] sm:$0xff]
        %v1606 = vld [vmem:[#allocation2 + $0x20] sm:$0xff]
        %v1607 = vld [vmem:[#allocation2 + $0x28] sm:$0xff]
        %v1608 = vld [vmem:[#allocation2 + $0x30] sm:$0xff]
        %v1609 = vld [vmem:[#allocation2 + $0x38] sm:$0xff]
        %v1610 = vld [vmem:[#allocation2 + $0x40] sm:$0xff]
        %v1611 = vld [vmem:[#allocation2 + $0x48] sm:$0xff]
        %v1612 = vld [vmem:[#allocation2 + $0x50] sm:$0xff]
        %v1613 = vld [vmem:[#allocation2 + $0x58] sm:$0xff]
        %v1614 = vld [vmem:[#allocation2 + $0x60] sm:$0xff]
        %v1615 = vld [vmem:[#allocation2 + $0x68] sm:$0xff]
        %v1616 = vld [vmem:[#allocation2 + $0x70] sm:$0xff]
        %v1617 = vld [vmem:[#allocation2 + $0x78] sm:$0xff]
        %s1618 = scalar_lea.vmem %s291, 5 [#allocation9]
        %v1619 = vld [vmem:[%s1618] ss:$8 sm:$0xf]
        %v1620 = vld [vmem:[%s1618] ss:$8 sm:$0xf0]
        %v1621 = vor.u32 %v1619, %v1620
        %v1623 = vlaneseq
        %v1624 = vshrl.u32 %v1623, 7
        %v1625 = vsub.s32 0, %v1624
        %v1626 = vrot.slane %v1621, %v1625
        %v1627 = vlaneseq
        %v1628 = vshrl.u32 %v1627, 7
        %v1629 = vsub.s32 1, %v1628
        %v1630 = vrot.slane %v1621, %v1629
        %v1631 = vlaneseq
        %v1632 = vshrl.u32 %v1631, 7
        %v1633 = vsub.s32 2, %v1632
        %v1634 = vrot.slane %v1621, %v1633
        %v1635 = vlaneseq
        %v1636 = vshrl.u32 %v1635, 7
        %v1637 = vsub.s32 3, %v1636
        %v1638 = vrot.slane %v1621, %v1637
        %v1639 = vlaneseq
        %v1640 = vshrl.u32 %v1639, 7
        %v1641 = vsub.s32 4, %v1640
        %v1642 = vrot.slane %v1621, %v1641
        %v1643 = vlaneseq
        %v1644 = vshrl.u32 %v1643, 7
        %v1645 = vsub.s32 5, %v1644
        %v1646 = vrot.slane %v1621, %v1645
        %v1647 = vlaneseq
        %v1648 = vshrl.u32 %v1647, 7
        %v1649 = vsub.s32 6, %v1648
        %v1650 = vrot.slane %v1621, %v1649
        %v1651 = vlaneseq
        %v1652 = vshrl.u32 %v1651, 7
        %v1653 = vsub.s32 7, %v1652
        %v1654 = vrot.slane %v1621, %v1653
        %v1665 = vunpack.c.l.b16 %v1536
        %v1666 = vunpack.c.l.b16 %v1537
        %v1667 = vpack.c.b16 %v1666, %v1665
        %v1733 = vunpack.c.l.b16 %v1538
        %v1734 = vunpack.c.h.b16 %v1538
        %v1735 = vunpack.c.l.b16 %v1539
        %v1736 = vunpack.c.h.b16 %v1539
        %v1737 = vunpack.c.l.b16 %v1540
        %v1738 = vunpack.c.h.b16 %v1540
        %v1739 = vunpack.c.l.b16 %v1541
        %v1740 = vunpack.c.h.b16 %v1541
        %v1741 = vunpack.c.l.b16 %v1542
        %v1742 = vunpack.c.h.b16 %v1542
        %v1743 = vunpack.c.l.b16 %v1543
        %v1744 = vunpack.c.h.b16 %v1543
        %v1745 = vunpack.c.l.b16 %v1544
        %v1746 = vunpack.c.h.b16 %v1544
        %v1747 = vunpack.c.l.b16 %v1545
        %v1748 = vunpack.c.h.b16 %v1545
        %v1749 = vunpack.c.l.b16 %v1546
        %v1750 = vunpack.c.h.b16 %v1546
        %v1751 = vunpack.c.l.b16 %v1547
        %v1752 = vunpack.c.h.b16 %v1547
        %v1753 = vunpack.c.l.b16 %v1548
        %v1754 = vunpack.c.h.b16 %v1548
        %v1755 = vunpack.c.l.b16 %v1549
        %v1756 = vunpack.c.h.b16 %v1549
        %v1757 = vunpack.c.l.b16 %v1550
        %v1758 = vunpack.c.h.b16 %v1550
        %v1759 = vunpack.c.l.b16 %v1551
        %v1760 = vunpack.c.h.b16 %v1551
        %v1761 = vunpack.c.l.b16 %v1552
        %v1762 = vunpack.c.h.b16 %v1552
        %v1763 = vunpack.c.l.b16 %v1553
        %v1764 = vunpack.c.h.b16 %v1553
        %v1765 = vunpack.c.l.b16 %v1554
        %v1766 = vunpack.c.h.b16 %v1554
        %v1767 = vunpack.c.l.b16 %v1555
        %v1768 = vunpack.c.h.b16 %v1555
        %v1769 = vunpack.c.l.b16 %v1556
        %v1770 = vunpack.c.h.b16 %v1556
        %v1771 = vunpack.c.l.b16 %v1557
        %v1772 = vunpack.c.h.b16 %v1557
        %v1773 = vunpack.c.l.b16 %v1558
        %v1774 = vunpack.c.h.b16 %v1558
        %v1775 = vunpack.c.l.b16 %v1559
        %v1776 = vunpack.c.h.b16 %v1559
        %v1777 = vunpack.c.l.b16 %v1560
        %v1778 = vunpack.c.h.b16 %v1560
        %v1779 = vunpack.c.l.b16 %v1561
        %v1780 = vunpack.c.h.b16 %v1561
        %v1781 = vunpack.c.l.b16 %v1562
        %v1782 = vunpack.c.h.b16 %v1562
        %v1783 = vunpack.c.l.b16 %v1563
        %v1784 = vunpack.c.h.b16 %v1563
        %v1785 = vunpack.c.l.b16 %v1564
        %v1786 = vunpack.c.h.b16 %v1564
        %v1787 = vunpack.c.l.b16 %v1565
        %v1788 = vunpack.c.h.b16 %v1565
        %v1789 = vunpack.c.l.b16 %v1566
        %v1790 = vunpack.c.h.b16 %v1566
        %v1791 = vunpack.c.l.b16 %v1567
        %v1792 = vunpack.c.h.b16 %v1567
        %v1793 = vunpack.c.l.b16 %v1568
        %v1794 = vunpack.c.h.b16 %v1568
        %v1795 = vunpack.c.l.b16 %v1569
        %v1796 = vunpack.c.h.b16 %v1569
        %v1797 = vunpack.c.l.b16 %v1570
        %v1798 = vunpack.c.h.b16 %v1570
        %v1799 = vunpack.c.l.b16 %v1571
        %v1800 = vunpack.c.h.b16 %v1571
        %v1801 = vunpack.c.l.b16 %v1572
        %v1802 = vunpack.c.h.b16 %v1572
        %v1803 = vunpack.c.l.b16 %v1573
        %v1804 = vunpack.c.h.b16 %v1573
        %v1805 = vunpack.c.l.b16 %v1574
        %v1806 = vunpack.c.h.b16 %v1574
        %v1807 = vunpack.c.l.b16 %v1575
        %v1808 = vunpack.c.h.b16 %v1575
        %v1809 = vunpack.c.l.b16 %v1576
        %v1810 = vunpack.c.h.b16 %v1576
        %v1811 = vunpack.c.l.b16 %v1577
        %v1812 = vunpack.c.h.b16 %v1577
        %v1813 = vunpack.c.l.b16 %v1578
        %v1814 = vunpack.c.h.b16 %v1578
        %v1815 = vunpack.c.l.b16 %v1579
        %v1816 = vunpack.c.h.b16 %v1579
        %v1817 = vunpack.c.l.b16 %v1580
        %v1818 = vunpack.c.h.b16 %v1580
        %v1819 = vunpack.c.l.b16 %v1581
        %v1820 = vunpack.c.h.b16 %v1581
        %v1821 = vunpack.c.l.b16 %v1582
        %v1822 = vunpack.c.h.b16 %v1582
        %v1823 = vunpack.c.l.b16 %v1583
        %v1824 = vunpack.c.h.b16 %v1583
        %v1825 = vunpack.c.l.b16 %v1584
        %v1826 = vunpack.c.h.b16 %v1584
        %v1827 = vunpack.c.l.b16 %v1585
        %v1828 = vunpack.c.h.b16 %v1585
        %v1829 = vunpack.c.l.b16 %v1586
        %v1830 = vunpack.c.h.b16 %v1586
        %v1831 = vunpack.c.l.b16 %v1587
        %v1832 = vunpack.c.h.b16 %v1587
        %v1833 = vunpack.c.l.b16 %v1588
        %v1834 = vunpack.c.h.b16 %v1588
        %v1835 = vunpack.c.l.b16 %v1589
        %v1836 = vunpack.c.h.b16 %v1589
        %v1837 = vunpack.c.l.b16 %v1590
        %v1838 = vunpack.c.h.b16 %v1590
        %v1839 = vunpack.c.l.b16 %v1591
        %v1840 = vunpack.c.h.b16 %v1591
        %v1841 = vunpack.c.l.b16 %v1592
        %v1842 = vunpack.c.h.b16 %v1592
        %v1843 = vunpack.c.l.b16 %v1593
        %v1844 = vunpack.c.h.b16 %v1593
        %v1845 = vunpack.c.l.b16 %v1594
        %v1846 = vunpack.c.h.b16 %v1594
        %v1847 = vunpack.c.l.b16 %v1595
        %v1848 = vunpack.c.h.b16 %v1595
        %v1849 = vunpack.c.l.b16 %v1596
        %v1850 = vunpack.c.h.b16 %v1596
        %v1851 = vunpack.c.l.b16 %v1597
        %v1852 = vunpack.c.h.b16 %v1597
        %v1853 = vunpack.c.l.b16 %v1598
        %v1854 = vunpack.c.h.b16 %v1598
        %v1855 = vunpack.c.l.b16 %v1599
        %v1856 = vunpack.c.h.b16 %v1599
        %v1857 = vunpack.c.l.b16 %v1600
        %v1858 = vunpack.c.h.b16 %v1600
        %v1859 = vunpack.c.l.b16 %v1601
        %v1860 = vunpack.c.h.b16 %v1601
        %v1861 = vpack.c.b16 %v1741, %v1733
        %v1862 = vpack.c.b16 %v1742, %v1734
        %v1863 = vpack.c.b16 %v1743, %v1735
        %v1864 = vpack.c.b16 %v1744, %v1736
        %v1865 = vpack.c.b16 %v1745, %v1737
        %v1866 = vpack.c.b16 %v1746, %v1738
        %v1867 = vpack.c.b16 %v1747, %v1739
        %v1868 = vpack.c.b16 %v1748, %v1740
        %v1869 = vpack.c.b16 %v1757, %v1749
        %v1870 = vpack.c.b16 %v1758, %v1750
        %v1871 = vpack.c.b16 %v1759, %v1751
        %v1872 = vpack.c.b16 %v1760, %v1752
        %v1873 = vpack.c.b16 %v1761, %v1753
        %v1874 = vpack.c.b16 %v1762, %v1754
        %v1875 = vpack.c.b16 %v1763, %v1755
        %v1876 = vpack.c.b16 %v1764, %v1756
        %v1877 = vpack.c.b16 %v1773, %v1765
        %v1878 = vpack.c.b16 %v1774, %v1766
        %v1879 = vpack.c.b16 %v1775, %v1767
        %v1880 = vpack.c.b16 %v1776, %v1768
        %v1881 = vpack.c.b16 %v1777, %v1769
        %v1882 = vpack.c.b16 %v1778, %v1770
        %v1883 = vpack.c.b16 %v1779, %v1771
        %v1884 = vpack.c.b16 %v1780, %v1772
        %v1885 = vpack.c.b16 %v1789, %v1781
        %v1886 = vpack.c.b16 %v1790, %v1782
        %v1887 = vpack.c.b16 %v1791, %v1783
        %v1888 = vpack.c.b16 %v1792, %v1784
        %v1889 = vpack.c.b16 %v1793, %v1785
        %v1890 = vpack.c.b16 %v1794, %v1786
        %v1891 = vpack.c.b16 %v1795, %v1787
        %v1892 = vpack.c.b16 %v1796, %v1788
        %v1893 = vpack.c.b16 %v1805, %v1797
        %v1894 = vpack.c.b16 %v1806, %v1798
        %v1895 = vpack.c.b16 %v1807, %v1799
        %v1896 = vpack.c.b16 %v1808, %v1800
        %v1897 = vpack.c.b16 %v1809, %v1801
        %v1898 = vpack.c.b16 %v1810, %v1802
        %v1899 = vpack.c.b16 %v1811, %v1803
        %v1900 = vpack.c.b16 %v1812, %v1804
        %v1901 = vpack.c.b16 %v1821, %v1813
        %v1902 = vpack.c.b16 %v1822, %v1814
        %v1903 = vpack.c.b16 %v1823, %v1815
        %v1904 = vpack.c.b16 %v1824, %v1816
        %v1905 = vpack.c.b16 %v1825, %v1817
        %v1906 = vpack.c.b16 %v1826, %v1818
        %v1907 = vpack.c.b16 %v1827, %v1819
        %v1908 = vpack.c.b16 %v1828, %v1820
        %v1909 = vpack.c.b16 %v1837, %v1829
        %v1910 = vpack.c.b16 %v1838, %v1830
        %v1911 = vpack.c.b16 %v1839, %v1831
        %v1912 = vpack.c.b16 %v1840, %v1832
        %v1913 = vpack.c.b16 %v1841, %v1833
        %v1914 = vpack.c.b16 %v1842, %v1834
        %v1915 = vpack.c.b16 %v1843, %v1835
        %v1916 = vpack.c.b16 %v1844, %v1836
        %v1917 = vpack.c.b16 %v1853, %v1845
        %v1918 = vpack.c.b16 %v1854, %v1846
        %v1919 = vpack.c.b16 %v1855, %v1847
        %v1920 = vpack.c.b16 %v1856, %v1848
        %v1921 = vpack.c.b16 %v1857, %v1849
        %v1922 = vpack.c.b16 %v1858, %v1850
        %v1923 = vpack.c.b16 %v1859, %v1851
        %v1924 = vpack.c.b16 %v1860, %v1852
        %1989 = vmatprep.subr.bf16.mxu0 %v1862
        %1990 = vmatpush1.bf16.msra.mxu0 %v1861
        %1991 = vmatprep.subr.bf16.mxu0 %v1870
        %1992 = vmatpush1.bf16.msra.mxu0 %v1869
        %1993 = vmatprep.subr.bf16.mxu0 %v1878
        %1994 = vmatpush1.bf16.msra.mxu0 %v1877
        %1995 = vmatprep.subr.bf16.mxu0 %v1886
        %1996 = vmatpush1.bf16.msra.mxu0 %v1885
        %1997 = vmatprep.subr.bf16.mxu0 %v1894
        %1998 = vmatpush1.bf16.msra.mxu0 %v1893
        %1999 = vmatprep.subr.bf16.mxu0 %v1902
        %2000 = vmatpush1.bf16.msra.mxu0 %v1901
        %2001 = vmatprep.subr.bf16.mxu0 %v1910
        %2002 = vmatpush1.bf16.msra.mxu0 %v1909
        %2003 = vmatprep.subr.bf16.mxu0 %v1918
        %2004 = vmatpush1.bf16.msra.mxu0 %v1917
        %2005 = vmatprep.subr.bf16.mxu0 0
        %2006 = vmatpush1.bf16.msra.mxu0 0
        %2007 = vmatprep.subr.bf16.mxu0 0
        %2008 = vmatpush1.bf16.msra.mxu0 0
        %2009 = vmatprep.subr.bf16.mxu0 0
        %2010 = vmatpush1.bf16.msra.mxu0 0
        %2011 = vmatprep.subr.bf16.mxu0 0
        %2012 = vmatpush1.bf16.msra.mxu0 0
        %2013 = vmatprep.subr.bf16.mxu0 0
        %2014 = vmatpush1.bf16.msra.mxu0 0
        %2015 = vmatprep.subr.bf16.mxu0 0
        %2016 = vmatpush1.bf16.msra.mxu0 0
        %2017 = vmatprep.subr.bf16.mxu0 0
        %2018 = vmatpush1.bf16.msra.mxu0 0
        %2019 = vmatprep.subr.bf16.mxu0 0
        %2020 = vmatpush1.bf16.msra.mxu0 0
        %2021 = vmatprep.mubr.bf16.mxu0 0
        %2022 = vmatmul.mubr.bf16.gmra.mrb[0].mxu0 %v1667
        %v2023 = vpop.f32.mrb[0].mxu0
        %v2024 = vadd.f32 %v1626, %v2023
        %v2025 = vpop.f32.mrb[0].mxu0
        %v2026 = vadd.f32 %v1630, %v2025
        %v2027 = vpop.f32.mrb[0].mxu0
        %v2028 = vadd.f32 %v1626, %v2027
        %v2029 = vpop.f32.mrb[0].mxu0
        %v2030 = vadd.f32 %v1630, %v2029
        %2031 = vdwg.mxu0
        %2032 = vmatprep.subr.bf16.mxu0 %v1864
        %2033 = vmatpush1.bf16.msra.mxu0 %v1863
        %2034 = vmatprep.subr.bf16.mxu0 %v1872
        %2035 = vmatpush1.bf16.msra.mxu0 %v1871
        %2036 = vmatprep.subr.bf16.mxu0 %v1880
        %2037 = vmatpush1.bf16.msra.mxu0 %v1879
        %2038 = vmatprep.subr.bf16.mxu0 %v1888
        %2039 = vmatpush1.bf16.msra.mxu0 %v1887
        %2040 = vmatprep.subr.bf16.mxu0 %v1896
        %2041 = vmatpush1.bf16.msra.mxu0 %v1895
        %2042 = vmatprep.subr.bf16.mxu0 %v1904
        %2043 = vmatpush1.bf16.msra.mxu0 %v1903
        %2044 = vmatprep.subr.bf16.mxu0 %v1912
        %2045 = vmatpush1.bf16.msra.mxu0 %v1911
        %2046 = vmatprep.subr.bf16.mxu0 %v1920
        %2047 = vmatpush1.bf16.msra.mxu0 %v1919
        %2048 = vmatprep.subr.bf16.mxu0 0
        %2049 = vmatpush1.bf16.msra.mxu0 0
        %2050 = vmatprep.subr.bf16.mxu0 0
        %2051 = vmatpush1.bf16.msra.mxu0 0
        %2052 = vmatprep.subr.bf16.mxu0 0
        %2053 = vmatpush1.bf16.msra.mxu0 0
        %2054 = vmatprep.subr.bf16.mxu0 0
        %2055 = vmatpush1.bf16.msra.mxu0 0
        %2056 = vmatprep.subr.bf16.mxu0 0
        %2057 = vmatpush1.bf16.msra.mxu0 0
        %2058 = vmatprep.subr.bf16.mxu0 0
        %2059 = vmatpush1.bf16.msra.mxu0 0
        %2060 = vmatprep.subr.bf16.mxu0 0
        %2061 = vmatpush1.bf16.msra.mxu0 0
        %2062 = vmatprep.subr.bf16.mxu0 0
        %2063 = vmatpush1.bf16.msra.mxu0 0
        %2064 = vmatprep.mubr.bf16.mxu0 0
        %2065 = vmatmul.mubr.bf16.gmra.mrb[0].mxu0 %v1667
        %v2066 = vpop.f32.mrb[0].mxu0
        %v2067 = vadd.f32 %v1634, %v2066
        %v2068 = vpop.f32.mrb[0].mxu0
        %v2069 = vadd.f32 %v1638, %v2068
        %v2070 = vpop.f32.mrb[0].mxu0
        %v2071 = vadd.f32 %v1634, %v2070
        %v2072 = vpop.f32.mrb[0].mxu0
        %v2073 = vadd.f32 %v1638, %v2072
        %2074 = vdwg.mxu0
        %2075 = vmatprep.subr.bf16.mxu0 %v1866
        %2076 = vmatpush1.bf16.msra.mxu0 %v1865
        %2077 = vmatprep.subr.bf16.mxu0 %v1874
        %2078 = vmatpush1.bf16.msra.mxu0 %v1873
        %2079 = vmatprep.subr.bf16.mxu0 %v1882
        %2080 = vmatpush1.bf16.msra.mxu0 %v1881
        %2081 = vmatprep.subr.bf16.mxu0 %v1890
        %2082 = vmatpush1.bf16.msra.mxu0 %v1889
        %2083 = vmatprep.subr.bf16.mxu0 %v1898
        %2084 = vmatpush1.bf16.msra.mxu0 %v1897
        %2085 = vmatprep.subr.bf16.mxu0 %v1906
        %2086 = vmatpush1.bf16.msra.mxu0 %v1905
        %2087 = vmatprep.subr.bf16.mxu0 %v1914
        %2088 = vmatpush1.bf16.msra.mxu0 %v1913
        %2089 = vmatprep.subr.bf16.mxu0 %v1922
        %2090 = vmatpush1.bf16.msra.mxu0 %v1921
        %2091 = vmatprep.subr.bf16.mxu0 0
        %2092 = vmatpush1.bf16.msra.mxu0 0
        %2093 = vmatprep.subr.bf16.mxu0 0
        %2094 = vmatpush1.bf16.msra.mxu0 0
        %2095 = vmatprep.subr.bf16.mxu0 0
        %2096 = vmatpush1.bf16.msra.mxu0 0
        %2097 = vmatprep.subr.bf16.mxu0 0
        %2098 = vmatpush1.bf16.msra.mxu0 0
        %2099 = vmatprep.subr.bf16.mxu0 0
        %2100 = vmatpush1.bf16.msra.mxu0 0
        %2101 = vmatprep.subr.bf16.mxu0 0
        %2102 = vmatpush1.bf16.msra.mxu0 0
        %2103 = vmatprep.subr.bf16.mxu0 0
        %2104 = vmatpush1.bf16.msra.mxu0 0
        %2105 = vmatprep.subr.bf16.mxu0 0
        %2106 = vmatpush1.bf16.msra.mxu0 0
        %2107 = vmatprep.mubr.bf16.mxu0 0
        %2108 = vmatmul.mubr.bf16.gmra.mrb[0].mxu0 %v1667
        %v2109 = vpop.f32.mrb[0].mxu0
        %v2110 = vadd.f32 %v1642, %v2109
        %v2111 = vpop.f32.mrb[0].mxu0
        %v2112 = vadd.f32 %v1646, %v2111
        %v2113 = vpop.f32.mrb[0].mxu0
        %v2114 = vadd.f32 %v1642, %v2113
        %v2115 = vpop.f32.mrb[0].mxu0
        %v2116 = vadd.f32 %v1646, %v2115
        %2117 = vdwg.mxu0
        %2118 = vmatprep.subr.bf16.mxu0 %v1868
        %2119 = vmatpush1.bf16.msra.mxu0 %v1867
        %2120 = vmatprep.subr.bf16.mxu0 %v1876
        %2121 = vmatpush1.bf16.msra.mxu0 %v1875
        %2122 = vmatprep.subr.bf16.mxu0 %v1884
        %2123 = vmatpush1.bf16.msra.mxu0 %v1883
        %2124 = vmatprep.subr.bf16.mxu0 %v1892
        %2125 = vmatpush1.bf16.msra.mxu0 %v1891
        %2126 = vmatprep.subr.bf16.mxu0 %v1900
        %2127 = vmatpush1.bf16.msra.mxu0 %v1899
        %2128 = vmatprep.subr.bf16.mxu0 %v1908
        %2129 = vmatpush1.bf16.msra.mxu0 %v1907
        %2130 = vmatprep.subr.bf16.mxu0 %v1916
        %2131 = vmatpush1.bf16.msra.mxu0 %v1915
        %2132 = vmatprep.subr.bf16.mxu0 %v1924
        %2133 = vmatpush1.bf16.msra.mxu0 %v1923
        %2134 = vmatprep.subr.bf16.mxu0 0
        %2135 = vmatpush1.bf16.msra.mxu0 0
        %2136 = vmatprep.subr.bf16.mxu0 0
        %2137 = vmatpush1.bf16.msra.mxu0 0
        %2138 = vmatprep.subr.bf16.mxu0 0
        %2139 = vmatpush1.bf16.msra.mxu0 0
        %2140 = vmatprep.subr.bf16.mxu0 0
        %2141 = vmatpush1.bf16.msra.mxu0 0
        %2142 = vmatprep.subr.bf16.mxu0 0
        %2143 = vmatpush1.bf16.msra.mxu0 0
        %2144 = vmatprep.subr.bf16.mxu0 0
        %2145 = vmatpush1.bf16.msra.mxu0 0
        %2146 = vmatprep.subr.bf16.mxu0 0
        %2147 = vmatpush1.bf16.msra.mxu0 0
        %2148 = vmatprep.subr.bf16.mxu0 0
        %2149 = vmatpush1.bf16.msra.mxu0 0
        %2150 = vmatprep.mubr.bf16.mxu0 0
        %2151 = vmatmul.mubr.bf16.gmra.mrb[0].mxu0 %v1667
        %v2152 = vpop.f32.mrb[0].mxu0
        %v2153 = vadd.f32 %v1650, %v2152
        %v2154 = vpop.f32.mrb[0].mxu0
        %v2155 = vadd.f32 %v1654, %v2154
        %v2156 = vpop.f32.mrb[0].mxu0
        %v2157 = vadd.f32 %v1650, %v2156
        %v2158 = vpop.f32.mrb[0].mxu0
        %v2159 = vadd.f32 %v1654, %v2158
        %2160 = vdwg.mxu0
        %v2161 = vmax.f32 %v1602, %v2024
        %v2162 = vmax.f32 %v1603, %v2026
        %v2163 = vmax.f32 %v1604, %v2067
        %v2164 = vmax.f32 %v1605, %v2069
        %v2165 = vmax.f32 %v1606, %v2110
        %v2166 = vmax.f32 %v1607, %v2112
        %v2167 = vmax.f32 %v1608, %v2153
        %v2168 = vmax.f32 %v1609, %v2155
        %v2169 = vmax.f32 %v1610, %v2028
        %v2170 = vmax.f32 %v1611, %v2030
        %v2171 = vmax.f32 %v1612, %v2071
        %v2172 = vmax.f32 %v1613, %v2073
        %v2173 = vmax.f32 %v1614, %v2114
        %v2174 = vmax.f32 %v1615, %v2116
        %v2175 = vmax.f32 %v1616, %v2157
        %v2176 = vmax.f32 %v1617, %v2159
        %2177 = vst [vmem:[#allocation2] sm:$0xff] %v2161
        %2178 = vst [vmem:[#allocation2 + $0x8] sm:$0xff] %v2162
        %2179 = vst [vmem:[#allocation2 + $0x10] sm:$0xff] %v2163
        %2180 = vst [vmem:[#allocation2 + $0x18] sm:$0xff] %v2164
        %2181 = vst [vmem:[#allocation2 + $0x20] sm:$0xff] %v2165
        %2182 = vst [vmem:[#allocation2 + $0x28] sm:$0xff] %v2166
        %2183 = vst [vmem:[#allocation2 + $0x30] sm:$0xff] %v2167
        %2184 = vst [vmem:[#allocation2 + $0x38] sm:$0xff] %v2168
        %2185 = vst [vmem:[#allocation2 + $0x40] sm:$0xff] %v2169
        %2186 = vst [vmem:[#allocation2 + $0x48] sm:$0xff] %v2170
        %2187 = vst [vmem:[#allocation2 + $0x50] sm:$0xff] %v2171
        %2188 = vst [vmem:[#allocation2 + $0x58] sm:$0xff] %v2172
        %2189 = vst [vmem:[#allocation2 + $0x60] sm:$0xff] %v2173
        %2190 = vst [vmem:[#allocation2 + $0x68] sm:$0xff] %v2174
        %2191 = vst [vmem:[#allocation2 + $0x70] sm:$0xff] %v2175
        %2192 = vst [vmem:[#allocation2 + $0x78] sm:$0xff] %v2176
        %s2193 = scalar_lea.vmem [#allocation3], 88
        %v2194 = vld [vmem:[%s2193] sm:$0xf]
        %v2195 = vld [vmem:[%s2193 + $0x4] sm:$0xf]
        %v2196 = vld [vmem:[%s273] sm:$0xff]
        %v2197 = vld [vmem:[%s273 + $0x8] sm:$0xff]
        %v2198 = vld [vmem:[%s273 + $0x10] sm:$0xff]
        %v2199 = vld [vmem:[%s273 + $0x18] sm:$0xff]
        %v2200 = vld [vmem:[%s273 + $0x20] sm:$0xff]
        %v2201 = vld [vmem:[%s273 + $0x28] sm:$0xff]
        %v2202 = vld [vmem:[%s273 + $0x30] sm:$0xff]
        %v2203 = vld [vmem:[%s273 + $0x38] sm:$0xff]
        %v2204 = vld [vmem:[%s273 + $0x40] sm:$0xff]
        %v2205 = vld [vmem:[%s273 + $0x48] sm:$0xff]
        %v2206 = vld [vmem:[%s273 + $0x50] sm:$0xff]
        %v2207 = vld [vmem:[%s273 + $0x58] sm:$0xff]
        %v2208 = vld [vmem:[%s273 + $0x60] sm:$0xff]
        %v2209 = vld [vmem:[%s273 + $0x68] sm:$0xff]
        %v2210 = vld [vmem:[%s273 + $0x70] sm:$0xff]
        %v2211 = vld [vmem:[%s273 + $0x78] sm:$0xff]
        %v2212 = vld [vmem:[%s273 + $0x80] sm:$0xff]
        %v2213 = vld [vmem:[%s273 + $0x88] sm:$0xff]
        %v2214 = vld [vmem:[%s273 + $0x90] sm:$0xff]
        %v2215 = vld [vmem:[%s273 + $0x98] sm:$0xff]
        %v2216 = vld [vmem:[%s273 + $0xa0] sm:$0xff]
        %v2217 = vld [vmem:[%s273 + $0xa8] sm:$0xff]
        %v2218 = vld [vmem:[%s273 + $0xb0] sm:$0xff]
        %v2219 = vld [vmem:[%s273 + $0xb8] sm:$0xff]
        %v2220 = vld [vmem:[%s273 + $0xc0] sm:$0xff]
        %v2221 = vld [vmem:[%s273 + $0xc8] sm:$0xff]
        %v2222 = vld [vmem:[%s273 + $0xd0] sm:$0xff]
        %v2223 = vld [vmem:[%s273 + $0xd8] sm:$0xff]
        %v2224 = vld [vmem:[%s273 + $0xe0] sm:$0xff]
        %v2225 = vld [vmem:[%s273 + $0xe8] sm:$0xff]
        %v2226 = vld [vmem:[%s273 + $0xf0] sm:$0xff]
        %v2227 = vld [vmem:[%s273 + $0xf8] sm:$0xff]
        %v2228 = vld [vmem:[%s273 + $0x100] sm:$0xff]
        %v2229 = vld [vmem:[%s273 + $0x108] sm:$0xff]
        %v2230 = vld [vmem:[%s273 + $0x110] sm:$0xff]
        %v2231 = vld [vmem:[%s273 + $0x118] sm:$0xff]
        %v2232 = vld [vmem:[%s273 + $0x120] sm:$0xff]
        %v2233 = vld [vmem:[%s273 + $0x128] sm:$0xff]
        %v2234 = vld [vmem:[%s273 + $0x130] sm:$0xff]
        %v2235 = vld [vmem:[%s273 + $0x138] sm:$0xff]
        %v2236 = vld [vmem:[%s273 + $0x140] sm:$0xff]
        %v2237 = vld [vmem:[%s273 + $0x148] sm:$0xff]
        %v2238 = vld [vmem:[%s273 + $0x150] sm:$0xff]
        %v2239 = vld [vmem:[%s273 + $0x158] sm:$0xff]
        %v2240 = vld [vmem:[%s273 + $0x160] sm:$0xff]
        %v2241 = vld [vmem:[%s273 + $0x168] sm:$0xff]
        %v2242 = vld [vmem:[%s273 + $0x170] sm:$0xff]
        %v2243 = vld [vmem:[%s273 + $0x178] sm:$0xff]
        %v2244 = vld [vmem:[%s273 + $0x180] sm:$0xff]
        %v2245 = vld [vmem:[%s273 + $0x188] sm:$0xff]
        %v2246 = vld [vmem:[%s273 + $0x190] sm:$0xff]
        %v2247 = vld [vmem:[%s273 + $0x198] sm:$0xff]
        %v2248 = vld [vmem:[%s273 + $0x1a0] sm:$0xff]
        %v2249 = vld [vmem:[%s273 + $0x1a8] sm:$0xff]
        %v2250 = vld [vmem:[%s273 + $0x1b0] sm:$0xff]
        %v2251 = vld [vmem:[%s273 + $0x1b8] sm:$0xff]
        %v2252 = vld [vmem:[%s273 + $0x1c0] sm:$0xff]
        %v2253 = vld [vmem:[%s273 + $0x1c8] sm:$0xff]
        %v2254 = vld [vmem:[%s273 + $0x1d0] sm:$0xff]
        %v2255 = vld [vmem:[%s273 + $0x1d8] sm:$0xff]
        %v2256 = vld [vmem:[%s273 + $0x1e0] sm:$0xff]
        %v2257 = vld [vmem:[%s273 + $0x1e8] sm:$0xff]
        %v2258 = vld [vmem:[%s273 + $0x1f0] sm:$0xff]
        %v2259 = vld [vmem:[%s273 + $0x1f8] sm:$0xff]
        %v2260 = vld [vmem:[#allocation2] sm:$0xff]
        %v2261 = vld [vmem:[#allocation2 + $0x8] sm:$0xff]
        %v2262 = vld [vmem:[#allocation2 + $0x10] sm:$0xff]
        %v2263 = vld [vmem:[#allocation2 + $0x18] sm:$0xff]
        %v2264 = vld [vmem:[#allocation2 + $0x20] sm:$0xff]
        %v2265 = vld [vmem:[#allocation2 + $0x28] sm:$0xff]
        %v2266 = vld [vmem:[#allocation2 + $0x30] sm:$0xff]
        %v2267 = vld [vmem:[#allocation2 + $0x38] sm:$0xff]
        %v2268 = vld [vmem:[#allocation2 + $0x40] sm:$0xff]
        %v2269 = vld [vmem:[#allocation2 + $0x48] sm:$0xff]
        %v2270 = vld [vmem:[#allocation2 + $0x50] sm:$0xff]
        %v2271 = vld [vmem:[#allocation2 + $0x58] sm:$0xff]
        %v2272 = vld [vmem:[#allocation2 + $0x60] sm:$0xff]
        %v2273 = vld [vmem:[#allocation2 + $0x68] sm:$0xff]
        %v2274 = vld [vmem:[#allocation2 + $0x70] sm:$0xff]
        %v2275 = vld [vmem:[#allocation2 + $0x78] sm:$0xff]
        %s2276 = scalar_lea.vmem %s291, 4 [#allocation9]
        %v2277 = vld [vmem:[%s2276] ss:$8 sm:$0xf]
        %v2278 = vld [vmem:[%s2276] ss:$8 sm:$0xf0]
        %v2279 = vor.u32 %v2277, %v2278
        %v2281 = vlaneseq
        %v2282 = vshrl.u32 %v2281, 7
        %v2283 = vsub.s32 0, %v2282
        %v2284 = vrot.slane %v2279, %v2283
        %v2285 = vlaneseq
        %v2286 = vshrl.u32 %v2285, 7
        %v2287 = vsub.s32 1, %v2286
        %v2288 = vrot.slane %v2279, %v2287
        %v2289 = vlaneseq
        %v2290 = vshrl.u32 %v2289, 7
        %v2291 = vsub.s32 2, %v2290
        %v2292 = vrot.slane %v2279, %v2291
        %v2293 = vlaneseq
        %v2294 = vshrl.u32 %v2293, 7
        %v2295 = vsub.s32 3, %v2294
        %v2296 = vrot.slane %v2279, %v2295
        %v2297 = vlaneseq
        %v2298 = vshrl.u32 %v2297, 7
        %v2299 = vsub.s32 4, %v2298
        %v2300 = vrot.slane %v2279, %v2299
        %v2301 = vlaneseq
        %v2302 = vshrl.u32 %v2301, 7
        %v2303 = vsub.s32 5, %v2302
        %v2304 = vrot.slane %v2279, %v2303
        %v2305 = vlaneseq
        %v2306 = vshrl.u32 %v2305, 7
        %v2307 = vsub.s32 6, %v2306
        %v2308 = vrot.slane %v2279, %v2307
        %v2309 = vlaneseq
        %v2310 = vshrl.u32 %v2309, 7
        %v2311 = vsub.s32 7, %v2310
        %v2312 = vrot.slane %v2279, %v2311
        %v2323 = vunpack.c.l.b16 %v2194
        %v2324 = vunpack.c.l.b16 %v2195
        %v2325 = vpack.c.b16 %v2324, %v2323
        %v2391 = vunpack.c.l.b16 %v2196
        %v2392 = vunpack.c.h.b16 %v2196
        %v2393 = vunpack.c.l.b16 %v2197
        %v2394 = vunpack.c.h.b16 %v2197
        %v2395 = vunpack.c.l.b16 %v2198
        %v2396 = vunpack.c.h.b16 %v2198
        %v2397 = vunpack.c.l.b16 %v2199
        %v2398 = vunpack.c.h.b16 %v2199
        %v2399 = vunpack.c.l.b16 %v2200
        %v2400 = vunpack.c.h.b16 %v2200
        %v2401 = vunpack.c.l.b16 %v2201
        %v2402 = vunpack.c.h.b16 %v2201
        %v2403 = vunpack.c.l.b16 %v2202
        %v2404 = vunpack.c.h.b16 %v2202
        %v2405 = vunpack.c.l.b16 %v2203
        %v2406 = vunpack.c.h.b16 %v2203
        %v2407 = vunpack.c.l.b16 %v2204
        %v2408 = vunpack.c.h.b16 %v2204
        %v2409 = vunpack.c.l.b16 %v2205
        %v2410 = vunpack.c.h.b16 %v2205
        %v2411 = vunpack.c.l.b16 %v2206
        %v2412 = vunpack.c.h.b16 %v2206
        %v2413 = vunpack.c.l.b16 %v2207
        %v2414 = vunpack.c.h.b16 %v2207
        %v2415 = vunpack.c.l.b16 %v2208
        %v2416 = vunpack.c.h.b16 %v2208
        %v2417 = vunpack.c.l.b16 %v2209
        %v2418 = vunpack.c.h.b16 %v2209
        %v2419 = vunpack.c.l.b16 %v2210
        %v2420 = vunpack.c.h.b16 %v2210
        %v2421 = vunpack.c.l.b16 %v2211
        %v2422 = vunpack.c.h.b16 %v2211
        %v2423 = vunpack.c.l.b16 %v2212
        %v2424 = vunpack.c.h.b16 %v2212
        %v2425 = vunpack.c.l.b16 %v2213
        %v2426 = vunpack.c.h.b16 %v2213
        %v2427 = vunpack.c.l.b16 %v2214
        %v2428 = vunpack.c.h.b16 %v2214
        %v2429 = vunpack.c.l.b16 %v2215
        %v2430 = vunpack.c.h.b16 %v2215
        %v2431 = vunpack.c.l.b16 %v2216
        %v2432 = vunpack.c.h.b16 %v2216
        %v2433 = vunpack.c.l.b16 %v2217
        %v2434 = vunpack.c.h.b16 %v2217
        %v2435 = vunpack.c.l.b16 %v2218
        %v2436 = vunpack.c.h.b16 %v2218
        %v2437 = vunpack.c.l.b16 %v2219
        %v2438 = vunpack.c.h.b16 %v2219
        %v2439 = vunpack.c.l.b16 %v2220
        %v2440 = vunpack.c.h.b16 %v2220
        %v2441 = vunpack.c.l.b16 %v2221
        %v2442 = vunpack.c.h.b16 %v2221
        %v2443 = vunpack.c.l.b16 %v2222
        %v2444 = vunpack.c.h.b16 %v2222
        %v2445 = vunpack.c.l.b16 %v2223
        %v2446 = vunpack.c.h.b16 %v2223
        %v2447 = vunpack.c.l.b16 %v2224
        %v2448 = vunpack.c.h.b16 %v2224
        %v2449 = vunpack.c.l.b16 %v2225
        %v2450 = vunpack.c.h.b16 %v2225
        %v2451 = vunpack.c.l.b16 %v2226
        %v2452 = vunpack.c.h.b16 %v2226
        %v2453 = vunpack.c.l.b16 %v2227
        %v2454 = vunpack.c.h.b16 %v2227
        %v2455 = vunpack.c.l.b16 %v2228
        %v2456 = vunpack.c.h.b16 %v2228
        %v2457 = vunpack.c.l.b16 %v2229
        %v2458 = vunpack.c.h.b16 %v2229
        %v2459 = vunpack.c.l.b16 %v2230
        %v2460 = vunpack.c.h.b16 %v2230
        %v2461 = vunpack.c.l.b16 %v2231
        %v2462 = vunpack.c.h.b16 %v2231
        %v2463 = vunpack.c.l.b16 %v2232
        %v2464 = vunpack.c.h.b16 %v2232
        %v2465 = vunpack.c.l.b16 %v2233
        %v2466 = vunpack.c.h.b16 %v2233
        %v2467 = vunpack.c.l.b16 %v2234
        %v2468 = vunpack.c.h.b16 %v2234
        %v2469 = vunpack.c.l.b16 %v2235
        %v2470 = vunpack.c.h.b16 %v2235
        %v2471 = vunpack.c.l.b16 %v2236
        %v2472 = vunpack.c.h.b16 %v2236
        %v2473 = vunpack.c.l.b16 %v2237
        %v2474 = vunpack.c.h.b16 %v2237
        %v2475 = vunpack.c.l.b16 %v2238
        %v2476 = vunpack.c.h.b16 %v2238
        %v2477 = vunpack.c.l.b16 %v2239
        %v2478 = vunpack.c.h.b16 %v2239
        %v2479 = vunpack.c.l.b16 %v2240
        %v2480 = vunpack.c.h.b16 %v2240
        %v2481 = vunpack.c.l.b16 %v2241
        %v2482 = vunpack.c.h.b16 %v2241
        %v2483 = vunpack.c.l.b16 %v2242
        %v2484 = vunpack.c.h.b16 %v2242
        %v2485 = vunpack.c.l.b16 %v2243
        %v2486 = vunpack.c.h.b16 %v2243
        %v2487 = vunpack.c.l.b16 %v2244
        %v2488 = vunpack.c.h.b16 %v2244
        %v2489 = vunpack.c.l.b16 %v2245
        %v2490 = vunpack.c.h.b16 %v2245
        %v2491 = vunpack.c.l.b16 %v2246
        %v2492 = vunpack.c.h.b16 %v2246
        %v2493 = vunpack.c.l.b16 %v2247
        %v2494 = vunpack.c.h.b16 %v2247
        %v2495 = vunpack.c.l.b16 %v2248
        %v2496 = vunpack.c.h.b16 %v2248
        %v2497 = vunpack.c.l.b16 %v2249
        %v2498 = vunpack.c.h.b16 %v2249
        %v2499 = vunpack.c.l.b16 %v2250
        %v2500 = vunpack.c.h.b16 %v2250
        %v2501 = vunpack.c.l.b16 %v2251
        %v2502 = vunpack.c.h.b16 %v2251
        %v2503 = vunpack.c.l.b16 %v2252
        %v2504 = vunpack.c.h.b16 %v2252
        %v2505 = vunpack.c.l.b16 %v2253
        %v2506 = vunpack.c.h.b16 %v2253
        %v2507 = vunpack.c.l.b16 %v2254
        %v2508 = vunpack.c.h.b16 %v2254
        %v2509 = vunpack.c.l.b16 %v2255
        %v2510 = vunpack.c.h.b16 %v2255
        %v2511 = vunpack.c.l.b16 %v2256
        %v2512 = vunpack.c.h.b16 %v2256
        %v2513 = vunpack.c.l.b16 %v2257
        %v2514 = vunpack.c.h.b16 %v2257
        %v2515 = vunpack.c.l.b16 %v2258
        %v2516 = vunpack.c.h.b16 %v2258
        %v2517 = vunpack.c.l.b16 %v2259
        %v2518 = vunpack.c.h.b16 %v2259
        %v2519 = vpack.c.b16 %v2399, %v2391
        %v2520 = vpack.c.b16 %v2400, %v2392
        %v2521 = vpack.c.b16 %v2401, %v2393
        %v2522 = vpack.c.b16 %v2402, %v2394
        %v2523 = vpack.c.b16 %v2403, %v2395
        %v2524 = vpack.c.b16 %v2404, %v2396
        %v2525 = vpack.c.b16 %v2405, %v2397
        %v2526 = vpack.c.b16 %v2406, %v2398
        %v2527 = vpack.c.b16 %v2415, %v2407
        %v2528 = vpack.c.b16 %v2416, %v2408
        %v2529 = vpack.c.b16 %v2417, %v2409
        %v2530 = vpack.c.b16 %v2418, %v2410
        %v2531 = vpack.c.b16 %v2419, %v2411
        %v2532 = vpack.c.b16 %v2420, %v2412
        %v2533 = vpack.c.b16 %v2421, %v2413
        %v2534 = vpack.c.b16 %v2422, %v2414
        %v2535 = vpack.c.b16 %v2431, %v2423
        %v2536 = vpack.c.b16 %v2432, %v2424
        %v2537 = vpack.c.b16 %v2433, %v2425
        %v2538 = vpack.c.b16 %v2434, %v2426
        %v2539 = vpack.c.b16 %v2435, %v2427
        %v2540 = vpack.c.b16 %v2436, %v2428
        %v2541 = vpack.c.b16 %v2437, %v2429
        %v2542 = vpack.c.b16 %v2438, %v2430
        %v2543 = vpack.c.b16 %v2447, %v2439
        %v2544 = vpack.c.b16 %v2448, %v2440
        %v2545 = vpack.c.b16 %v2449, %v2441
        %v2546 = vpack.c.b16 %v2450, %v2442
        %v2547 = vpack.c.b16 %v2451, %v2443
        %v2548 = vpack.c.b16 %v2452, %v2444
        %v2549 = vpack.c.b16 %v2453, %v2445
        %v2550 = vpack.c.b16 %v2454, %v2446
        %v2551 = vpack.c.b16 %v2463, %v2455
        %v2552 = vpack.c.b16 %v2464, %v2456
        %v2553 = vpack.c.b16 %v2465, %v2457
        %v2554 = vpack.c.b16 %v2466, %v2458
        %v2555 = vpack.c.b16 %v2467, %v2459
        %v2556 = vpack.c.b16 %v2468, %v2460
        %v2557 = vpack.c.b16 %v2469, %v2461
        %v2558 = vpack.c.b16 %v2470, %v2462
        %v2559 = vpack.c.b16 %v2479, %v2471
        %v2560 = vpack.c.b16 %v2480, %v2472
        %v2561 = vpack.c.b16 %v2481, %v2473
        %v2562 = vpack.c.b16 %v2482, %v2474
        %v2563 = vpack.c.b16 %v2483, %v2475
        %v2564 = vpack.c.b16 %v2484, %v2476
        %v2565 = vpack.c.b16 %v2485, %v2477
        %v2566 = vpack.c.b16 %v2486, %v2478
        %v2567 = vpack.c.b16 %v2495, %v2487
        %v2568 = vpack.c.b16 %v2496, %v2488
        %v2569 = vpack.c.b16 %v2497, %v2489
        %v2570 = vpack.c.b16 %v2498, %v2490
        %v2571 = vpack.c.b16 %v2499, %v2491
        %v2572 = vpack.c.b16 %v2500, %v2492
        %v2573 = vpack.c.b16 %v2501, %v2493
        %v2574 = vpack.c.b16 %v2502, %v2494
        %v2575 = vpack.c.b16 %v2511, %v2503
        %v2576 = vpack.c.b16 %v2512, %v2504
        %v2577 = vpack.c.b16 %v2513, %v2505
        %v2578 = vpack.c.b16 %v2514, %v2506
        %v2579 = vpack.c.b16 %v2515, %v2507
        %v2580 = vpack.c.b16 %v2516, %v2508
        %v2581 = vpack.c.b16 %v2517, %v2509
        %v2582 = vpack.c.b16 %v2518, %v2510
        %2647 = vmatprep.subr.bf16.mxu0 %v2520
        %2648 = vmatpush1.bf16.msra.mxu0 %v2519
        %2649 = vmatprep.subr.bf16.mxu0 %v2528
        %2650 = vmatpush1.bf16.msra.mxu0 %v2527
        %2651 = vmatprep.subr.bf16.mxu0 %v2536
        %2652 = vmatpush1.bf16.msra.mxu0 %v2535
        %2653 = vmatprep.subr.bf16.mxu0 %v2544
        %2654 = vmatpush1.bf16.msra.mxu0 %v2543
        %2655 = vmatprep.subr.bf16.mxu0 %v2552
        %2656 = vmatpush1.bf16.msra.mxu0 %v2551
        %2657 = vmatprep.subr.bf16.mxu0 %v2560
        %2658 = vmatpush1.bf16.msra.mxu0 %v2559
        %2659 = vmatprep.subr.bf16.mxu0 %v2568
        %2660 = vmatpush1.bf16.msra.mxu0 %v2567
        %2661 = vmatprep.subr.bf16.mxu0 %v2576
        %2662 = vmatpush1.bf16.msra.mxu0 %v2575
        %2663 = vmatprep.subr.bf16.mxu0 0
        %2664 = vmatpush1.bf16.msra.mxu0 0
        %2665 = vmatprep.subr.bf16.mxu0 0
        %2666 = vmatpush1.bf16.msra.mxu0 0
        %2667 = vmatprep.subr.bf16.mxu0 0
        %2668 = vmatpush1.bf16.msra.mxu0 0
        %2669 = vmatprep.subr.bf16.mxu0 0
        %2670 = vmatpush1.bf16.msra.mxu0 0
        %2671 = vmatprep.subr.bf16.mxu0 0
        %2672 = vmatpush1.bf16.msra.mxu0 0
        %2673 = vmatprep.subr.bf16.mxu0 0
        %2674 = vmatpush1.bf16.msra.mxu0 0
        %2675 = vmatprep.subr.bf16.mxu0 0
        %2676 = vmatpush1.bf16.msra.mxu0 0
        %2677 = vmatprep.subr.bf16.mxu0 0
        %2678 = vmatpush1.bf16.msra.mxu0 0
        %2679 = vmatprep.mubr.bf16.mxu0 0
        %2680 = vmatmul.mubr.bf16.gmra.mrb[0].mxu0 %v2325
        %v2681 = vpop.f32.mrb[0].mxu0
        %v2682 = vadd.f32 %v2284, %v2681
        %v2683 = vpop.f32.mrb[0].mxu0
        %v2684 = vadd.f32 %v2288, %v2683
        %v2685 = vpop.f32.mrb[0].mxu0
        %v2686 = vadd.f32 %v2284, %v2685
        %v2687 = vpop.f32.mrb[0].mxu0
        %v2688 = vadd.f32 %v2288, %v2687
        %2689 = vdwg.mxu0
        %2690 = vmatprep.subr.bf16.mxu0 %v2522
        %2691 = vmatpush1.bf16.msra.mxu0 %v2521
        %2692 = vmatprep.subr.bf16.mxu0 %v2530
        %2693 = vmatpush1.bf16.msra.mxu0 %v2529
        %2694 = vmatprep.subr.bf16.mxu0 %v2538
        %2695 = vmatpush1.bf16.msra.mxu0 %v2537
        %2696 = vmatprep.subr.bf16.mxu0 %v2546
        %2697 = vmatpush1.bf16.msra.mxu0 %v2545
        %2698 = vmatprep.subr.bf16.mxu0 %v2554
        %2699 = vmatpush1.bf16.msra.mxu0 %v2553
        %2700 = vmatprep.subr.bf16.mxu0 %v2562
        %2701 = vmatpush1.bf16.msra.mxu0 %v2561
        %2702 = vmatprep.subr.bf16.mxu0 %v2570
        %2703 = vmatpush1.bf16.msra.mxu0 %v2569
        %2704 = vmatprep.subr.bf16.mxu0 %v2578
        %2705 = vmatpush1.bf16.msra.mxu0 %v2577
        %2706 = vmatprep.subr.bf16.mxu0 0
        %2707 = vmatpush1.bf16.msra.mxu0 0
        %2708 = vmatprep.subr.bf16.mxu0 0
        %2709 = vmatpush1.bf16.msra.mxu0 0
        %2710 = vmatprep.subr.bf16.mxu0 0
        %2711 = vmatpush1.bf16.msra.mxu0 0
        %2712 = vmatprep.subr.bf16.mxu0 0
        %2713 = vmatpush1.bf16.msra.mxu0 0
        %2714 = vmatprep.subr.bf16.mxu0 0
        %2715 = vmatpush1.bf16.msra.mxu0 0
        %2716 = vmatprep.subr.bf16.mxu0 0
        %2717 = vmatpush1.bf16.msra.mxu0 0
        %2718 = vmatprep.subr.bf16.mxu0 0
        %2719 = vmatpush1.bf16.msra.mxu0 0
        %2720 = vmatprep.subr.bf16.mxu0 0
        %2721 = vmatpush1.bf16.msra.mxu0 0
        %2722 = vmatprep.mubr.bf16.mxu0 0
        %2723 = vmatmul.mubr.bf16.gmra.mrb[0].mxu0 %v2325
        %v2724 = vpop.f32.mrb[0].mxu0
        %v2725 = vadd.f32 %v2292, %v2724
        %v2726 = vpop.f32.mrb[0].mxu0
        %v2727 = vadd.f32 %v2296, %v2726
        %v2728 = vpop.f32.mrb[0].mxu0
        %v2729 = vadd.f32 %v2292, %v2728
        %v2730 = vpop.f32.mrb[0].mxu0
        %v2731 = vadd.f32 %v2296, %v2730
        %2732 = vdwg.mxu0
        %2733 = vmatprep.subr.bf16.mxu0 %v2524
        %2734 = vmatpush1.bf16.msra.mxu0 %v2523
        %2735 = vmatprep.subr.bf16.mxu0 %v2532
        %2736 = vmatpush1.bf16.msra.mxu0 %v2531
        %2737 = vmatprep.subr.bf16.mxu0 %v2540
        %2738 = vmatpush1.bf16.msra.mxu0 %v2539
        %2739 = vmatprep.subr.bf16.mxu0 %v2548
        %2740 = vmatpush1.bf16.msra.mxu0 %v2547
        %2741 = vmatprep.subr.bf16.mxu0 %v2556
        %2742 = vmatpush1.bf16.msra.mxu0 %v2555
        %2743 = vmatprep.subr.bf16.mxu0 %v2564
        %2744 = vmatpush1.bf16.msra.mxu0 %v2563
        %2745 = vmatprep.subr.bf16.mxu0 %v2572
        %2746 = vmatpush1.bf16.msra.mxu0 %v2571
        %2747 = vmatprep.subr.bf16.mxu0 %v2580
        %2748 = vmatpush1.bf16.msra.mxu0 %v2579
        %2749 = vmatprep.subr.bf16.mxu0 0
        %2750 = vmatpush1.bf16.msra.mxu0 0
        %2751 = vmatprep.subr.bf16.mxu0 0
        %2752 = vmatpush1.bf16.msra.mxu0 0
        %2753 = vmatprep.subr.bf16.mxu0 0
        %2754 = vmatpush1.bf16.msra.mxu0 0
        %2755 = vmatprep.subr.bf16.mxu0 0
        %2756 = vmatpush1.bf16.msra.mxu0 0
        %2757 = vmatprep.subr.bf16.mxu0 0
        %2758 = vmatpush1.bf16.msra.mxu0 0
        %2759 = vmatprep.subr.bf16.mxu0 0
        %2760 = vmatpush1.bf16.msra.mxu0 0
        %2761 = vmatprep.subr.bf16.mxu0 0
        %2762 = vmatpush1.bf16.msra.mxu0 0
        %2763 = vmatprep.subr.bf16.mxu0 0
        %2764 = vmatpush1.bf16.msra.mxu0 0
        %2765 = vmatprep.mubr.bf16.mxu0 0
        %2766 = vmatmul.mubr.bf16.gmra.mrb[0].mxu0 %v2325
        %v2767 = vpop.f32.mrb[0].mxu0
        %v2768 = vadd.f32 %v2300, %v2767
        %v2769 = vpop.f32.mrb[0].mxu0
        %v2770 = vadd.f32 %v2304, %v2769
        %v2771 = vpop.f32.mrb[0].mxu0
        %v2772 = vadd.f32 %v2300, %v2771
        %v2773 = vpop.f32.mrb[0].mxu0
        %v2774 = vadd.f32 %v2304, %v2773
        %2775 = vdwg.mxu0
        %2776 = vmatprep.subr.bf16.mxu0 %v2526
        %2777 = vmatpush1.bf16.msra.mxu0 %v2525
        %2778 = vmatprep.subr.bf16.mxu0 %v2534
        %2779 = vmatpush1.bf16.msra.mxu0 %v2533
        %2780 = vmatprep.subr.bf16.mxu0 %v2542
        %2781 = vmatpush1.bf16.msra.mxu0 %v2541
        %2782 = vmatprep.subr.bf16.mxu0 %v2550
        %2783 = vmatpush1.bf16.msra.mxu0 %v2549
        %2784 = vmatprep.subr.bf16.mxu0 %v2558
        %2785 = vmatpush1.bf16.msra.mxu0 %v2557
        %2786 = vmatprep.subr.bf16.mxu0 %v2566
        %2787 = vmatpush1.bf16.msra.mxu0 %v2565
        %2788 = vmatprep.subr.bf16.mxu0 %v2574
        %2789 = vmatpush1.bf16.msra.mxu0 %v2573
        %2790 = vmatprep.subr.bf16.mxu0 %v2582
        %2791 = vmatpush1.bf16.msra.mxu0 %v2581
        %2792 = vmatprep.subr.bf16.mxu0 0
        %2793 = vmatpush1.bf16.msra.mxu0 0
        %2794 = vmatprep.subr.bf16.mxu0 0
        %2795 = vmatpush1.bf16.msra.mxu0 0
        %2796 = vmatprep.subr.bf16.mxu0 0
        %2797 = vmatpush1.bf16.msra.mxu0 0
        %2798 = vmatprep.subr.bf16.mxu0 0
        %2799 = vmatpush1.bf16.msra.mxu0 0
        %2800 = vmatprep.subr.bf16.mxu0 0
        %2801 = vmatpush1.bf16.msra.mxu0 0
        %2802 = vmatprep.subr.bf16.mxu0 0
        %2803 = vmatpush1.bf16.msra.mxu0 0
        %2804 = vmatprep.subr.bf16.mxu0 0
        %2805 = vmatpush1.bf16.msra.mxu0 0
        %2806 = vmatprep.subr.bf16.mxu0 0
        %2807 = vmatpush1.bf16.msra.mxu0 0
        %2808 = vmatprep.mubr.bf16.mxu0 0
        %2809 = vmatmul.mubr.bf16.gmra.mrb[0].mxu0 %v2325
        %v2810 = vpop.f32.mrb[0].mxu0
        %v2811 = vadd.f32 %v2308, %v2810
        %v2812 = vpop.f32.mrb[0].mxu0
        %v2813 = vadd.f32 %v2312, %v2812
        %v2814 = vpop.f32.mrb[0].mxu0
        %v2815 = vadd.f32 %v2308, %v2814
        %v2816 = vpop.f32.mrb[0].mxu0
        %v2817 = vadd.f32 %v2312, %v2816
        %2818 = vdwg.mxu0
        %v2819 = vmax.f32 %v2260, %v2682
        %v2820 = vmax.f32 %v2261, %v2684
        %v2821 = vmax.f32 %v2262, %v2725
        %v2822 = vmax.f32 %v2263, %v2727
        %v2823 = vmax.f32 %v2264, %v2768
        %v2824 = vmax.f32 %v2265, %v2770
        %v2825 = vmax.f32 %v2266, %v2811
        %v2826 = vmax.f32 %v2267, %v2813
        %v2827 = vmax.f32 %v2268, %v2686
        %v2828 = vmax.f32 %v2269, %v2688
        %v2829 = vmax.f32 %v2270, %v2729
        %v2830 = vmax.f32 %v2271, %v2731
        %v2831 = vmax.f32 %v2272, %v2772
        %v2832 = vmax.f32 %v2273, %v2774
        %v2833 = vmax.f32 %v2274, %v2815
        %v2834 = vmax.f32 %v2275, %v2817
        %2835 = vst [vmem:[#allocation2] sm:$0xff] %v2819
        %2836 = vst [vmem:[#allocation2 + $0x8] sm:$0xff] %v2820
        %2837 = vst [vmem:[#allocation2 + $0x10] sm:$0xff] %v2821
        %2838 = vst [vmem:[#allocation2 + $0x18] sm:$0xff] %v2822
        %2839 = vst [vmem:[#allocation2 + $0x20] sm:$0xff] %v2823
        %2840 = vst [vmem:[#allocation2 + $0x28] sm:$0xff] %v2824
        %2841 = vst [vmem:[#allocation2 + $0x30] sm:$0xff] %v2825
        %2842 = vst [vmem:[#allocation2 + $0x38] sm:$0xff] %v2826
        %2843 = vst [vmem:[#allocation2 + $0x40] sm:$0xff] %v2827
        %2844 = vst [vmem:[#allocation2 + $0x48] sm:$0xff] %v2828
        %2845 = vst [vmem:[#allocation2 + $0x50] sm:$0xff] %v2829
        %2846 = vst [vmem:[#allocation2 + $0x58] sm:$0xff] %v2830
        %2847 = vst [vmem:[#allocation2 + $0x60] sm:$0xff] %v2831
        %2848 = vst [vmem:[#allocation2 + $0x68] sm:$0xff] %v2832
        %2849 = vst [vmem:[#allocation2 + $0x70] sm:$0xff] %v2833
        %2850 = vst [vmem:[#allocation2 + $0x78] sm:$0xff] %v2834
        %s2851 = scalar_lea.vmem [#allocation3], 96
        %v2852 = vld [vmem:[%s2851] sm:$0xf]
        %v2853 = vld [vmem:[%s2851 + $0x4] sm:$0xf]
        %v2854 = vld [vmem:[%s273] sm:$0xff]
        %v2855 = vld [vmem:[%s273 + $0x8] sm:$0xff]
        %v2856 = vld [vmem:[%s273 + $0x10] sm:$0xff]
        %v2857 = vld [vmem:[%s273 + $0x18] sm:$0xff]
        %v2858 = vld [vmem:[%s273 + $0x20] sm:$0xff]
        %v2859 = vld [vmem:[%s273 + $0x28] sm:$0xff]
        %v2860 = vld [vmem:[%s273 + $0x30] sm:$0xff]
        %v2861 = vld [vmem:[%s273 + $0x38] sm:$0xff]
        %v2862 = vld [vmem:[%s273 + $0x40] sm:$0xff]
        %v2863 = vld [vmem:[%s273 + $0x48] sm:$0xff]
        %v2864 = vld [vmem:[%s273 + $0x50] sm:$0xff]
        %v2865 = vld [vmem:[%s273 + $0x58] sm:$0xff]
        %v2866 = vld [vmem:[%s273 + $0x60] sm:$0xff]
        %v2867 = vld [vmem:[%s273 + $0x68] sm:$0xff]
        %v2868 = vld [vmem:[%s273 + $0x70] sm:$0xff]
        %v2869 = vld [vmem:[%s273 + $0x78] sm:$0xff]
        %v2870 = vld [vmem:[%s273 + $0x80] sm:$0xff]
        %v2871 = vld [vmem:[%s273 + $0x88] sm:$0xff]
        %v2872 = vld [vmem:[%s273 + $0x90] sm:$0xff]
        %v2873 = vld [vmem:[%s273 + $0x98] sm:$0xff]
        %v2874 = vld [vmem:[%s273 + $0xa0] sm:$0xff]
        %v2875 = vld [vmem:[%s273 + $0xa8] sm:$0xff]
        %v2876 = vld [vmem:[%s273 + $0xb0] sm:$0xff]
        %v2877 = vld [vmem:[%s273 + $0xb8] sm:$0xff]
        %v2878 = vld [vmem:[%s273 + $0xc0] sm:$0xff]
        %v2879 = vld [vmem:[%s273 + $0xc8] sm:$0xff]
        %v2880 = vld [vmem:[%s273 + $0xd0] sm:$0xff]
        %v2881 = vld [vmem:[%s273 + $0xd8] sm:$0xff]
        %v2882 = vld [vmem:[%s273 + $0xe0] sm:$0xff]
        %v2883 = vld [vmem:[%s273 + $0xe8] sm:$0xff]
        %v2884 = vld [vmem:[%s273 + $0xf0] sm:$0xff]
        %v2885 = vld [vmem:[%s273 + $0xf8] sm:$0xff]
        %v2886 = vld [vmem:[%s273 + $0x100] sm:$0xff]
        %v2887 = vld [vmem:[%s273 + $0x108] sm:$0xff]
        %v2888 = vld [vmem:[%s273 + $0x110] sm:$0xff]
        %v2889 = vld [vmem:[%s273 + $0x118] sm:$0xff]
        %v2890 = vld [vmem:[%s273 + $0x120] sm:$0xff]
        %v2891 = vld [vmem:[%s273 + $0x128] sm:$0xff]
        %v2892 = vld [vmem:[%s273 + $0x130] sm:$0xff]
        %v2893 = vld [vmem:[%s273 + $0x138] sm:$0xff]
        %v2894 = vld [vmem:[%s273 + $0x140] sm:$0xff]
        %v2895 = vld [vmem:[%s273 + $0x148] sm:$0xff]
        %v2896 = vld [vmem:[%s273 + $0x150] sm:$0xff]
        %v2897 = vld [vmem:[%s273 + $0x158] sm:$0xff]
        %v2898 = vld [vmem:[%s273 + $0x160] sm:$0xff]
        %v2899 = vld [vmem:[%s273 + $0x168] sm:$0xff]
        %v2900 = vld [vmem:[%s273 + $0x170] sm:$0xff]
        %v2901 = vld [vmem:[%s273 + $0x178] sm:$0xff]
        %v2902 = vld [vmem:[%s273 + $0x180] sm:$0xff]
        %v2903 = vld [vmem:[%s273 + $0x188] sm:$0xff]
        %v2904 = vld [vmem:[%s273 + $0x190] sm:$0xff]
        %v2905 = vld [vmem:[%s273 + $0x198] sm:$0xff]
        %v2906 = vld [vmem:[%s273 + $0x1a0] sm:$0xff]
        %v2907 = vld [vmem:[%s273 + $0x1a8] sm:$0xff]
        %v2908 = vld [vmem:[%s273 + $0x1b0] sm:$0xff]
        %v2909 = vld [vmem:[%s273 + $0x1b8] sm:$0xff]
        %v2910 = vld [vmem:[%s273 + $0x1c0] sm:$0xff]
        %v2911 = vld [vmem:[%s273 + $0x1c8] sm:$0xff]
        %v2912 = vld [vmem:[%s273 + $0x1d0] sm:$0xff]
        %v2913 = vld [vmem:[%s273 + $0x1d8] sm:$0xff]
        %v2914 = vld [vmem:[%s273 + $0x1e0] sm:$0xff]
        %v2915 = vld [vmem:[%s273 + $0x1e8] sm:$0xff]
        %v2916 = vld [vmem:[%s273 + $0x1f0] sm:$0xff]
        %v2917 = vld [vmem:[%s273 + $0x1f8] sm:$0xff]
        %v2918 = vld [vmem:[#allocation2] sm:$0xff]
        %v2919 = vld [vmem:[#allocation2 + $0x8] sm:$0xff]
        %v2920 = vld [vmem:[#allocation2 + $0x10] sm:$0xff]
        %v2921 = vld [vmem:[#allocation2 + $0x18] sm:$0xff]
        %v2922 = vld [vmem:[#allocation2 + $0x20] sm:$0xff]
        %v2923 = vld [vmem:[#allocation2 + $0x28] sm:$0xff]
        %v2924 = vld [vmem:[#allocation2 + $0x30] sm:$0xff]
        %v2925 = vld [vmem:[#allocation2 + $0x38] sm:$0xff]
        %v2926 = vld [vmem:[#allocation2 + $0x40] sm:$0xff]
        %v2927 = vld [vmem:[#allocation2 + $0x48] sm:$0xff]
        %v2928 = vld [vmem:[#allocation2 + $0x50] sm:$0xff]
        %v2929 = vld [vmem:[#allocation2 + $0x58] sm:$0xff]
        %v2930 = vld [vmem:[#allocation2 + $0x60] sm:$0xff]
        %v2931 = vld [vmem:[#allocation2 + $0x68] sm:$0xff]
        %v2932 = vld [vmem:[#allocation2 + $0x70] sm:$0xff]
        %v2933 = vld [vmem:[#allocation2 + $0x78] sm:$0xff]
        %s2934 = scalar_lea.vmem %s291, 3 [#allocation9]
        %v2935 = vld [vmem:[%s2934] ss:$8 sm:$0xf]
        %v2936 = vld [vmem:[%s2934] ss:$8 sm:$0xf0]
        %v2937 = vor.u32 %v2935, %v2936
        %v2939 = vlaneseq
        %v2940 = vshrl.u32 %v2939, 7
        %v2941 = vsub.s32 0, %v2940
        %v2942 = vrot.slane %v2937, %v2941
        %v2943 = vlaneseq
        %v2944 = vshrl.u32 %v2943, 7
        %v2945 = vsub.s32 1, %v2944
        %v2946 = vrot.slane %v2937, %v2945
        %v2947 = vlaneseq
        %v2948 = vshrl.u32 %v2947, 7
        %v2949 = vsub.s32 2, %v2948
        %v2950 = vrot.slane %v2937, %v2949
        %v2951 = vlaneseq
        %v2952 = vshrl.u32 %v2951, 7
        %v2953 = vsub.s32 3, %v2952
        %v2954 = vrot.slane %v2937, %v2953
        %v2955 = vlaneseq
        %v2956 = vshrl.u32 %v2955, 7
        %v2957 = vsub.s32 4, %v2956
        %v2958 = vrot.slane %v2937, %v2957
        %v2959 = vlaneseq
        %v2960 = vshrl.u32 %v2959, 7
        %v2961 = vsub.s32 5, %v2960
        %v2962 = vrot.slane %v2937, %v2961
        %v2963 = vlaneseq
        %v2964 = vshrl.u32 %v2963, 7
        %v2965 = vsub.s32 6, %v2964
        %v2966 = vrot.slane %v2937, %v2965
        %v2967 = vlaneseq
        %v2968 = vshrl.u32 %v2967, 7
        %v2969 = vsub.s32 7, %v2968
        %v2970 = vrot.slane %v2937, %v2969
        %v2981 = vunpack.c.l.b16 %v2852
        %v2982 = vunpack.c.l.b16 %v2853
        %v2983 = vpack.c.b16 %v2982, %v2981
        %v3049 = vunpack.c.l.b16 %v2854
        %v3050 = vunpack.c.h.b16 %v2854
        %v3051 = vunpack.c.l.b16 %v2855
        %v3052 = vunpack.c.h.b16 %v2855
        %v3053 = vunpack.c.l.b16 %v2856
        %v3054 = vunpack.c.h.b16 %v2856
        %v3055 = vunpack.c.l.b16 %v2857
        %v3056 = vunpack.c.h.b16 %v2857
        %v3057 = vunpack.c.l.b16 %v2858
        %v3058 = vunpack.c.h.b16 %v2858
        %v3059 = vunpack.c.l.b16 %v2859
        %v3060 = vunpack.c.h.b16 %v2859
        %v3061 = vunpack.c.l.b16 %v2860
        %v3062 = vunpack.c.h.b16 %v2860
        %v3063 = vunpack.c.l.b16 %v2861
        %v3064 = vunpack.c.h.b16 %v2861
        %v3065 = vunpack.c.l.b16 %v2862
        %v3066 = vunpack.c.h.b16 %v2862
        %v3067 = vunpack.c.l.b16 %v2863
        %v3068 = vunpack.c.h.b16 %v2863
        %v3069 = vunpack.c.l.b16 %v2864
        %v3070 = vunpack.c.h.b16 %v2864
        %v3071 = vunpack.c.l.b16 %v2865
        %v3072 = vunpack.c.h.b16 %v2865
        %v3073 = vunpack.c.l.b16 %v2866
        %v3074 = vunpack.c.h.b16 %v2866
        %v3075 = vunpack.c.l.b16 %v2867
        %v3076 = vunpack.c.h.b16 %v2867
        %v3077 = vunpack.c.l.b16 %v2868
        %v3078 = vunpack.c.h.b16 %v2868
        %v3079 = vunpack.c.l.b16 %v2869
        %v3080 = vunpack.c.h.b16 %v2869
        %v3081 = vunpack.c.l.b16 %v2870
        %v3082 = vunpack.c.h.b16 %v2870
        %v3083 = vunpack.c.l.b16 %v2871
        %v3084 = vunpack.c.h.b16 %v2871
        %v3085 = vunpack.c.l.b16 %v2872
        %v3086 = vunpack.c.h.b16 %v2872
        %v3087 = vunpack.c.l.b16 %v2873
        %v3088 = vunpack.c.h.b16 %v2873
        %v3089 = vunpack.c.l.b16 %v2874
        %v3090 = vunpack.c.h.b16 %v2874
        %v3091 = vunpack.c.l.b16 %v2875
        %v3092 = vunpack.c.h.b16 %v2875
        %v3093 = vunpack.c.l.b16 %v2876
        %v3094 = vunpack.c.h.b16 %v2876
        %v3095 = vunpack.c.l.b16 %v2877
        %v3096 = vunpack.c.h.b16 %v2877
        %v3097 = vunpack.c.l.b16 %v2878
        %v3098 = vunpack.c.h.b16 %v2878
        %v3099 = vunpack.c.l.b16 %v2879
        %v3100 = vunpack.c.h.b16 %v2879
        %v3101 = vunpack.c.l.b16 %v2880
        %v3102 = vunpack.c.h.b16 %v2880
        %v3103 = vunpack.c.l.b16 %v2881
        %v3104 = vunpack.c.h.b16 %v2881
        %v3105 = vunpack.c.l.b16 %v2882
        %v3106 = vunpack.c.h.b16 %v2882
        %v3107 = vunpack.c.l.b16 %v2883
        %v3108 = vunpack.c.h.b16 %v2883
        %v3109 = vunpack.c.l.b16 %v2884
        %v3110 = vunpack.c.h.b16 %v2884
        %v3111 = vunpack.c.l.b16 %v2885
        %v3112 = vunpack.c.h.b16 %v2885
        %v3113 = vunpack.c.l.b16 %v2886
        %v3114 = vunpack.c.h.b16 %v2886
        %v3115 = vunpack.c.l.b16 %v2887
        %v3116 = vunpack.c.h.b16 %v2887
        %v3117 = vunpack.c.l.b16 %v2888
        %v3118 = vunpack.c.h.b16 %v2888
        %v3119 = vunpack.c.l.b16 %v2889
        %v3120 = vunpack.c.h.b16 %v2889
        %v3121 = vunpack.c.l.b16 %v2890
        %v3122 = vunpack.c.h.b16 %v2890
        %v3123 = vunpack.c.l.b16 %v2891
        %v3124 = vunpack.c.h.b16 %v2891
        %v3125 = vunpack.c.l.b16 %v2892
        %v3126 = vunpack.c.h.b16 %v2892
        %v3127 = vunpack.c.l.b16 %v2893
        %v3128 = vunpack.c.h.b16 %v2893
        %v3129 = vunpack.c.l.b16 %v2894
        %v3130 = vunpack.c.h.b16 %v2894
        %v3131 = vunpack.c.l.b16 %v2895
        %v3132 = vunpack.c.h.b16 %v2895
        %v3133 = vunpack.c.l.b16 %v2896
        %v3134 = vunpack.c.h.b16 %v2896
        %v3135 = vunpack.c.l.b16 %v2897
        %v3136 = vunpack.c.h.b16 %v2897
        %v3137 = vunpack.c.l.b16 %v2898
        %v3138 = vunpack.c.h.b16 %v2898
        %v3139 = vunpack.c.l.b16 %v2899
        %v3140 = vunpack.c.h.b16 %v2899
        %v3141 = vunpack.c.l.b16 %v2900
        %v3142 = vunpack.c.h.b16 %v2900
        %v3143 = vunpack.c.l.b16 %v2901
        %v3144 = vunpack.c.h.b16 %v2901
        %v3145 = vunpack.c.l.b16 %v2902
        %v3146 = vunpack.c.h.b16 %v2902
        %v3147 = vunpack.c.l.b16 %v2903
        %v3148 = vunpack.c.h.b16 %v2903
        %v3149 = vunpack.c.l.b16 %v2904
        %v3150 = vunpack.c.h.b16 %v2904
        %v3151 = vunpack.c.l.b16 %v2905
        %v3152 = vunpack.c.h.b16 %v2905
        %v3153 = vunpack.c.l.b16 %v2906
        %v3154 = vunpack.c.h.b16 %v2906
        %v3155 = vunpack.c.l.b16 %v2907
        %v3156 = vunpack.c.h.b16 %v2907
        %v3157 = vunpack.c.l.b16 %v2908
        %v3158 = vunpack.c.h.b16 %v2908
        %v3159 = vunpack.c.l.b16 %v2909
        %v3160 = vunpack.c.h.b16 %v2909
        %v3161 = vunpack.c.l.b16 %v2910
        %v3162 = vunpack.c.h.b16 %v2910
        %v3163 = vunpack.c.l.b16 %v2911
        %v3164 = vunpack.c.h.b16 %v2911
        %v3165 = vunpack.c.l.b16 %v2912
        %v3166 = vunpack.c.h.b16 %v2912
        %v3167 = vunpack.c.l.b16 %v2913
        %v3168 = vunpack.c.h.b16 %v2913
        %v3169 = vunpack.c.l.b16 %v2914
        %v3170 = vunpack.c.h.b16 %v2914
        %v3171 = vunpack.c.l.b16 %v2915
        %v3172 = vunpack.c.h.b16 %v2915
        %v3173 = vunpack.c.l.b16 %v2916
        %v3174 = vunpack.c.h.b16 %v2916
        %v3175 = vunpack.c.l.b16 %v2917
        %v3176 = vunpack.c.h.b16 %v2917
        %v3177 = vpack.c.b16 %v3057, %v3049
        %v3178 = vpack.c.b16 %v3058, %v3050
        %v3179 = vpack.c.b16 %v3059, %v3051
        %v3180 = vpack.c.b16 %v3060, %v3052
        %v3181 = vpack.c.b16 %v3061, %v3053
        %v3182 = vpack.c.b16 %v3062, %v3054
        %v3183 = vpack.c.b16 %v3063, %v3055
        %v3184 = vpack.c.b16 %v3064, %v3056
        %v3185 = vpack.c.b16 %v3073, %v3065
        %v3186 = vpack.c.b16 %v3074, %v3066
        %v3187 = vpack.c.b16 %v3075, %v3067
        %v3188 = vpack.c.b16 %v3076, %v3068
        %v3189 = vpack.c.b16 %v3077, %v3069
        %v3190 = vpack.c.b16 %v3078, %v3070
        %v3191 = vpack.c.b16 %v3079, %v3071
        %v3192 = vpack.c.b16 %v3080, %v3072
        %v3193 = vpack.c.b16 %v3089, %v3081
        %v3194 = vpack.c.b16 %v3090, %v3082
        %v3195 = vpack.c.b16 %v3091, %v3083
        %v3196 = vpack.c.b16 %v3092, %v3084
        %v3197 = vpack.c.b16 %v3093, %v3085
        %v3198 = vpack.c.b16 %v3094, %v3086
        %v3199 = vpack.c.b16 %v3095, %v3087
        %v3200 = vpack.c.b16 %v3096, %v3088
        %v3201 = vpack.c.b16 %v3105, %v3097
        %v3202 = vpack.c.b16 %v3106, %v3098
        %v3203 = vpack.c.b16 %v3107, %v3099
        %v3204 = vpack.c.b16 %v3108, %v3100
        %v3205 = vpack.c.b16 %v3109, %v3101
        %v3206 = vpack.c.b16 %v3110, %v3102
        %v3207 = vpack.c.b16 %v3111, %v3103
        %v3208 = vpack.c.b16 %v3112, %v3104
        %v3209 = vpack.c.b16 %v3121, %v3113
        %v3210 = vpack.c.b16 %v3122, %v3114
        %v3211 = vpack.c.b16 %v3123, %v3115
        %v3212 = vpack.c.b16 %v3124, %v3116
        %v3213 = vpack.c.b16 %v3125, %v3117
        %v3214 = vpack.c.b16 %v3126, %v3118
        %v3215 = vpack.c.b16 %v3127, %v3119
        %v3216 = vpack.c.b16 %v3128, %v3120
        %v3217 = vpack.c.b16 %v3137, %v3129
        %v3218 = vpack.c.b16 %v3138, %v3130
        %v3219 = vpack.c.b16 %v3139, %v3131
        %v3220 = vpack.c.b16 %v3140, %v3132
        %v3221 = vpack.c.b16 %v3141, %v3133
        %v3222 = vpack.c.b16 %v3142, %v3134
        %v3223 = vpack.c.b16 %v3143, %v3135
        %v3224 = vpack.c.b16 %v3144, %v3136
        %v3225 = vpack.c.b16 %v3153, %v3145
        %v3226 = vpack.c.b16 %v3154, %v3146
        %v3227 = vpack.c.b16 %v3155, %v3147
        %v3228 = vpack.c.b16 %v3156, %v3148
        %v3229 = vpack.c.b16 %v3157, %v3149
        %v3230 = vpack.c.b16 %v3158, %v3150
        %v3231 = vpack.c.b16 %v3159, %v3151
        %v3232 = vpack.c.b16 %v3160, %v3152
        %v3233 = vpack.c.b16 %v3169, %v3161
        %v3234 = vpack.c.b16 %v3170, %v3162
        %v3235 = vpack.c.b16 %v3171, %v3163
        %v3236 = vpack.c.b16 %v3172, %v3164
        %v3237 = vpack.c.b16 %v3173, %v3165
        %v3238 = vpack.c.b16 %v3174, %v3166
        %v3239 = vpack.c.b16 %v3175, %v3167
        %v3240 = vpack.c.b16 %v3176, %v3168
        %3305 = vmatprep.subr.bf16.mxu0 %v3178
        %3306 = vmatpush1.bf16.msra.mxu0 %v3177
        %3307 = vmatprep.subr.bf16.mxu0 %v3186
        %3308 = vmatpush1.bf16.msra.mxu0 %v3185
        %3309 = vmatprep.subr.bf16.mxu0 %v3194
        %3310 = vmatpush1.bf16.msra.mxu0 %v3193
        %3311 = vmatprep.subr.bf16.mxu0 %v3202
        %3312 = vmatpush1.bf16.msra.mxu0 %v3201
        %3313 = vmatprep.subr.bf16.mxu0 %v3210
        %3314 = vmatpush1.bf16.msra.mxu0 %v3209
        %3315 = vmatprep.subr.bf16.mxu0 %v3218
        %3316 = vmatpush1.bf16.msra.mxu0 %v3217
        %3317 = vmatprep.subr.bf16.mxu0 %v3226
        %3318 = vmatpush1.bf16.msra.mxu0 %v3225
        %3319 = vmatprep.subr.bf16.mxu0 %v3234
        %3320 = vmatpush1.bf16.msra.mxu0 %v3233
        %3321 = vmatprep.subr.bf16.mxu0 0
        %3322 = vmatpush1.bf16.msra.mxu0 0
        %3323 = vmatprep.subr.bf16.mxu0 0
        %3324 = vmatpush1.bf16.msra.mxu0 0
        %3325 = vmatprep.subr.bf16.mxu0 0
        %3326 = vmatpush1.bf16.msra.mxu0 0
        %3327 = vmatprep.subr.bf16.mxu0 0
        %3328 = vmatpush1.bf16.msra.mxu0 0
        %3329 = vmatprep.subr.bf16.mxu0 0
        %3330 = vmatpush1.bf16.msra.mxu0 0
        %3331 = vmatprep.subr.bf16.mxu0 0
        %3332 = vmatpush1.bf16.msra.mxu0 0
        %3333 = vmatprep.subr.bf16.mxu0 0
        %3334 = vmatpush1.bf16.msra.mxu0 0
        %3335 = vmatprep.subr.bf16.mxu0 0
        %3336 = vmatpush1.bf16.msra.mxu0 0
        %3337 = vmatprep.mubr.bf16.mxu0 0
        %3338 = vmatmul.mubr.bf16.gmra.mrb[0].mxu0 %v2983
        %v3339 = vpop.f32.mrb[0].mxu0
        %v3340 = vadd.f32 %v2942, %v3339
        %v3341 = vpop.f32.mrb[0].mxu0
        %v3342 = vadd.f32 %v2946, %v3341
        %v3343 = vpop.f32.mrb[0].mxu0
        %v3344 = vadd.f32 %v2942, %v3343
        %v3345 = vpop.f32.mrb[0].mxu0
        %v3346 = vadd.f32 %v2946, %v3345
        %3347 = vdwg.mxu0
        %3348 = vmatprep.subr.bf16.mxu0 %v3180
        %3349 = vmatpush1.bf16.msra.mxu0 %v3179
        %3350 = vmatprep.subr.bf16.mxu0 %v3188
        %3351 = vmatpush1.bf16.msra.mxu0 %v3187
        %3352 = vmatprep.subr.bf16.mxu0 %v3196
        %3353 = vmatpush1.bf16.msra.mxu0 %v3195
        %3354 = vmatprep.subr.bf16.mxu0 %v3204
        %3355 = vmatpush1.bf16.msra.mxu0 %v3203
        %3356 = vmatprep.subr.bf16.mxu0 %v3212
        %3357 = vmatpush1.bf16.msra.mxu0 %v3211
        %3358 = vmatprep.subr.bf16.mxu0 %v3220
        %3359 = vmatpush1.bf16.msra.mxu0 %v3219
        %3360 = vmatprep.subr.bf16.mxu0 %v3228
        %3361 = vmatpush1.bf16.msra.mxu0 %v3227
        %3362 = vmatprep.subr.bf16.mxu0 %v3236
        %3363 = vmatpush1.bf16.msra.mxu0 %v3235
        %3364 = vmatprep.subr.bf16.mxu0 0
        %3365 = vmatpush1.bf16.msra.mxu0 0
        %3366 = vmatprep.subr.bf16.mxu0 0
        %3367 = vmatpush1.bf16.msra.mxu0 0
        %3368 = vmatprep.subr.bf16.mxu0 0
        %3369 = vmatpush1.bf16.msra.mxu0 0
        %3370 = vmatprep.subr.bf16.mxu0 0
        %3371 = vmatpush1.bf16.msra.mxu0 0
        %3372 = vmatprep.subr.bf16.mxu0 0
        %3373 = vmatpush1.bf16.msra.mxu0 0
        %3374 = vmatprep.subr.bf16.mxu0 0
        %3375 = vmatpush1.bf16.msra.mxu0 0
        %3376 = vmatprep.subr.bf16.mxu0 0
        %3377 = vmatpush1.bf16.msra.mxu0 0
        %3378 = vmatprep.subr.bf16.mxu0 0
        %3379 = vmatpush1.bf16.msra.mxu0 0
        %3380 = vmatprep.mubr.bf16.mxu0 0
        %3381 = vmatmul.mubr.bf16.gmra.mrb[0].mxu0 %v2983
        %v3382 = vpop.f32.mrb[0].mxu0
        %v3383 = vadd.f32 %v2950, %v3382
        %v3384 = vpop.f32.mrb[0].mxu0
        %v3385 = vadd.f32 %v2954, %v3384
        %v3386 = vpop.f32.mrb[0].mxu0
        %v3387 = vadd.f32 %v2950, %v3386
        %v3388 = vpop.f32.mrb[0].mxu0
        %v3389 = vadd.f32 %v2954, %v3388
        %3390 = vdwg.mxu0
        %3391 = vmatprep.subr.bf16.mxu0 %v3182
        %3392 = vmatpush1.bf16.msra.mxu0 %v3181
        %3393 = vmatprep.subr.bf16.mxu0 %v3190
        %3394 = vmatpush1.bf16.msra.mxu0 %v3189
        %3395 = vmatprep.subr.bf16.mxu0 %v3198
        %3396 = vmatpush1.bf16.msra.mxu0 %v3197
        %3397 = vmatprep.subr.bf16.mxu0 %v3206
        %3398 = vmatpush1.bf16.msra.mxu0 %v3205
        %3399 = vmatprep.subr.bf16.mxu0 %v3214
        %3400 = vmatpush1.bf16.msra.mxu0 %v3213
        %3401 = vmatprep.subr.bf16.mxu0 %v3222
        %3402 = vmatpush1.bf16.msra.mxu0 %v3221
        %3403 = vmatprep.subr.bf16.mxu0 %v3230
        %3404 = vmatpush1.bf16.msra.mxu0 %v3229
        %3405 = vmatprep.subr.bf16.mxu0 %v3238
        %3406 = vmatpush1.bf16.msra.mxu0 %v3237
        %3407 = vmatprep.subr.bf16.mxu0 0
        %3408 = vmatpush1.bf16.msra.mxu0 0
        %3409 = vmatprep.subr.bf16.mxu0 0
        %3410 = vmatpush1.bf16.msra.mxu0 0
        %3411 = vmatprep.subr.bf16.mxu0 0
        %3412 = vmatpush1.bf16.msra.mxu0 0
        %3413 = vmatprep.subr.bf16.mxu0 0
        %3414 = vmatpush1.bf16.msra.mxu0 0
        %3415 = vmatprep.subr.bf16.mxu0 0
        %3416 = vmatpush1.bf16.msra.mxu0 0
        %3417 = vmatprep.subr.bf16.mxu0 0
        %3418 = vmatpush1.bf16.msra.mxu0 0
        %3419 = vmatprep.subr.bf16.mxu0 0
        %3420 = vmatpush1.bf16.msra.mxu0 0
        %3421 = vmatprep.subr.bf16.mxu0 0
        %3422 = vmatpush1.bf16.msra.mxu0 0
        %3423 = vmatprep.mubr.bf16.mxu0 0
        %3424 = vmatmul.mubr.bf16.gmra.mrb[0].mxu0 %v2983
        %v3425 = vpop.f32.mrb[0].mxu0
        %v3426 = vadd.f32 %v2958, %v3425
        %v3427 = vpop.f32.mrb[0].mxu0
        %v3428 = vadd.f32 %v2962, %v3427
        %v3429 = vpop.f32.mrb[0].mxu0
        %v3430 = vadd.f32 %v2958, %v3429
        %v3431 = vpop.f32.mrb[0].mxu0
        %v3432 = vadd.f32 %v2962, %v3431
        %3433 = vdwg.mxu0
        %3434 = vmatprep.subr.bf16.mxu0 %v3184
        %3435 = vmatpush1.bf16.msra.mxu0 %v3183
        %3436 = vmatprep.subr.bf16.mxu0 %v3192
        %3437 = vmatpush1.bf16.msra.mxu0 %v3191
        %3438 = vmatprep.subr.bf16.mxu0 %v3200
        %3439 = vmatpush1.bf16.msra.mxu0 %v3199
        %3440 = vmatprep.subr.bf16.mxu0 %v3208
        %3441 = vmatpush1.bf16.msra.mxu0 %v3207
        %3442 = vmatprep.subr.bf16.mxu0 %v3216
        %3443 = vmatpush1.bf16.msra.mxu0 %v3215
        %3444 = vmatprep.subr.bf16.mxu0 %v3224
        %3445 = vmatpush1.bf16.msra.mxu0 %v3223
        %3446 = vmatprep.subr.bf16.mxu0 %v3232
        %3447 = vmatpush1.bf16.msra.mxu0 %v3231
        %3448 = vmatprep.subr.bf16.mxu0 %v3240
        %3449 = vmatpush1.bf16.msra.mxu0 %v3239
        %3450 = vmatprep.subr.bf16.mxu0 0
        %3451 = vmatpush1.bf16.msra.mxu0 0
        %3452 = vmatprep.subr.bf16.mxu0 0
        %3453 = vmatpush1.bf16.msra.mxu0 0
        %3454 = vmatprep.subr.bf16.mxu0 0
        %3455 = vmatpush1.bf16.msra.mxu0 0
        %3456 = vmatprep.subr.bf16.mxu0 0
        %3457 = vmatpush1.bf16.msra.mxu0 0
        %3458 = vmatprep.subr.bf16.mxu0 0
        %3459 = vmatpush1.bf16.msra.mxu0 0
        %3460 = vmatprep.subr.bf16.mxu0 0
        %3461 = vmatpush1.bf16.msra.mxu0 0
        %3462 = vmatprep.subr.bf16.mxu0 0
        %3463 = vmatpush1.bf16.msra.mxu0 0
        %3464 = vmatprep.subr.bf16.mxu0 0
        %3465 = vmatpush1.bf16.msra.mxu0 0
        %3466 = vmatprep.mubr.bf16.mxu0 0
        %3467 = vmatmul.mubr.bf16.gmra.mrb[0].mxu0 %v2983
        %v3468 = vpop.f32.mrb[0].mxu0
        %v3469 = vadd.f32 %v2966, %v3468
        %v3470 = vpop.f32.mrb[0].mxu0
        %v3471 = vadd.f32 %v2970, %v3470
        %v3472 = vpop.f32.mrb[0].mxu0
        %v3473 = vadd.f32 %v2966, %v3472
        %v3474 = vpop.f32.mrb[0].mxu0
        %v3475 = vadd.f32 %v2970, %v3474
        %3476 = vdwg.mxu0
        %v3477 = vmax.f32 %v2918, %v3340
        %v3478 = vmax.f32 %v2919, %v3342
        %v3479 = vmax.f32 %v2920, %v3383
        %v3480 = vmax.f32 %v2921, %v3385
        %v3481 = vmax.f32 %v2922, %v3426
        %v3482 = vmax.f32 %v2923, %v3428
        %v3483 = vmax.f32 %v2924, %v3469
        %v3484 = vmax.f32 %v2925, %v3471
        %v3485 = vmax.f32 %v2926, %v3344
        %v3486 = vmax.f32 %v2927, %v3346
        %v3487 = vmax.f32 %v2928, %v3387
        %v3488 = vmax.f32 %v2929, %v3389
        %v3489 = vmax.f32 %v2930, %v3430
        %v3490 = vmax.f32 %v2931, %v3432
        %v3491 = vmax.f32 %v2932, %v3473
        %v3492 = vmax.f32 %v2933, %v3475
        %3493 = vst [vmem:[#allocation2] sm:$0xff] %v3477
        %3494 = vst [vmem:[#allocation2 + $0x8] sm:$0xff] %v3478
        %3495 = vst [vmem:[#allocation2 + $0x10] sm:$0xff] %v3479
        %3496 = vst [vmem:[#allocation2 + $0x18] sm:$0xff] %v3480
        %3497 = vst [vmem:[#allocation2 + $0x20] sm:$0xff] %v3481
        %3498 = vst [vmem:[#allocation2 + $0x28] sm:$0xff] %v3482
        %3499 = vst [vmem:[#allocation2 + $0x30] sm:$0xff] %v3483
        %3500 = vst [vmem:[#allocation2 + $0x38] sm:$0xff] %v3484
        %3501 = vst [vmem:[#allocation2 + $0x40] sm:$0xff] %v3485
        %3502 = vst [vmem:[#allocation2 + $0x48] sm:$0xff] %v3486
        %3503 = vst [vmem:[#allocation2 + $0x50] sm:$0xff] %v3487
        %3504 = vst [vmem:[#allocation2 + $0x58] sm:$0xff] %v3488
        %3505 = vst [vmem:[#allocation2 + $0x60] sm:$0xff] %v3489
        %3506 = vst [vmem:[#allocation2 + $0x68] sm:$0xff] %v3490
        %3507 = vst [vmem:[#allocation2 + $0x70] sm:$0xff] %v3491
        %3508 = vst [vmem:[#allocation2 + $0x78] sm:$0xff] %v3492
        %s3509 = scalar_lea.vmem [#allocation3], 104
        %v3510 = vld [vmem:[%s3509] sm:$0xf]
        %v3511 = vld [vmem:[%s3509 + $0x4] sm:$0xf]
        %v3512 = vld [vmem:[%s273] sm:$0xff]
        %v3513 = vld [vmem:[%s273 + $0x8] sm:$0xff]
        %v3514 = vld [vmem:[%s273 + $0x10] sm:$0xff]
        %v3515 = vld [vmem:[%s273 + $0x18] sm:$0xff]
        %v3516 = vld [vmem:[%s273 + $0x20] sm:$0xff]
        %v3517 = vld [vmem:[%s273 + $0x28] sm:$0xff]
        %v3518 = vld [vmem:[%s273 + $0x30] sm:$0xff]
        %v3519 = vld [vmem:[%s273 + $0x38] sm:$0xff]
        %v3520 = vld [vmem:[%s273 + $0x40] sm:$0xff]
        %v3521 = vld [vmem:[%s273 + $0x48] sm:$0xff]
        %v3522 = vld [vmem:[%s273 + $0x50] sm:$0xff]
        %v3523 = vld [vmem:[%s273 + $0x58] sm:$0xff]
        %v3524 = vld [vmem:[%s273 + $0x60] sm:$0xff]
        %v3525 = vld [vmem:[%s273 + $0x68] sm:$0xff]
        %v3526 = vld [vmem:[%s273 + $0x70] sm:$0xff]
        %v3527 = vld [vmem:[%s273 + $0x78] sm:$0xff]
        %v3528 = vld [vmem:[%s273 + $0x80] sm:$0xff]
        %v3529 = vld [vmem:[%s273 + $0x88] sm:$0xff]
        %v3530 = vld [vmem:[%s273 + $0x90] sm:$0xff]
        %v3531 = vld [vmem:[%s273 + $0x98] sm:$0xff]
        %v3532 = vld [vmem:[%s273 + $0xa0] sm:$0xff]
        %v3533 = vld [vmem:[%s273 + $0xa8] sm:$0xff]
        %v3534 = vld [vmem:[%s273 + $0xb0] sm:$0xff]
        %v3535 = vld [vmem:[%s273 + $0xb8] sm:$0xff]
        %v3536 = vld [vmem:[%s273 + $0xc0] sm:$0xff]
        %v3537 = vld [vmem:[%s273 + $0xc8] sm:$0xff]
        %v3538 = vld [vmem:[%s273 + $0xd0] sm:$0xff]
        %v3539 = vld [vmem:[%s273 + $0xd8] sm:$0xff]
        %v3540 = vld [vmem:[%s273 + $0xe0] sm:$0xff]
        %v3541 = vld [vmem:[%s273 + $0xe8] sm:$0xff]
        %v3542 = vld [vmem:[%s273 + $0xf0] sm:$0xff]
        %v3543 = vld [vmem:[%s273 + $0xf8] sm:$0xff]
        %v3544 = vld [vmem:[%s273 + $0x100] sm:$0xff]
        %v3545 = vld [vmem:[%s273 + $0x108] sm:$0xff]
        %v3546 = vld [vmem:[%s273 + $0x110] sm:$0xff]
        %v3547 = vld [vmem:[%s273 + $0x118] sm:$0xff]
        %v3548 = vld [vmem:[%s273 + $0x120] sm:$0xff]
        %v3549 = vld [vmem:[%s273 + $0x128] sm:$0xff]
        %v3550 = vld [vmem:[%s273 + $0x130] sm:$0xff]
        %v3551 = vld [vmem:[%s273 + $0x138] sm:$0xff]
        %v3552 = vld [vmem:[%s273 + $0x140] sm:$0xff]
        %v3553 = vld [vmem:[%s273 + $0x148] sm:$0xff]
        %v3554 = vld [vmem:[%s273 + $0x150] sm:$0xff]
        %v3555 = vld [vmem:[%s273 + $0x158] sm:$0xff]
        %v3556 = vld [vmem:[%s273 + $0x160] sm:$0xff]
        %v3557 = vld [vmem:[%s273 + $0x168] sm:$0xff]
        %v3558 = vld [vmem:[%s273 + $0x170] sm:$0xff]
        %v3559 = vld [vmem:[%s273 + $0x178] sm:$0xff]
        %v3560 = vld [vmem:[%s273 + $0x180] sm:$0xff]
        %v3561 = vld [vmem:[%s273 + $0x188] sm:$0xff]
        %v3562 = vld [vmem:[%s273 + $0x190] sm:$0xff]
        %v3563 = vld [vmem:[%s273 + $0x198] sm:$0xff]
        %v3564 = vld [vmem:[%s273 + $0x1a0] sm:$0xff]
        %v3565 = vld [vmem:[%s273 + $0x1a8] sm:$0xff]
        %v3566 = vld [vmem:[%s273 + $0x1b0] sm:$0xff]
        %v3567 = vld [vmem:[%s273 + $0x1b8] sm:$0xff]
        %v3568 = vld [vmem:[%s273 + $0x1c0] sm:$0xff]
        %v3569 = vld [vmem:[%s273 + $0x1c8] sm:$0xff]
        %v3570 = vld [vmem:[%s273 + $0x1d0] sm:$0xff]
        %v3571 = vld [vmem:[%s273 + $0x1d8] sm:$0xff]
        %v3572 = vld [vmem:[%s273 + $0x1e0] sm:$0xff]
        %v3573 = vld [vmem:[%s273 + $0x1e8] sm:$0xff]
        %v3574 = vld [vmem:[%s273 + $0x1f0] sm:$0xff]
        %v3575 = vld [vmem:[%s273 + $0x1f8] sm:$0xff]
        %v3576 = vld [vmem:[#allocation2] sm:$0xff]
        %v3577 = vld [vmem:[#allocation2 + $0x8] sm:$0xff]
        %v3578 = vld [vmem:[#allocation2 + $0x10] sm:$0xff]
        %v3579 = vld [vmem:[#allocation2 + $0x18] sm:$0xff]
        %v3580 = vld [vmem:[#allocation2 + $0x20] sm:$0xff]
        %v3581 = vld [vmem:[#allocation2 + $0x28] sm:$0xff]
        %v3582 = vld [vmem:[#allocation2 + $0x30] sm:$0xff]
        %v3583 = vld [vmem:[#allocation2 + $0x38] sm:$0xff]
        %v3584 = vld [vmem:[#allocation2 + $0x40] sm:$0xff]
        %v3585 = vld [vmem:[#allocation2 + $0x48] sm:$0xff]
        %v3586 = vld [vmem:[#allocation2 + $0x50] sm:$0xff]
        %v3587 = vld [vmem:[#allocation2 + $0x58] sm:$0xff]
        %v3588 = vld [vmem:[#allocation2 + $0x60] sm:$0xff]
        %v3589 = vld [vmem:[#allocation2 + $0x68] sm:$0xff]
        %v3590 = vld [vmem:[#allocation2 + $0x70] sm:$0xff]
        %v3591 = vld [vmem:[#allocation2 + $0x78] sm:$0xff]
        %s3592 = scalar_lea.vmem %s291, 2 [#allocation9]
        %v3593 = vld [vmem:[%s3592] ss:$8 sm:$0xf]
        %v3594 = vld [vmem:[%s3592] ss:$8 sm:$0xf0]
        %v3595 = vor.u32 %v3593, %v3594
        %v3597 = vlaneseq
        %v3598 = vshrl.u32 %v3597, 7
        %v3599 = vsub.s32 0, %v3598
        %v3600 = vrot.slane %v3595, %v3599
        %v3601 = vlaneseq
        %v3602 = vshrl.u32 %v3601, 7
        %v3603 = vsub.s32 1, %v3602
        %v3604 = vrot.slane %v3595, %v3603
        %v3605 = vlaneseq
        %v3606 = vshrl.u32 %v3605, 7
        %v3607 = vsub.s32 2, %v3606
        %v3608 = vrot.slane %v3595, %v3607
        %v3609 = vlaneseq
        %v3610 = vshrl.u32 %v3609, 7
        %v3611 = vsub.s32 3, %v3610
        %v3612 = vrot.slane %v3595, %v3611
        %v3613 = vlaneseq
        %v3614 = vshrl.u32 %v3613, 7
        %v3615 = vsub.s32 4, %v3614
        %v3616 = vrot.slane %v3595, %v3615
        %v3617 = vlaneseq
        %v3618 = vshrl.u32 %v3617, 7
        %v3619 = vsub.s32 5, %v3618
        %v3620 = vrot.slane %v3595, %v3619
        %v3621 = vlaneseq
        %v3622 = vshrl.u32 %v3621, 7
        %v3623 = vsub.s32 6, %v3622
        %v3624 = vrot.slane %v3595, %v3623
        %v3625 = vlaneseq
        %v3626 = vshrl.u32 %v3625, 7
        %v3627 = vsub.s32 7, %v3626
        %v3628 = vrot.slane %v3595, %v3627
        %v3639 = vunpack.c.l.b16 %v3510
        %v3640 = vunpack.c.l.b16 %v3511
        %v3641 = vpack.c.b16 %v3640, %v3639
        %v3707 = vunpack.c.l.b16 %v3512
        %v3708 = vunpack.c.h.b16 %v3512
        %v3709 = vunpack.c.l.b16 %v3513
        %v3710 = vunpack.c.h.b16 %v3513
        %v3711 = vunpack.c.l.b16 %v3514
        %v3712 = vunpack.c.h.b16 %v3514
        %v3713 = vunpack.c.l.b16 %v3515
        %v3714 = vunpack.c.h.b16 %v3515
        %v3715 = vunpack.c.l.b16 %v3516
        %v3716 = vunpack.c.h.b16 %v3516
        %v3717 = vunpack.c.l.b16 %v3517
        %v3718 = vunpack.c.h.b16 %v3517
        %v3719 = vunpack.c.l.b16 %v3518
        %v3720 = vunpack.c.h.b16 %v3518
        %v3721 = vunpack.c.l.b16 %v3519
        %v3722 = vunpack.c.h.b16 %v3519
        %v3723 = vunpack.c.l.b16 %v3520
        %v3724 = vunpack.c.h.b16 %v3520
        %v3725 = vunpack.c.l.b16 %v3521
        %v3726 = vunpack.c.h.b16 %v3521
        %v3727 = vunpack.c.l.b16 %v3522
        %v3728 = vunpack.c.h.b16 %v3522
        %v3729 = vunpack.c.l.b16 %v3523
        %v3730 = vunpack.c.h.b16 %v3523
        %v3731 = vunpack.c.l.b16 %v3524
        %v3732 = vunpack.c.h.b16 %v3524
        %v3733 = vunpack.c.l.b16 %v3525
        %v3734 = vunpack.c.h.b16 %v3525
        %v3735 = vunpack.c.l.b16 %v3526
        %v3736 = vunpack.c.h.b16 %v3526
        %v3737 = vunpack.c.l.b16 %v3527
        %v3738 = vunpack.c.h.b16 %v3527
        %v3739 = vunpack.c.l.b16 %v3528
        %v3740 = vunpack.c.h.b16 %v3528
        %v3741 = vunpack.c.l.b16 %v3529
        %v3742 = vunpack.c.h.b16 %v3529
        %v3743 = vunpack.c.l.b16 %v3530
        %v3744 = vunpack.c.h.b16 %v3530
        %v3745 = vunpack.c.l.b16 %v3531
        %v3746 = vunpack.c.h.b16 %v3531
        %v3747 = vunpack.c.l.b16 %v3532
        %v3748 = vunpack.c.h.b16 %v3532
        %v3749 = vunpack.c.l.b16 %v3533
        %v3750 = vunpack.c.h.b16 %v3533
        %v3751 = vunpack.c.l.b16 %v3534
        %v3752 = vunpack.c.h.b16 %v3534
        %v3753 = vunpack.c.l.b16 %v3535
        %v3754 = vunpack.c.h.b16 %v3535
        %v3755 = vunpack.c.l.b16 %v3536
        %v3756 = vunpack.c.h.b16 %v3536
        %v3757 = vunpack.c.l.b16 %v3537
        %v3758 = vunpack.c.h.b16 %v3537
        %v3759 = vunpack.c.l.b16 %v3538
        %v3760 = vunpack.c.h.b16 %v3538
        %v3761 = vunpack.c.l.b16 %v3539
        %v3762 = vunpack.c.h.b16 %v3539
        %v3763 = vunpack.c.l.b16 %v3540
        %v3764 = vunpack.c.h.b16 %v3540
        %v3765 = vunpack.c.l.b16 %v3541
        %v3766 = vunpack.c.h.b16 %v3541
        %v3767 = vunpack.c.l.b16 %v3542
        %v3768 = vunpack.c.h.b16 %v3542
        %v3769 = vunpack.c.l.b16 %v3543
        %v3770 = vunpack.c.h.b16 %v3543
        %v3771 = vunpack.c.l.b16 %v3544
        %v3772 = vunpack.c.h.b16 %v3544
        %v3773 = vunpack.c.l.b16 %v3545
        %v3774 = vunpack.c.h.b16 %v3545
        %v3775 = vunpack.c.l.b16 %v3546
        %v3776 = vunpack.c.h.b16 %v3546
        %v3777 = vunpack.c.l.b16 %v3547
        %v3778 = vunpack.c.h.b16 %v3547
        %v3779 = vunpack.c.l.b16 %v3548
        %v3780 = vunpack.c.h.b16 %v3548
        %v3781 = vunpack.c.l.b16 %v3549
        %v3782 = vunpack.c.h.b16 %v3549
        %v3783 = vunpack.c.l.b16 %v3550
        %v3784 = vunpack.c.h.b16 %v3550
        %v3785 = vunpack.c.l.b16 %v3551
        %v3786 = vunpack.c.h.b16 %v3551
        %v3787 = vunpack.c.l.b16 %v3552
        %v3788 = vunpack.c.h.b16 %v3552
        %v3789 = vunpack.c.l.b16 %v3553
        %v3790 = vunpack.c.h.b16 %v3553
        %v3791 = vunpack.c.l.b16 %v3554
        %v3792 = vunpack.c.h.b16 %v3554
        %v3793 = vunpack.c.l.b16 %v3555
        %v3794 = vunpack.c.h.b16 %v3555
        %v3795 = vunpack.c.l.b16 %v3556
        %v3796 = vunpack.c.h.b16 %v3556
        %v3797 = vunpack.c.l.b16 %v3557
        %v3798 = vunpack.c.h.b16 %v3557
        %v3799 = vunpack.c.l.b16 %v3558
        %v3800 = vunpack.c.h.b16 %v3558
        %v3801 = vunpack.c.l.b16 %v3559
        %v3802 = vunpack.c.h.b16 %v3559
        %v3803 = vunpack.c.l.b16 %v3560
        %v3804 = vunpack.c.h.b16 %v3560
        %v3805 = vunpack.c.l.b16 %v3561
        %v3806 = vunpack.c.h.b16 %v3561
        %v3807 = vunpack.c.l.b16 %v3562
        %v3808 = vunpack.c.h.b16 %v3562
        %v3809 = vunpack.c.l.b16 %v3563
        %v3810 = vunpack.c.h.b16 %v3563
        %v3811 = vunpack.c.l.b16 %v3564
        %v3812 = vunpack.c.h.b16 %v3564
        %v3813 = vunpack.c.l.b16 %v3565
        %v3814 = vunpack.c.h.b16 %v3565
        %v3815 = vunpack.c.l.b16 %v3566
        %v3816 = vunpack.c.h.b16 %v3566
        %v3817 = vunpack.c.l.b16 %v3567
        %v3818 = vunpack.c.h.b16 %v3567
        %v3819 = vunpack.c.l.b16 %v3568
        %v3820 = vunpack.c.h.b16 %v3568
        %v3821 = vunpack.c.l.b16 %v3569
        %v3822 = vunpack.c.h.b16 %v3569
        %v3823 = vunpack.c.l.b16 %v3570
        %v3824 = vunpack.c.h.b16 %v3570
        %v3825 = vunpack.c.l.b16 %v3571
        %v3826 = vunpack.c.h.b16 %v3571
        %v3827 = vunpack.c.l.b16 %v3572
        %v3828 = vunpack.c.h.b16 %v3572
        %v3829 = vunpack.c.l.b16 %v3573
        %v3830 = vunpack.c.h.b16 %v3573
        %v3831 = vunpack.c.l.b16 %v3574
        %v3832 = vunpack.c.h.b16 %v3574
        %v3833 = vunpack.c.l.b16 %v3575
        %v3834 = vunpack.c.h.b16 %v3575
        %v3835 = vpack.c.b16 %v3715, %v3707
        %v3836 = vpack.c.b16 %v3716, %v3708
        %v3837 = vpack.c.b16 %v3717, %v3709
        %v3838 = vpack.c.b16 %v3718, %v3710
        %v3839 = vpack.c.b16 %v3719, %v3711
        %v3840 = vpack.c.b16 %v3720, %v3712
        %v3841 = vpack.c.b16 %v3721, %v3713
        %v3842 = vpack.c.b16 %v3722, %v3714
        %v3843 = vpack.c.b16 %v3731, %v3723
        %v3844 = vpack.c.b16 %v3732, %v3724
        %v3845 = vpack.c.b16 %v3733, %v3725
        %v3846 = vpack.c.b16 %v3734, %v3726
        %v3847 = vpack.c.b16 %v3735, %v3727
        %v3848 = vpack.c.b16 %v3736, %v3728
        %v3849 = vpack.c.b16 %v3737, %v3729
        %v3850 = vpack.c.b16 %v3738, %v3730
        %v3851 = vpack.c.b16 %v3747, %v3739
        %v3852 = vpack.c.b16 %v3748, %v3740
        %v3853 = vpack.c.b16 %v3749, %v3741
        %v3854 = vpack.c.b16 %v3750, %v3742
        %v3855 = vpack.c.b16 %v3751, %v3743
        %v3856 = vpack.c.b16 %v3752, %v3744
        %v3857 = vpack.c.b16 %v3753, %v3745
        %v3858 = vpack.c.b16 %v3754, %v3746
        %v3859 = vpack.c.b16 %v3763, %v3755
        %v3860 = vpack.c.b16 %v3764, %v3756
        %v3861 = vpack.c.b16 %v3765, %v3757
        %v3862 = vpack.c.b16 %v3766, %v3758
        %v3863 = vpack.c.b16 %v3767, %v3759
        %v3864 = vpack.c.b16 %v3768, %v3760
        %v3865 = vpack.c.b16 %v3769, %v3761
        %v3866 = vpack.c.b16 %v3770, %v3762
        %v3867 = vpack.c.b16 %v3779, %v3771
        %v3868 = vpack.c.b16 %v3780, %v3772
        %v3869 = vpack.c.b16 %v3781, %v3773
        %v3870 = vpack.c.b16 %v3782, %v3774
        %v3871 = vpack.c.b16 %v3783, %v3775
        %v3872 = vpack.c.b16 %v3784, %v3776
        %v3873 = vpack.c.b16 %v3785, %v3777
        %v3874 = vpack.c.b16 %v3786, %v3778
        %v3875 = vpack.c.b16 %v3795, %v3787
        %v3876 = vpack.c.b16 %v3796, %v3788
        %v3877 = vpack.c.b16 %v3797, %v3789
        %v3878 = vpack.c.b16 %v3798, %v3790
        %v3879 = vpack.c.b16 %v3799, %v3791
        %v3880 = vpack.c.b16 %v3800, %v3792
        %v3881 = vpack.c.b16 %v3801, %v3793
        %v3882 = vpack.c.b16 %v3802, %v3794
        %v3883 = vpack.c.b16 %v3811, %v3803
        %v3884 = vpack.c.b16 %v3812, %v3804
        %v3885 = vpack.c.b16 %v3813, %v3805
        %v3886 = vpack.c.b16 %v3814, %v3806
        %v3887 = vpack.c.b16 %v3815, %v3807
        %v3888 = vpack.c.b16 %v3816, %v3808
        %v3889 = vpack.c.b16 %v3817, %v3809
        %v3890 = vpack.c.b16 %v3818, %v3810
        %v3891 = vpack.c.b16 %v3827, %v3819
        %v3892 = vpack.c.b16 %v3828, %v3820
        %v3893 = vpack.c.b16 %v3829, %v3821
        %v3894 = vpack.c.b16 %v3830, %v3822
        %v3895 = vpack.c.b16 %v3831, %v3823
        %v3896 = vpack.c.b16 %v3832, %v3824
        %v3897 = vpack.c.b16 %v3833, %v3825
        %v3898 = vpack.c.b16 %v3834, %v3826
        %3963 = vmatprep.subr.bf16.mxu0 %v3836
        %3964 = vmatpush1.bf16.msra.mxu0 %v3835
        %3965 = vmatprep.subr.bf16.mxu0 %v3844
        %3966 = vmatpush1.bf16.msra.mxu0 %v3843
        %3967 = vmatprep.subr.bf16.mxu0 %v3852
        %3968 = vmatpush1.bf16.msra.mxu0 %v3851
        %3969 = vmatprep.subr.bf16.mxu0 %v3860
        %3970 = vmatpush1.bf16.msra.mxu0 %v3859
        %3971 = vmatprep.subr.bf16.mxu0 %v3868
        %3972 = vmatpush1.bf16.msra.mxu0 %v3867
        %3973 = vmatprep.subr.bf16.mxu0 %v3876
        %3974 = vmatpush1.bf16.msra.mxu0 %v3875
        %3975 = vmatprep.subr.bf16.mxu0 %v3884
        %3976 = vmatpush1.bf16.msra.mxu0 %v3883
        %3977 = vmatprep.subr.bf16.mxu0 %v3892
        %3978 = vmatpush1.bf16.msra.mxu0 %v3891
        %3979 = vmatprep.subr.bf16.mxu0 0
        %3980 = vmatpush1.bf16.msra.mxu0 0
        %3981 = vmatprep.subr.bf16.mxu0 0
        %3982 = vmatpush1.bf16.msra.mxu0 0
        %3983 = vmatprep.subr.bf16.mxu0 0
        %3984 = vmatpush1.bf16.msra.mxu0 0
        %3985 = vmatprep.subr.bf16.mxu0 0
        %3986 = vmatpush1.bf16.msra.mxu0 0
        %3987 = vmatprep.subr.bf16.mxu0 0
        %3988 = vmatpush1.bf16.msra.mxu0 0
        %3989 = vmatprep.subr.bf16.mxu0 0
        %3990 = vmatpush1.bf16.msra.mxu0 0
        %3991 = vmatprep.subr.bf16.mxu0 0
        %3992 = vmatpush1.bf16.msra.mxu0 0
        %3993 = vmatprep.subr.bf16.mxu0 0
        %3994 = vmatpush1.bf16.msra.mxu0 0
        %3995 = vmatprep.mubr.bf16.mxu0 0
        %3996 = vmatmul.mubr.bf16.gmra.mrb[0].mxu0 %v3641
        %v3997 = vpop.f32.mrb[0].mxu0
        %v3998 = vadd.f32 %v3600, %v3997
        %v3999 = vpop.f32.mrb[0].mxu0
        %v4000 = vadd.f32 %v3604, %v3999
        %v4001 = vpop.f32.mrb[0].mxu0
        %v4002 = vadd.f32 %v3600, %v4001
        %v4003 = vpop.f32.mrb[0].mxu0
        %v4004 = vadd.f32 %v3604, %v4003
        %4005 = vdwg.mxu0
        %4006 = vmatprep.subr.bf16.mxu0 %v3838
        %4007 = vmatpush1.bf16.msra.mxu0 %v3837
        %4008 = vmatprep.subr.bf16.mxu0 %v3846
        %4009 = vmatpush1.bf16.msra.mxu0 %v3845
        %4010 = vmatprep.subr.bf16.mxu0 %v3854
        %4011 = vmatpush1.bf16.msra.mxu0 %v3853
        %4012 = vmatprep.subr.bf16.mxu0 %v3862
        %4013 = vmatpush1.bf16.msra.mxu0 %v3861
        %4014 = vmatprep.subr.bf16.mxu0 %v3870
        %4015 = vmatpush1.bf16.msra.mxu0 %v3869
        %4016 = vmatprep.subr.bf16.mxu0 %v3878
        %4017 = vmatpush1.bf16.msra.mxu0 %v3877
        %4018 = vmatprep.subr.bf16.mxu0 %v3886
        %4019 = vmatpush1.bf16.msra.mxu0 %v3885
        %4020 = vmatprep.subr.bf16.mxu0 %v3894
        %4021 = vmatpush1.bf16.msra.mxu0 %v3893
        %4022 = vmatprep.subr.bf16.mxu0 0
        %4023 = vmatpush1.bf16.msra.mxu0 0
        %4024 = vmatprep.subr.bf16.mxu0 0
        %4025 = vmatpush1.bf16.msra.mxu0 0
        %4026 = vmatprep.subr.bf16.mxu0 0
        %4027 = vmatpush1.bf16.msra.mxu0 0
        %4028 = vmatprep.subr.bf16.mxu0 0
        %4029 = vmatpush1.bf16.msra.mxu0 0
        %4030 = vmatprep.subr.bf16.mxu0 0
        %4031 = vmatpush1.bf16.msra.mxu0 0
        %4032 = vmatprep.subr.bf16.mxu0 0
        %4033 = vmatpush1.bf16.msra.mxu0 0
        %4034 = vmatprep.subr.bf16.mxu0 0
        %4035 = vmatpush1.bf16.msra.mxu0 0
        %4036 = vmatprep.subr.bf16.mxu0 0
        %4037 = vmatpush1.bf16.msra.mxu0 0
        %4038 = vmatprep.mubr.bf16.mxu0 0
        %4039 = vmatmul.mubr.bf16.gmra.mrb[0].mxu0 %v3641
        %v4040 = vpop.f32.mrb[0].mxu0
        %v4041 = vadd.f32 %v3608, %v4040
        %v4042 = vpop.f32.mrb[0].mxu0
        %v4043 = vadd.f32 %v3612, %v4042
        %v4044 = vpop.f32.mrb[0].mxu0
        %v4045 = vadd.f32 %v3608, %v4044
        %v4046 = vpop.f32.mrb[0].mxu0
        %v4047 = vadd.f32 %v3612, %v4046
        %4048 = vdwg.mxu0
        %4049 = vmatprep.subr.bf16.mxu0 %v3840
        %4050 = vmatpush1.bf16.msra.mxu0 %v3839
        %4051 = vmatprep.subr.bf16.mxu0 %v3848
        %4052 = vmatpush1.bf16.msra.mxu0 %v3847
        %4053 = vmatprep.subr.bf16.mxu0 %v3856
        %4054 = vmatpush1.bf16.msra.mxu0 %v3855
        %4055 = vmatprep.subr.bf16.mxu0 %v3864
        %4056 = vmatpush1.bf16.msra.mxu0 %v3863
        %4057 = vmatprep.subr.bf16.mxu0 %v3872
        %4058 = vmatpush1.bf16.msra.mxu0 %v3871
        %4059 = vmatprep.subr.bf16.mxu0 %v3880
        %4060 = vmatpush1.bf16.msra.mxu0 %v3879
        %4061 = vmatprep.subr.bf16.mxu0 %v3888
        %4062 = vmatpush1.bf16.msra.mxu0 %v3887
        %4063 = vmatprep.subr.bf16.mxu0 %v3896
        %4064 = vmatpush1.bf16.msra.mxu0 %v3895
        %4065 = vmatprep.subr.bf16.mxu0 0
        %4066 = vmatpush1.bf16.msra.mxu0 0
        %4067 = vmatprep.subr.bf16.mxu0 0
        %4068 = vmatpush1.bf16.msra.mxu0 0
        %4069 = vmatprep.subr.bf16.mxu0 0
        %4070 = vmatpush1.bf16.msra.mxu0 0
        %4071 = vmatprep.subr.bf16.mxu0 0
        %4072 = vmatpush1.bf16.msra.mxu0 0
        %4073 = vmatprep.subr.bf16.mxu0 0
        %4074 = vmatpush1.bf16.msra.mxu0 0
        %4075 = vmatprep.subr.bf16.mxu0 0
        %4076 = vmatpush1.bf16.msra.mxu0 0
        %4077 = vmatprep.subr.bf16.mxu0 0
        %4078 = vmatpush1.bf16.msra.mxu0 0
        %4079 = vmatprep.subr.bf16.mxu0 0
        %4080 = vmatpush1.bf16.msra.mxu0 0
        %4081 = vmatprep.mubr.bf16.mxu0 0
        %4082 = vmatmul.mubr.bf16.gmra.mrb[0].mxu0 %v3641
        %v4083 = vpop.f32.mrb[0].mxu0
        %v4084 = vadd.f32 %v3616, %v4083
        %v4085 = vpop.f32.mrb[0].mxu0
        %v4086 = vadd.f32 %v3620, %v4085
        %v4087 = vpop.f32.mrb[0].mxu0
        %v4088 = vadd.f32 %v3616, %v4087
        %v4089 = vpop.f32.mrb[0].mxu0
        %v4090 = vadd.f32 %v3620, %v4089
        %4091 = vdwg.mxu0
        %4092 = vmatprep.subr.bf16.mxu0 %v3842
        %4093 = vmatpush1.bf16.msra.mxu0 %v3841
        %4094 = vmatprep.subr.bf16.mxu0 %v3850
        %4095 = vmatpush1.bf16.msra.mxu0 %v3849
        %4096 = vmatprep.subr.bf16.mxu0 %v3858
        %4097 = vmatpush1.bf16.msra.mxu0 %v3857
        %4098 = vmatprep.subr.bf16.mxu0 %v3866
        %4099 = vmatpush1.bf16.msra.mxu0 %v3865
        %4100 = vmatprep.subr.bf16.mxu0 %v3874
        %4101 = vmatpush1.bf16.msra.mxu0 %v3873
        %4102 = vmatprep.subr.bf16.mxu0 %v3882
        %4103 = vmatpush1.bf16.msra.mxu0 %v3881
        %4104 = vmatprep.subr.bf16.mxu0 %v3890
        %4105 = vmatpush1.bf16.msra.mxu0 %v3889
        %4106 = vmatprep.subr.bf16.mxu0 %v3898
        %4107 = vmatpush1.bf16.msra.mxu0 %v3897
        %4108 = vmatprep.subr.bf16.mxu0 0
        %4109 = vmatpush1.bf16.msra.mxu0 0
        %4110 = vmatprep.subr.bf16.mxu0 0
        %4111 = vmatpush1.bf16.msra.mxu0 0
        %4112 = vmatprep.subr.bf16.mxu0 0
        %4113 = vmatpush1.bf16.msra.mxu0 0
        %4114 = vmatprep.subr.bf16.mxu0 0
        %4115 = vmatpush1.bf16.msra.mxu0 0
        %4116 = vmatprep.subr.bf16.mxu0 0
        %4117 = vmatpush1.bf16.msra.mxu0 0
        %4118 = vmatprep.subr.bf16.mxu0 0
        %4119 = vmatpush1.bf16.msra.mxu0 0
        %4120 = vmatprep.subr.bf16.mxu0 0
        %4121 = vmatpush1.bf16.msra.mxu0 0
        %4122 = vmatprep.subr.bf16.mxu0 0
        %4123 = vmatpush1.bf16.msra.mxu0 0
        %4124 = vmatprep.mubr.bf16.mxu0 0
        %4125 = vmatmul.mubr.bf16.gmra.mrb[0].mxu0 %v3641
        %v4126 = vpop.f32.mrb[0].mxu0
        %v4127 = vadd.f32 %v3624, %v4126
        %v4128 = vpop.f32.mrb[0].mxu0
        %v4129 = vadd.f32 %v3628, %v4128
        %v4130 = vpop.f32.mrb[0].mxu0
        %v4131 = vadd.f32 %v3624, %v4130
        %v4132 = vpop.f32.mrb[0].mxu0
        %v4133 = vadd.f32 %v3628, %v4132
        %4134 = vdwg.mxu0
        %v4135 = vmax.f32 %v3576, %v3998
        %v4136 = vmax.f32 %v3577, %v4000
        %v4137 = vmax.f32 %v3578, %v4041
        %v4138 = vmax.f32 %v3579, %v4043
        %v4139 = vmax.f32 %v3580, %v4084
        %v4140 = vmax.f32 %v3581, %v4086
        %v4141 = vmax.f32 %v3582, %v4127
        %v4142 = vmax.f32 %v3583, %v4129
        %v4143 = vmax.f32 %v3584, %v4002
        %v4144 = vmax.f32 %v3585, %v4004
        %v4145 = vmax.f32 %v3586, %v4045
        %v4146 = vmax.f32 %v3587, %v4047
        %v4147 = vmax.f32 %v3588, %v4088
        %v4148 = vmax.f32 %v3589, %v4090
        %v4149 = vmax.f32 %v3590, %v4131
        %v4150 = vmax.f32 %v3591, %v4133
        %4151 = vst [vmem:[#allocation2] sm:$0xff] %v4135
        %4152 = vst [vmem:[#allocation2 + $0x8] sm:$0xff] %v4136
        %4153 = vst [vmem:[#allocation2 + $0x10] sm:$0xff] %v4137
        %4154 = vst [vmem:[#allocation2 + $0x18] sm:$0xff] %v4138
        %4155 = vst [vmem:[#allocation2 + $0x20] sm:$0xff] %v4139
        %4156 = vst [vmem:[#allocation2 + $0x28] sm:$0xff] %v4140
        %4157 = vst [vmem:[#allocation2 + $0x30] sm:$0xff] %v4141
        %4158 = vst [vmem:[#allocation2 + $0x38] sm:$0xff] %v4142
        %4159 = vst [vmem:[#allocation2 + $0x40] sm:$0xff] %v4143
        %4160 = vst [vmem:[#allocation2 + $0x48] sm:$0xff] %v4144
        %4161 = vst [vmem:[#allocation2 + $0x50] sm:$0xff] %v4145
        %4162 = vst [vmem:[#allocation2 + $0x58] sm:$0xff] %v4146
        %4163 = vst [vmem:[#allocation2 + $0x60] sm:$0xff] %v4147
        %4164 = vst [vmem:[#allocation2 + $0x68] sm:$0xff] %v4148
        %4165 = vst [vmem:[#allocation2 + $0x70] sm:$0xff] %v4149
        %4166 = vst [vmem:[#allocation2 + $0x78] sm:$0xff] %v4150
        %s4167 = scalar_lea.vmem [#allocation3], 112
        %v4168 = vld [vmem:[%s4167] sm:$0xf]
        %v4169 = vld [vmem:[%s4167 + $0x4] sm:$0xf]
        %v4170 = vld [vmem:[%s273] sm:$0xff]
        %v4171 = vld [vmem:[%s273 + $0x8] sm:$0xff]
        %v4172 = vld [vmem:[%s273 + $0x10] sm:$0xff]
        %v4173 = vld [vmem:[%s273 + $0x18] sm:$0xff]
        %v4174 = vld [vmem:[%s273 + $0x20] sm:$0xff]
        %v4175 = vld [vmem:[%s273 + $0x28] sm:$0xff]
        %v4176 = vld [vmem:[%s273 + $0x30] sm:$0xff]
        %v4177 = vld [vmem:[%s273 + $0x38] sm:$0xff]
        %v4178 = vld [vmem:[%s273 + $0x40] sm:$0xff]
        %v4179 = vld [vmem:[%s273 + $0x48] sm:$0xff]
        %v4180 = vld [vmem:[%s273 + $0x50] sm:$0xff]
        %v4181 = vld [vmem:[%s273 + $0x58] sm:$0xff]
        %v4182 = vld [vmem:[%s273 + $0x60] sm:$0xff]
        %v4183 = vld [vmem:[%s273 + $0x68] sm:$0xff]
        %v4184 = vld [vmem:[%s273 + $0x70] sm:$0xff]
        %v4185 = vld [vmem:[%s273 + $0x78] sm:$0xff]
        %v4186 = vld [vmem:[%s273 + $0x80] sm:$0xff]
        %v4187 = vld [vmem:[%s273 + $0x88] sm:$0xff]
        %v4188 = vld [vmem:[%s273 + $0x90] sm:$0xff]
        %v4189 = vld [vmem:[%s273 + $0x98] sm:$0xff]
        %v4190 = vld [vmem:[%s273 + $0xa0] sm:$0xff]
        %v4191 = vld [vmem:[%s273 + $0xa8] sm:$0xff]
        %v4192 = vld [vmem:[%s273 + $0xb0] sm:$0xff]
        %v4193 = vld [vmem:[%s273 + $0xb8] sm:$0xff]
        %v4194 = vld [vmem:[%s273 + $0xc0] sm:$0xff]
        %v4195 = vld [vmem:[%s273 + $0xc8] sm:$0xff]
        %v4196 = vld [vmem:[%s273 + $0xd0] sm:$0xff]
        %v4197 = vld [vmem:[%s273 + $0xd8] sm:$0xff]
        %v4198 = vld [vmem:[%s273 + $0xe0] sm:$0xff]
        %v4199 = vld [vmem:[%s273 + $0xe8] sm:$0xff]
        %v4200 = vld [vmem:[%s273 + $0xf0] sm:$0xff]
        %v4201 = vld [vmem:[%s273 + $0xf8] sm:$0xff]
        %v4202 = vld [vmem:[%s273 + $0x100] sm:$0xff]
        %v4203 = vld [vmem:[%s273 + $0x108] sm:$0xff]
        %v4204 = vld [vmem:[%s273 + $0x110] sm:$0xff]
        %v4205 = vld [vmem:[%s273 + $0x118] sm:$0xff]
        %v4206 = vld [vmem:[%s273 + $0x120] sm:$0xff]
        %v4207 = vld [vmem:[%s273 + $0x128] sm:$0xff]
        %v4208 = vld [vmem:[%s273 + $0x130] sm:$0xff]
        %v4209 = vld [vmem:[%s273 + $0x138] sm:$0xff]
        %v4210 = vld [vmem:[%s273 + $0x140] sm:$0xff]
        %v4211 = vld [vmem:[%s273 + $0x148] sm:$0xff]
        %v4212 = vld [vmem:[%s273 + $0x150] sm:$0xff]
        %v4213 = vld [vmem:[%s273 + $0x158] sm:$0xff]
        %v4214 = vld [vmem:[%s273 + $0x160] sm:$0xff]
        %v4215 = vld [vmem:[%s273 + $0x168] sm:$0xff]
        %v4216 = vld [vmem:[%s273 + $0x170] sm:$0xff]
        %v4217 = vld [vmem:[%s273 + $0x178] sm:$0xff]
        %v4218 = vld [vmem:[%s273 + $0x180] sm:$0xff]
        %v4219 = vld [vmem:[%s273 + $0x188] sm:$0xff]
        %v4220 = vld [vmem:[%s273 + $0x190] sm:$0xff]
        %v4221 = vld [vmem:[%s273 + $0x198] sm:$0xff]
        %v4222 = vld [vmem:[%s273 + $0x1a0] sm:$0xff]
        %v4223 = vld [vmem:[%s273 + $0x1a8] sm:$0xff]
        %v4224 = vld [vmem:[%s273 + $0x1b0] sm:$0xff]
        %v4225 = vld [vmem:[%s273 + $0x1b8] sm:$0xff]
        %v4226 = vld [vmem:[%s273 + $0x1c0] sm:$0xff]
        %v4227 = vld [vmem:[%s273 + $0x1c8] sm:$0xff]
        %v4228 = vld [vmem:[%s273 + $0x1d0] sm:$0xff]
        %v4229 = vld [vmem:[%s273 + $0x1d8] sm:$0xff]
        %v4230 = vld [vmem:[%s273 + $0x1e0] sm:$0xff]
        %v4231 = vld [vmem:[%s273 + $0x1e8] sm:$0xff]
        %v4232 = vld [vmem:[%s273 + $0x1f0] sm:$0xff]
        %v4233 = vld [vmem:[%s273 + $0x1f8] sm:$0xff]
        %v4234 = vld [vmem:[#allocation2] sm:$0xff]
        %v4235 = vld [vmem:[#allocation2 + $0x8] sm:$0xff]
        %v4236 = vld [vmem:[#allocation2 + $0x10] sm:$0xff]
        %v4237 = vld [vmem:[#allocation2 + $0x18] sm:$0xff]
        %v4238 = vld [vmem:[#allocation2 + $0x20] sm:$0xff]
        %v4239 = vld [vmem:[#allocation2 + $0x28] sm:$0xff]
        %v4240 = vld [vmem:[#allocation2 + $0x30] sm:$0xff]
        %v4241 = vld [vmem:[#allocation2 + $0x38] sm:$0xff]
        %v4242 = vld [vmem:[#allocation2 + $0x40] sm:$0xff]
        %v4243 = vld [vmem:[#allocation2 + $0x48] sm:$0xff]
        %v4244 = vld [vmem:[#allocation2 + $0x50] sm:$0xff]
        %v4245 = vld [vmem:[#allocation2 + $0x58] sm:$0xff]
        %v4246 = vld [vmem:[#allocation2 + $0x60] sm:$0xff]
        %v4247 = vld [vmem:[#allocation2 + $0x68] sm:$0xff]
        %v4248 = vld [vmem:[#allocation2 + $0x70] sm:$0xff]
        %v4249 = vld [vmem:[#allocation2 + $0x78] sm:$0xff]
        %s4250 = scalar_lea.vmem %s291, 1 [#allocation9]
        %v4251 = vld [vmem:[%s4250] ss:$8 sm:$0xf]
        %v4252 = vld [vmem:[%s4250] ss:$8 sm:$0xf0]
        %v4253 = vor.u32 %v4251, %v4252
        %v4255 = vlaneseq
        %v4256 = vshrl.u32 %v4255, 7
        %v4257 = vsub.s32 0, %v4256
        %v4258 = vrot.slane %v4253, %v4257
        %v4259 = vlaneseq
        %v4260 = vshrl.u32 %v4259, 7
        %v4261 = vsub.s32 1, %v4260
        %v4262 = vrot.slane %v4253, %v4261
        %v4263 = vlaneseq
        %v4264 = vshrl.u32 %v4263, 7
        %v4265 = vsub.s32 2, %v4264
        %v4266 = vrot.slane %v4253, %v4265
        %v4267 = vlaneseq
        %v4268 = vshrl.u32 %v4267, 7
        %v4269 = vsub.s32 3, %v4268
        %v4270 = vrot.slane %v4253, %v4269
        %v4271 = vlaneseq
        %v4272 = vshrl.u32 %v4271, 7
        %v4273 = vsub.s32 4, %v4272
        %v4274 = vrot.slane %v4253, %v4273
        %v4275 = vlaneseq
        %v4276 = vshrl.u32 %v4275, 7
        %v4277 = vsub.s32 5, %v4276
        %v4278 = vrot.slane %v4253, %v4277
        %v4279 = vlaneseq
        %v4280 = vshrl.u32 %v4279, 7
        %v4281 = vsub.s32 6, %v4280
        %v4282 = vrot.slane %v4253, %v4281
        %v4283 = vlaneseq
        %v4284 = vshrl.u32 %v4283, 7
        %v4285 = vsub.s32 7, %v4284
        %v4286 = vrot.slane %v4253, %v4285
        %v4297 = vunpack.c.l.b16 %v4168
        %v4298 = vunpack.c.l.b16 %v4169
        %v4299 = vpack.c.b16 %v4298, %v4297
        %v4365 = vunpack.c.l.b16 %v4170
        %v4366 = vunpack.c.h.b16 %v4170
        %v4367 = vunpack.c.l.b16 %v4171
        %v4368 = vunpack.c.h.b16 %v4171
        %v4369 = vunpack.c.l.b16 %v4172
        %v4370 = vunpack.c.h.b16 %v4172
        %v4371 = vunpack.c.l.b16 %v4173
        %v4372 = vunpack.c.h.b16 %v4173
        %v4373 = vunpack.c.l.b16 %v4174
        %v4374 = vunpack.c.h.b16 %v4174
        %v4375 = vunpack.c.l.b16 %v4175
        %v4376 = vunpack.c.h.b16 %v4175
        %v4377 = vunpack.c.l.b16 %v4176
        %v4378 = vunpack.c.h.b16 %v4176
        %v4379 = vunpack.c.l.b16 %v4177
        %v4380 = vunpack.c.h.b16 %v4177
        %v4381 = vunpack.c.l.b16 %v4178
        %v4382 = vunpack.c.h.b16 %v4178
        %v4383 = vunpack.c.l.b16 %v4179
        %v4384 = vunpack.c.h.b16 %v4179
        %v4385 = vunpack.c.l.b16 %v4180
        %v4386 = vunpack.c.h.b16 %v4180
        %v4387 = vunpack.c.l.b16 %v4181
        %v4388 = vunpack.c.h.b16 %v4181
        %v4389 = vunpack.c.l.b16 %v4182
        %v4390 = vunpack.c.h.b16 %v4182
        %v4391 = vunpack.c.l.b16 %v4183
        %v4392 = vunpack.c.h.b16 %v4183
        %v4393 = vunpack.c.l.b16 %v4184
        %v4394 = vunpack.c.h.b16 %v4184
        %v4395 = vunpack.c.l.b16 %v4185
        %v4396 = vunpack.c.h.b16 %v4185
        %v4397 = vunpack.c.l.b16 %v4186
        %v4398 = vunpack.c.h.b16 %v4186
        %v4399 = vunpack.c.l.b16 %v4187
        %v4400 = vunpack.c.h.b16 %v4187
        %v4401 = vunpack.c.l.b16 %v4188
        %v4402 = vunpack.c.h.b16 %v4188
        %v4403 = vunpack.c.l.b16 %v4189
        %v4404 = vunpack.c.h.b16 %v4189
        %v4405 = vunpack.c.l.b16 %v4190
        %v4406 = vunpack.c.h.b16 %v4190
        %v4407 = vunpack.c.l.b16 %v4191
        %v4408 = vunpack.c.h.b16 %v4191
        %v4409 = vunpack.c.l.b16 %v4192
        %v4410 = vunpack.c.h.b16 %v4192
        %v4411 = vunpack.c.l.b16 %v4193
        %v4412 = vunpack.c.h.b16 %v4193
        %v4413 = vunpack.c.l.b16 %v4194
        %v4414 = vunpack.c.h.b16 %v4194
        %v4415 = vunpack.c.l.b16 %v4195
        %v4416 = vunpack.c.h.b16 %v4195
        %v4417 = vunpack.c.l.b16 %v4196
        %v4418 = vunpack.c.h.b16 %v4196
        %v4419 = vunpack.c.l.b16 %v4197
        %v4420 = vunpack.c.h.b16 %v4197
        %v4421 = vunpack.c.l.b16 %v4198
        %v4422 = vunpack.c.h.b16 %v4198
        %v4423 = vunpack.c.l.b16 %v4199
        %v4424 = vunpack.c.h.b16 %v4199
        %v4425 = vunpack.c.l.b16 %v4200
        %v4426 = vunpack.c.h.b16 %v4200
        %v4427 = vunpack.c.l.b16 %v4201
        %v4428 = vunpack.c.h.b16 %v4201
        %v4429 = vunpack.c.l.b16 %v4202
        %v4430 = vunpack.c.h.b16 %v4202
        %v4431 = vunpack.c.l.b16 %v4203
        %v4432 = vunpack.c.h.b16 %v4203
        %v4433 = vunpack.c.l.b16 %v4204
        %v4434 = vunpack.c.h.b16 %v4204
        %v4435 = vunpack.c.l.b16 %v4205
        %v4436 = vunpack.c.h.b16 %v4205
        %v4437 = vunpack.c.l.b16 %v4206
        %v4438 = vunpack.c.h.b16 %v4206
        %v4439 = vunpack.c.l.b16 %v4207
        %v4440 = vunpack.c.h.b16 %v4207
        %v4441 = vunpack.c.l.b16 %v4208
        %v4442 = vunpack.c.h.b16 %v4208
        %v4443 = vunpack.c.l.b16 %v4209
        %v4444 = vunpack.c.h.b16 %v4209
        %v4445 = vunpack.c.l.b16 %v4210
        %v4446 = vunpack.c.h.b16 %v4210
        %v4447 = vunpack.c.l.b16 %v4211
        %v4448 = vunpack.c.h.b16 %v4211
        %v4449 = vunpack.c.l.b16 %v4212
        %v4450 = vunpack.c.h.b16 %v4212
        %v4451 = vunpack.c.l.b16 %v4213
        %v4452 = vunpack.c.h.b16 %v4213
        %v4453 = vunpack.c.l.b16 %v4214
        %v4454 = vunpack.c.h.b16 %v4214
        %v4455 = vunpack.c.l.b16 %v4215
        %v4456 = vunpack.c.h.b16 %v4215
        %v4457 = vunpack.c.l.b16 %v4216
        %v4458 = vunpack.c.h.b16 %v4216
        %v4459 = vunpack.c.l.b16 %v4217
        %v4460 = vunpack.c.h.b16 %v4217
        %v4461 = vunpack.c.l.b16 %v4218
        %v4462 = vunpack.c.h.b16 %v4218
        %v4463 = vunpack.c.l.b16 %v4219
        %v4464 = vunpack.c.h.b16 %v4219
        %v4465 = vunpack.c.l.b16 %v4220
        %v4466 = vunpack.c.h.b16 %v4220
        %v4467 = vunpack.c.l.b16 %v4221
        %v4468 = vunpack.c.h.b16 %v4221
        %v4469 = vunpack.c.l.b16 %v4222
        %v4470 = vunpack.c.h.b16 %v4222
        %v4471 = vunpack.c.l.b16 %v4223
        %v4472 = vunpack.c.h.b16 %v4223
        %v4473 = vunpack.c.l.b16 %v4224
        %v4474 = vunpack.c.h.b16 %v4224
        %v4475 = vunpack.c.l.b16 %v4225
        %v4476 = vunpack.c.h.b16 %v4225
        %v4477 = vunpack.c.l.b16 %v4226
        %v4478 = vunpack.c.h.b16 %v4226
        %v4479 = vunpack.c.l.b16 %v4227
        %v4480 = vunpack.c.h.b16 %v4227
        %v4481 = vunpack.c.l.b16 %v4228
        %v4482 = vunpack.c.h.b16 %v4228
        %v4483 = vunpack.c.l.b16 %v4229
        %v4484 = vunpack.c.h.b16 %v4229
        %v4485 = vunpack.c.l.b16 %v4230
        %v4486 = vunpack.c.h.b16 %v4230
        %v4487 = vunpack.c.l.b16 %v4231
        %v4488 = vunpack.c.h.b16 %v4231
        %v4489 = vunpack.c.l.b16 %v4232
        %v4490 = vunpack.c.h.b16 %v4232
        %v4491 = vunpack.c.l.b16 %v4233
        %v4492 = vunpack.c.h.b16 %v4233
        %v4493 = vpack.c.b16 %v4373, %v4365
        %v4494 = vpack.c.b16 %v4374, %v4366
        %v4495 = vpack.c.b16 %v4375, %v4367
        %v4496 = vpack.c.b16 %v4376, %v4368
        %v4497 = vpack.c.b16 %v4377, %v4369
        %v4498 = vpack.c.b16 %v4378, %v4370
        %v4499 = vpack.c.b16 %v4379, %v4371
        %v4500 = vpack.c.b16 %v4380, %v4372
        %v4501 = vpack.c.b16 %v4389, %v4381
        %v4502 = vpack.c.b16 %v4390, %v4382
        %v4503 = vpack.c.b16 %v4391, %v4383
        %v4504 = vpack.c.b16 %v4392, %v4384
        %v4505 = vpack.c.b16 %v4393, %v4385
        %v4506 = vpack.c.b16 %v4394, %v4386
        %v4507 = vpack.c.b16 %v4395, %v4387
        %v4508 = vpack.c.b16 %v4396, %v4388
        %v4509 = vpack.c.b16 %v4405, %v4397
        %v4510 = vpack.c.b16 %v4406, %v4398
        %v4511 = vpack.c.b16 %v4407, %v4399
        %v4512 = vpack.c.b16 %v4408, %v4400
        %v4513 = vpack.c.b16 %v4409, %v4401
        %v4514 = vpack.c.b16 %v4410, %v4402
        %v4515 = vpack.c.b16 %v4411, %v4403
        %v4516 = vpack.c.b16 %v4412, %v4404
        %v4517 = vpack.c.b16 %v4421, %v4413
        %v4518 = vpack.c.b16 %v4422, %v4414
        %v4519 = vpack.c.b16 %v4423, %v4415
        %v4520 = vpack.c.b16 %v4424, %v4416
        %v4521 = vpack.c.b16 %v4425, %v4417
        %v4522 = vpack.c.b16 %v4426, %v4418
        %v4523 = vpack.c.b16 %v4427, %v4419
        %v4524 = vpack.c.b16 %v4428, %v4420
        %v4525 = vpack.c.b16 %v4437, %v4429
        %v4526 = vpack.c.b16 %v4438, %v4430
        %v4527 = vpack.c.b16 %v4439, %v4431
        %v4528 = vpack.c.b16 %v4440, %v4432
        %v4529 = vpack.c.b16 %v4441, %v4433
        %v4530 = vpack.c.b16 %v4442, %v4434
        %v4531 = vpack.c.b16 %v4443, %v4435
        %v4532 = vpack.c.b16 %v4444, %v4436
        %v4533 = vpack.c.b16 %v4453, %v4445
        %v4534 = vpack.c.b16 %v4454, %v4446
        %v4535 = vpack.c.b16 %v4455, %v4447
        %v4536 = vpack.c.b16 %v4456, %v4448
        %v4537 = vpack.c.b16 %v4457, %v4449
        %v4538 = vpack.c.b16 %v4458, %v4450
        %v4539 = vpack.c.b16 %v4459, %v4451
        %v4540 = vpack.c.b16 %v4460, %v4452
        %v4541 = vpack.c.b16 %v4469, %v4461
        %v4542 = vpack.c.b16 %v4470, %v4462
        %v4543 = vpack.c.b16 %v4471, %v4463
        %v4544 = vpack.c.b16 %v4472, %v4464
        %v4545 = vpack.c.b16 %v4473, %v4465
        %v4546 = vpack.c.b16 %v4474, %v4466
        %v4547 = vpack.c.b16 %v4475, %v4467
        %v4548 = vpack.c.b16 %v4476, %v4468
        %v4549 = vpack.c.b16 %v4485, %v4477
        %v4550 = vpack.c.b16 %v4486, %v4478
        %v4551 = vpack.c.b16 %v4487, %v4479
        %v4552 = vpack.c.b16 %v4488, %v4480
        %v4553 = vpack.c.b16 %v4489, %v4481
        %v4554 = vpack.c.b16 %v4490, %v4482
        %v4555 = vpack.c.b16 %v4491, %v4483
        %v4556 = vpack.c.b16 %v4492, %v4484
        %4621 = vmatprep.subr.bf16.mxu0 %v4494
        %4622 = vmatpush1.bf16.msra.mxu0 %v4493
        %4623 = vmatprep.subr.bf16.mxu0 %v4502
        %4624 = vmatpush1.bf16.msra.mxu0 %v4501
        %4625 = vmatprep.subr.bf16.mxu0 %v4510
        %4626 = vmatpush1.bf16.msra.mxu0 %v4509
        %4627 = vmatprep.subr.bf16.mxu0 %v4518
        %4628 = vmatpush1.bf16.msra.mxu0 %v4517
        %4629 = vmatprep.subr.bf16.mxu0 %v4526
        %4630 = vmatpush1.bf16.msra.mxu0 %v4525
        %4631 = vmatprep.subr.bf16.mxu0 %v4534
        %4632 = vmatpush1.bf16.msra.mxu0 %v4533
        %4633 = vmatprep.subr.bf16.mxu0 %v4542
        %4634 = vmatpush1.bf16.msra.mxu0 %v4541
        %4635 = vmatprep.subr.bf16.mxu0 %v4550
        %4636 = vmatpush1.bf16.msra.mxu0 %v4549
        %4637 = vmatprep.subr.bf16.mxu0 0
        %4638 = vmatpush1.bf16.msra.mxu0 0
        %4639 = vmatprep.subr.bf16.mxu0 0
        %4640 = vmatpush1.bf16.msra.mxu0 0
        %4641 = vmatprep.subr.bf16.mxu0 0
        %4642 = vmatpush1.bf16.msra.mxu0 0
        %4643 = vmatprep.subr.bf16.mxu0 0
        %4644 = vmatpush1.bf16.msra.mxu0 0
        %4645 = vmatprep.subr.bf16.mxu0 0
        %4646 = vmatpush1.bf16.msra.mxu0 0
        %4647 = vmatprep.subr.bf16.mxu0 0
        %4648 = vmatpush1.bf16.msra.mxu0 0
        %4649 = vmatprep.subr.bf16.mxu0 0
        %4650 = vmatpush1.bf16.msra.mxu0 0
        %4651 = vmatprep.subr.bf16.mxu0 0
        %4652 = vmatpush1.bf16.msra.mxu0 0
        %4653 = vmatprep.mubr.bf16.mxu0 0
        %4654 = vmatmul.mubr.bf16.gmra.mrb[0].mxu0 %v4299
        %v4655 = vpop.f32.mrb[0].mxu0
        %v4656 = vadd.f32 %v4258, %v4655
        %v4657 = vpop.f32.mrb[0].mxu0
        %v4658 = vadd.f32 %v4262, %v4657
        %v4659 = vpop.f32.mrb[0].mxu0
        %v4660 = vadd.f32 %v4258, %v4659
        %v4661 = vpop.f32.mrb[0].mxu0
        %v4662 = vadd.f32 %v4262, %v4661
        %4663 = vdwg.mxu0
        %4664 = vmatprep.subr.bf16.mxu0 %v4496
        %4665 = vmatpush1.bf16.msra.mxu0 %v4495
        %4666 = vmatprep.subr.bf16.mxu0 %v4504
        %4667 = vmatpush1.bf16.msra.mxu0 %v4503
        %4668 = vmatprep.subr.bf16.mxu0 %v4512
        %4669 = vmatpush1.bf16.msra.mxu0 %v4511
        %4670 = vmatprep.subr.bf16.mxu0 %v4520
        %4671 = vmatpush1.bf16.msra.mxu0 %v4519
        %4672 = vmatprep.subr.bf16.mxu0 %v4528
        %4673 = vmatpush1.bf16.msra.mxu0 %v4527
        %4674 = vmatprep.subr.bf16.mxu0 %v4536
        %4675 = vmatpush1.bf16.msra.mxu0 %v4535
        %4676 = vmatprep.subr.bf16.mxu0 %v4544
        %4677 = vmatpush1.bf16.msra.mxu0 %v4543
        %4678 = vmatprep.subr.bf16.mxu0 %v4552
        %4679 = vmatpush1.bf16.msra.mxu0 %v4551
        %4680 = vmatprep.subr.bf16.mxu0 0
        %4681 = vmatpush1.bf16.msra.mxu0 0
        %4682 = vmatprep.subr.bf16.mxu0 0
        %4683 = vmatpush1.bf16.msra.mxu0 0
        %4684 = vmatprep.subr.bf16.mxu0 0
        %4685 = vmatpush1.bf16.msra.mxu0 0
        %4686 = vmatprep.subr.bf16.mxu0 0
        %4687 = vmatpush1.bf16.msra.mxu0 0
        %4688 = vmatprep.subr.bf16.mxu0 0
        %4689 = vmatpush1.bf16.msra.mxu0 0
        %4690 = vmatprep.subr.bf16.mxu0 0
        %4691 = vmatpush1.bf16.msra.mxu0 0
        %4692 = vmatprep.subr.bf16.mxu0 0
        %4693 = vmatpush1.bf16.msra.mxu0 0
        %4694 = vmatprep.subr.bf16.mxu0 0
        %4695 = vmatpush1.bf16.msra.mxu0 0
        %4696 = vmatprep.mubr.bf16.mxu0 0
        %4697 = vmatmul.mubr.bf16.gmra.mrb[0].mxu0 %v4299
        %v4698 = vpop.f32.mrb[0].mxu0
        %v4699 = vadd.f32 %v4266, %v4698
        %v4700 = vpop.f32.mrb[0].mxu0
        %v4701 = vadd.f32 %v4270, %v4700
        %v4702 = vpop.f32.mrb[0].mxu0
        %v4703 = vadd.f32 %v4266, %v4702
        %v4704 = vpop.f32.mrb[0].mxu0
        %v4705 = vadd.f32 %v4270, %v4704
        %4706 = vdwg.mxu0
        %4707 = vmatprep.subr.bf16.mxu0 %v4498
        %4708 = vmatpush1.bf16.msra.mxu0 %v4497
        %4709 = vmatprep.subr.bf16.mxu0 %v4506
        %4710 = vmatpush1.bf16.msra.mxu0 %v4505
        %4711 = vmatprep.subr.bf16.mxu0 %v4514
        %4712 = vmatpush1.bf16.msra.mxu0 %v4513
        %4713 = vmatprep.subr.bf16.mxu0 %v4522
        %4714 = vmatpush1.bf16.msra.mxu0 %v4521
        %4715 = vmatprep.subr.bf16.mxu0 %v4530
        %4716 = vmatpush1.bf16.msra.mxu0 %v4529
        %4717 = vmatprep.subr.bf16.mxu0 %v4538
        %4718 = vmatpush1.bf16.msra.mxu0 %v4537
        %4719 = vmatprep.subr.bf16.mxu0 %v4546
        %4720 = vmatpush1.bf16.msra.mxu0 %v4545
        %4721 = vmatprep.subr.bf16.mxu0 %v4554
        %4722 = vmatpush1.bf16.msra.mxu0 %v4553
        %4723 = vmatprep.subr.bf16.mxu0 0
        %4724 = vmatpush1.bf16.msra.mxu0 0
        %4725 = vmatprep.subr.bf16.mxu0 0
        %4726 = vmatpush1.bf16.msra.mxu0 0
        %4727 = vmatprep.subr.bf16.mxu0 0
        %4728 = vmatpush1.bf16.msra.mxu0 0
        %4729 = vmatprep.subr.bf16.mxu0 0
        %4730 = vmatpush1.bf16.msra.mxu0 0
        %4731 = vmatprep.subr.bf16.mxu0 0
        %4732 = vmatpush1.bf16.msra.mxu0 0
        %4733 = vmatprep.subr.bf16.mxu0 0
        %4734 = vmatpush1.bf16.msra.mxu0 0
        %4735 = vmatprep.subr.bf16.mxu0 0
        %4736 = vmatpush1.bf16.msra.mxu0 0
        %4737 = vmatprep.subr.bf16.mxu0 0
        %4738 = vmatpush1.bf16.msra.mxu0 0
        %4739 = vmatprep.mubr.bf16.mxu0 0
        %4740 = vmatmul.mubr.bf16.gmra.mrb[0].mxu0 %v4299
        %v4741 = vpop.f32.mrb[0].mxu0
        %v4742 = vadd.f32 %v4274, %v4741
        %v4743 = vpop.f32.mrb[0].mxu0
        %v4744 = vadd.f32 %v4278, %v4743
        %v4745 = vpop.f32.mrb[0].mxu0
        %v4746 = vadd.f32 %v4274, %v4745
        %v4747 = vpop.f32.mrb[0].mxu0
        %v4748 = vadd.f32 %v4278, %v4747
        %4749 = vdwg.mxu0
        %4750 = vmatprep.subr.bf16.mxu0 %v4500
        %4751 = vmatpush1.bf16.msra.mxu0 %v4499
        %4752 = vmatprep.subr.bf16.mxu0 %v4508
        %4753 = vmatpush1.bf16.msra.mxu0 %v4507
        %4754 = vmatprep.subr.bf16.mxu0 %v4516
        %4755 = vmatpush1.bf16.msra.mxu0 %v4515
        %4756 = vmatprep.subr.bf16.mxu0 %v4524
        %4757 = vmatpush1.bf16.msra.mxu0 %v4523
        %4758 = vmatprep.subr.bf16.mxu0 %v4532
        %4759 = vmatpush1.bf16.msra.mxu0 %v4531
        %4760 = vmatprep.subr.bf16.mxu0 %v4540
        %4761 = vmatpush1.bf16.msra.mxu0 %v4539
        %4762 = vmatprep.subr.bf16.mxu0 %v4548
        %4763 = vmatpush1.bf16.msra.mxu0 %v4547
        %4764 = vmatprep.subr.bf16.mxu0 %v4556
        %4765 = vmatpush1.bf16.msra.mxu0 %v4555
        %4766 = vmatprep.subr.bf16.mxu0 0
        %4767 = vmatpush1.bf16.msra.mxu0 0
        %4768 = vmatprep.subr.bf16.mxu0 0
        %4769 = vmatpush1.bf16.msra.mxu0 0
        %4770 = vmatprep.subr.bf16.mxu0 0
        %4771 = vmatpush1.bf16.msra.mxu0 0
        %4772 = vmatprep.subr.bf16.mxu0 0
        %4773 = vmatpush1.bf16.msra.mxu0 0
        %4774 = vmatprep.subr.bf16.mxu0 0
        %4775 = vmatpush1.bf16.msra.mxu0 0
        %4776 = vmatprep.subr.bf16.mxu0 0
        %4777 = vmatpush1.bf16.msra.mxu0 0
        %4778 = vmatprep.subr.bf16.mxu0 0
        %4779 = vmatpush1.bf16.msra.mxu0 0
        %4780 = vmatprep.subr.bf16.mxu0 0
        %4781 = vmatpush1.bf16.msra.mxu0 0
        %4782 = vmatprep.mubr.bf16.mxu0 0
        %4783 = vmatmul.mubr.bf16.gmra.mrb[0].mxu0 %v4299
        %v4784 = vpop.f32.mrb[0].mxu0
        %v4785 = vadd.f32 %v4282, %v4784
        %v4786 = vpop.f32.mrb[0].mxu0
        %v4787 = vadd.f32 %v4286, %v4786
        %v4788 = vpop.f32.mrb[0].mxu0
        %v4789 = vadd.f32 %v4282, %v4788
        %v4790 = vpop.f32.mrb[0].mxu0
        %v4791 = vadd.f32 %v4286, %v4790
        %4792 = vdwg.mxu0
        %v4793 = vmax.f32 %v4234, %v4656
        %v4794 = vmax.f32 %v4235, %v4658
        %v4795 = vmax.f32 %v4236, %v4699
        %v4796 = vmax.f32 %v4237, %v4701
        %v4797 = vmax.f32 %v4238, %v4742
        %v4798 = vmax.f32 %v4239, %v4744
        %v4799 = vmax.f32 %v4240, %v4785
        %v4800 = vmax.f32 %v4241, %v4787
        %v4801 = vmax.f32 %v4242, %v4660
        %v4802 = vmax.f32 %v4243, %v4662
        %v4803 = vmax.f32 %v4244, %v4703
        %v4804 = vmax.f32 %v4245, %v4705
        %v4805 = vmax.f32 %v4246, %v4746
        %v4806 = vmax.f32 %v4247, %v4748
        %v4807 = vmax.f32 %v4248, %v4789
        %v4808 = vmax.f32 %v4249, %v4791
        %4809 = vst [vmem:[#allocation2] sm:$0xff] %v4793
        %4810 = vst [vmem:[#allocation2 + $0x8] sm:$0xff] %v4794
        %4811 = vst [vmem:[#allocation2 + $0x10] sm:$0xff] %v4795
        %4812 = vst [vmem:[#allocation2 + $0x18] sm:$0xff] %v4796
        %4813 = vst [vmem:[#allocation2 + $0x20] sm:$0xff] %v4797
        %4814 = vst [vmem:[#allocation2 + $0x28] sm:$0xff] %v4798
        %4815 = vst [vmem:[#allocation2 + $0x30] sm:$0xff] %v4799
        %4816 = vst [vmem:[#allocation2 + $0x38] sm:$0xff] %v4800
        %4817 = vst [vmem:[#allocation2 + $0x40] sm:$0xff] %v4801
        %4818 = vst [vmem:[#allocation2 + $0x48] sm:$0xff] %v4802
        %4819 = vst [vmem:[#allocation2 + $0x50] sm:$0xff] %v4803
        %4820 = vst [vmem:[#allocation2 + $0x58] sm:$0xff] %v4804
        %4821 = vst [vmem:[#allocation2 + $0x60] sm:$0xff] %v4805
        %4822 = vst [vmem:[#allocation2 + $0x68] sm:$0xff] %v4806
        %4823 = vst [vmem:[#allocation2 + $0x70] sm:$0xff] %v4807
        %4824 = vst [vmem:[#allocation2 + $0x78] sm:$0xff] %v4808
        %s4825 = scalar_lea.vmem [#allocation3], 120
        %v4826 = vld [vmem:[%s4825] sm:$0xf]
        %v4827 = vld [vmem:[%s4825 + $0x4] sm:$0xf]
        %v4828 = vld [vmem:[%s273] sm:$0xff]
        %v4829 = vld [vmem:[%s273 + $0x8] sm:$0xff]
        %v4830 = vld [vmem:[%s273 + $0x10] sm:$0xff]
        %v4831 = vld [vmem:[%s273 + $0x18] sm:$0xff]
        %v4832 = vld [vmem:[%s273 + $0x20] sm:$0xff]
        %v4833 = vld [vmem:[%s273 + $0x28] sm:$0xff]
        %v4834 = vld [vmem:[%s273 + $0x30] sm:$0xff]
        %v4835 = vld [vmem:[%s273 + $0x38] sm:$0xff]
        %v4836 = vld [vmem:[%s273 + $0x40] sm:$0xff]
        %v4837 = vld [vmem:[%s273 + $0x48] sm:$0xff]
        %v4838 = vld [vmem:[%s273 + $0x50] sm:$0xff]
        %v4839 = vld [vmem:[%s273 + $0x58] sm:$0xff]
        %v4840 = vld [vmem:[%s273 + $0x60] sm:$0xff]
        %v4841 = vld [vmem:[%s273 + $0x68] sm:$0xff]
        %v4842 = vld [vmem:[%s273 + $0x70] sm:$0xff]
        %v4843 = vld [vmem:[%s273 + $0x78] sm:$0xff]
        %v4844 = vld [vmem:[%s273 + $0x80] sm:$0xff]
        %v4845 = vld [vmem:[%s273 + $0x88] sm:$0xff]
        %v4846 = vld [vmem:[%s273 + $0x90] sm:$0xff]
        %v4847 = vld [vmem:[%s273 + $0x98] sm:$0xff]
        %v4848 = vld [vmem:[%s273 + $0xa0] sm:$0xff]
        %v4849 = vld [vmem:[%s273 + $0xa8] sm:$0xff]
        %v4850 = vld [vmem:[%s273 + $0xb0] sm:$0xff]
        %v4851 = vld [vmem:[%s273 + $0xb8] sm:$0xff]
        %v4852 = vld [vmem:[%s273 + $0xc0] sm:$0xff]
        %v4853 = vld [vmem:[%s273 + $0xc8] sm:$0xff]
        %v4854 = vld [vmem:[%s273 + $0xd0] sm:$0xff]
        %v4855 = vld [vmem:[%s273 + $0xd8] sm:$0xff]
        %v4856 = vld [vmem:[%s273 + $0xe0] sm:$0xff]
        %v4857 = vld [vmem:[%s273 + $0xe8] sm:$0xff]
        %v4858 = vld [vmem:[%s273 + $0xf0] sm:$0xff]
        %v4859 = vld [vmem:[%s273 + $0xf8] sm:$0xff]
        %v4860 = vld [vmem:[%s273 + $0x100] sm:$0xff]
        %v4861 = vld [vmem:[%s273 + $0x108] sm:$0xff]
        %v4862 = vld [vmem:[%s273 + $0x110] sm:$0xff]
        %v4863 = vld [vmem:[%s273 + $0x118] sm:$0xff]
        %v4864 = vld [vmem:[%s273 + $0x120] sm:$0xff]
        %v4865 = vld [vmem:[%s273 + $0x128] sm:$0xff]
        %v4866 = vld [vmem:[%s273 + $0x130] sm:$0xff]
        %v4867 = vld [vmem:[%s273 + $0x138] sm:$0xff]
        %v4868 = vld [vmem:[%s273 + $0x140] sm:$0xff]
        %v4869 = vld [vmem:[%s273 + $0x148] sm:$0xff]
        %v4870 = vld [vmem:[%s273 + $0x150] sm:$0xff]
        %v4871 = vld [vmem:[%s273 + $0x158] sm:$0xff]
        %v4872 = vld [vmem:[%s273 + $0x160] sm:$0xff]
        %v4873 = vld [vmem:[%s273 + $0x168] sm:$0xff]
        %v4874 = vld [vmem:[%s273 + $0x170] sm:$0xff]
        %v4875 = vld [vmem:[%s273 + $0x178] sm:$0xff]
        %v4876 = vld [vmem:[%s273 + $0x180] sm:$0xff]
        %v4877 = vld [vmem:[%s273 + $0x188] sm:$0xff]
        %v4878 = vld [vmem:[%s273 + $0x190] sm:$0xff]
        %v4879 = vld [vmem:[%s273 + $0x198] sm:$0xff]
        %v4880 = vld [vmem:[%s273 + $0x1a0] sm:$0xff]
        %v4881 = vld [vmem:[%s273 + $0x1a8] sm:$0xff]
        %v4882 = vld [vmem:[%s273 + $0x1b0] sm:$0xff]
        %v4883 = vld [vmem:[%s273 + $0x1b8] sm:$0xff]
        %v4884 = vld [vmem:[%s273 + $0x1c0] sm:$0xff]
        %v4885 = vld [vmem:[%s273 + $0x1c8] sm:$0xff]
        %v4886 = vld [vmem:[%s273 + $0x1d0] sm:$0xff]
        %v4887 = vld [vmem:[%s273 + $0x1d8] sm:$0xff]
        %v4888 = vld [vmem:[%s273 + $0x1e0] sm:$0xff]
        %v4889 = vld [vmem:[%s273 + $0x1e8] sm:$0xff]
        %v4890 = vld [vmem:[%s273 + $0x1f0] sm:$0xff]
        %v4891 = vld [vmem:[%s273 + $0x1f8] sm:$0xff]
        %v4892 = vld [vmem:[#allocation2] sm:$0xff]
        %v4893 = vld [vmem:[#allocation2 + $0x8] sm:$0xff]
        %v4894 = vld [vmem:[#allocation2 + $0x10] sm:$0xff]
        %v4895 = vld [vmem:[#allocation2 + $0x18] sm:$0xff]
        %v4896 = vld [vmem:[#allocation2 + $0x20] sm:$0xff]
        %v4897 = vld [vmem:[#allocation2 + $0x28] sm:$0xff]
        %v4898 = vld [vmem:[#allocation2 + $0x30] sm:$0xff]
        %v4899 = vld [vmem:[#allocation2 + $0x38] sm:$0xff]
        %v4900 = vld [vmem:[#allocation2 + $0x40] sm:$0xff]
        %v4901 = vld [vmem:[#allocation2 + $0x48] sm:$0xff]
        %v4902 = vld [vmem:[#allocation2 + $0x50] sm:$0xff]
        %v4903 = vld [vmem:[#allocation2 + $0x58] sm:$0xff]
        %v4904 = vld [vmem:[#allocation2 + $0x60] sm:$0xff]
        %v4905 = vld [vmem:[#allocation2 + $0x68] sm:$0xff]
        %v4906 = vld [vmem:[#allocation2 + $0x70] sm:$0xff]
        %v4907 = vld [vmem:[#allocation2 + $0x78] sm:$0xff]
        %v4908 = vld [vmem:[%s291] ss:$8 sm:$0xf]
        %v4909 = vld [vmem:[%s291] ss:$8 sm:$0xf0]
        %v4910 = vor.u32 %v4908, %v4909
        %v4912 = vlaneseq
        %v4913 = vshrl.u32 %v4912, 7
        %v4914 = vsub.s32 0, %v4913
        %v4915 = vrot.slane %v4910, %v4914
        %v4916 = vlaneseq
        %v4917 = vshrl.u32 %v4916, 7
        %v4918 = vsub.s32 1, %v4917
        %v4919 = vrot.slane %v4910, %v4918
        %v4920 = vlaneseq
        %v4921 = vshrl.u32 %v4920, 7
        %v4922 = vsub.s32 2, %v4921
        %v4923 = vrot.slane %v4910, %v4922
        %v4924 = vlaneseq
        %v4925 = vshrl.u32 %v4924, 7
        %v4926 = vsub.s32 3, %v4925
        %v4927 = vrot.slane %v4910, %v4926
        %v4928 = vlaneseq
        %v4929 = vshrl.u32 %v4928, 7
        %v4930 = vsub.s32 4, %v4929
        %v4931 = vrot.slane %v4910, %v4930
        %v4932 = vlaneseq
        %v4933 = vshrl.u32 %v4932, 7
        %v4934 = vsub.s32 5, %v4933
        %v4935 = vrot.slane %v4910, %v4934
        %v4936 = vlaneseq
        %v4937 = vshrl.u32 %v4936, 7
        %v4938 = vsub.s32 6, %v4937
        %v4939 = vrot.slane %v4910, %v4938
        %v4940 = vlaneseq
        %v4941 = vshrl.u32 %v4940, 7
        %v4942 = vsub.s32 7, %v4941
        %v4943 = vrot.slane %v4910, %v4942
        %v4954 = vunpack.c.l.b16 %v4826
        %v4955 = vunpack.c.l.b16 %v4827
        %v4956 = vpack.c.b16 %v4955, %v4954
        %v5022 = vunpack.c.l.b16 %v4828
        %v5023 = vunpack.c.h.b16 %v4828
        %v5024 = vunpack.c.l.b16 %v4829
        %v5025 = vunpack.c.h.b16 %v4829
        %v5026 = vunpack.c.l.b16 %v4830
        %v5027 = vunpack.c.h.b16 %v4830
        %v5028 = vunpack.c.l.b16 %v4831
        %v5029 = vunpack.c.h.b16 %v4831
        %v5030 = vunpack.c.l.b16 %v4832
        %v5031 = vunpack.c.h.b16 %v4832
        %v5032 = vunpack.c.l.b16 %v4833
        %v5033 = vunpack.c.h.b16 %v4833
        %v5034 = vunpack.c.l.b16 %v4834
        %v5035 = vunpack.c.h.b16 %v4834
        %v5036 = vunpack.c.l.b16 %v4835
        %v5037 = vunpack.c.h.b16 %v4835
        %v5038 = vunpack.c.l.b16 %v4836
        %v5039 = vunpack.c.h.b16 %v4836
        %v5040 = vunpack.c.l.b16 %v4837
        %v5041 = vunpack.c.h.b16 %v4837
        %v5042 = vunpack.c.l.b16 %v4838
        %v5043 = vunpack.c.h.b16 %v4838
        %v5044 = vunpack.c.l.b16 %v4839
        %v5045 = vunpack.c.h.b16 %v4839
        %v5046 = vunpack.c.l.b16 %v4840
        %v5047 = vunpack.c.h.b16 %v4840
        %v5048 = vunpack.c.l.b16 %v4841
        %v5049 = vunpack.c.h.b16 %v4841
        %v5050 = vunpack.c.l.b16 %v4842
        %v5051 = vunpack.c.h.b16 %v4842
        %v5052 = vunpack.c.l.b16 %v4843
        %v5053 = vunpack.c.h.b16 %v4843
        %v5054 = vunpack.c.l.b16 %v4844
        %v5055 = vunpack.c.h.b16 %v4844
        %v5056 = vunpack.c.l.b16 %v4845
        %v5057 = vunpack.c.h.b16 %v4845
        %v5058 = vunpack.c.l.b16 %v4846
        %v5059 = vunpack.c.h.b16 %v4846
        %v5060 = vunpack.c.l.b16 %v4847
        %v5061 = vunpack.c.h.b16 %v4847
        %v5062 = vunpack.c.l.b16 %v4848
        %v5063 = vunpack.c.h.b16 %v4848
        %v5064 = vunpack.c.l.b16 %v4849
        %v5065 = vunpack.c.h.b16 %v4849
        %v5066 = vunpack.c.l.b16 %v4850
        %v5067 = vunpack.c.h.b16 %v4850
        %v5068 = vunpack.c.l.b16 %v4851
        %v5069 = vunpack.c.h.b16 %v4851
        %v5070 = vunpack.c.l.b16 %v4852
        %v5071 = vunpack.c.h.b16 %v4852
        %v5072 = vunpack.c.l.b16 %v4853
        %v5073 = vunpack.c.h.b16 %v4853
        %v5074 = vunpack.c.l.b16 %v4854
        %v5075 = vunpack.c.h.b16 %v4854
        %v5076 = vunpack.c.l.b16 %v4855
        %v5077 = vunpack.c.h.b16 %v4855
        %v5078 = vunpack.c.l.b16 %v4856
        %v5079 = vunpack.c.h.b16 %v4856
        %v5080 = vunpack.c.l.b16 %v4857
        %v5081 = vunpack.c.h.b16 %v4857
        %v5082 = vunpack.c.l.b16 %v4858
        %v5083 = vunpack.c.h.b16 %v4858
        %v5084 = vunpack.c.l.b16 %v4859
        %v5085 = vunpack.c.h.b16 %v4859
        %v5086 = vunpack.c.l.b16 %v4860
        %v5087 = vunpack.c.h.b16 %v4860
        %v5088 = vunpack.c.l.b16 %v4861
        %v5089 = vunpack.c.h.b16 %v4861
        %v5090 = vunpack.c.l.b16 %v4862
        %v5091 = vunpack.c.h.b16 %v4862
        %v5092 = vunpack.c.l.b16 %v4863
        %v5093 = vunpack.c.h.b16 %v4863
        %v5094 = vunpack.c.l.b16 %v4864
        %v5095 = vunpack.c.h.b16 %v4864
        %v5096 = vunpack.c.l.b16 %v4865
        %v5097 = vunpack.c.h.b16 %v4865
        %v5098 = vunpack.c.l.b16 %v4866
        %v5099 = vunpack.c.h.b16 %v4866
        %v5100 = vunpack.c.l.b16 %v4867
        %v5101 = vunpack.c.h.b16 %v4867
        %v5102 = vunpack.c.l.b16 %v4868
        %v5103 = vunpack.c.h.b16 %v4868
        %v5104 = vunpack.c.l.b16 %v4869
        %v5105 = vunpack.c.h.b16 %v4869
        %v5106 = vunpack.c.l.b16 %v4870
        %v5107 = vunpack.c.h.b16 %v4870
        %v5108 = vunpack.c.l.b16 %v4871
        %v5109 = vunpack.c.h.b16 %v4871
        %v5110 = vunpack.c.l.b16 %v4872
        %v5111 = vunpack.c.h.b16 %v4872
        %v5112 = vunpack.c.l.b16 %v4873
        %v5113 = vunpack.c.h.b16 %v4873
        %v5114 = vunpack.c.l.b16 %v4874
        %v5115 = vunpack.c.h.b16 %v4874
        %v5116 = vunpack.c.l.b16 %v4875
        %v5117 = vunpack.c.h.b16 %v4875
        %v5118 = vunpack.c.l.b16 %v4876
        %v5119 = vunpack.c.h.b16 %v4876
        %v5120 = vunpack.c.l.b16 %v4877
        %v5121 = vunpack.c.h.b16 %v4877
        %v5122 = vunpack.c.l.b16 %v4878
        %v5123 = vunpack.c.h.b16 %v4878
        %v5124 = vunpack.c.l.b16 %v4879
        %v5125 = vunpack.c.h.b16 %v4879
        %v5126 = vunpack.c.l.b16 %v4880
        %v5127 = vunpack.c.h.b16 %v4880
        %v5128 = vunpack.c.l.b16 %v4881
        %v5129 = vunpack.c.h.b16 %v4881
        %v5130 = vunpack.c.l.b16 %v4882
        %v5131 = vunpack.c.h.b16 %v4882
        %v5132 = vunpack.c.l.b16 %v4883
        %v5133 = vunpack.c.h.b16 %v4883
        %v5134 = vunpack.c.l.b16 %v4884
        %v5135 = vunpack.c.h.b16 %v4884
        %v5136 = vunpack.c.l.b16 %v4885
        %v5137 = vunpack.c.h.b16 %v4885
        %v5138 = vunpack.c.l.b16 %v4886
        %v5139 = vunpack.c.h.b16 %v4886
        %v5140 = vunpack.c.l.b16 %v4887
        %v5141 = vunpack.c.h.b16 %v4887
        %v5142 = vunpack.c.l.b16 %v4888
        %v5143 = vunpack.c.h.b16 %v4888
        %v5144 = vunpack.c.l.b16 %v4889
        %v5145 = vunpack.c.h.b16 %v4889
        %v5146 = vunpack.c.l.b16 %v4890
        %v5147 = vunpack.c.h.b16 %v4890
        %v5148 = vunpack.c.l.b16 %v4891
        %v5149 = vunpack.c.h.b16 %v4891
        %v5150 = vpack.c.b16 %v5030, %v5022
        %v5151 = vpack.c.b16 %v5031, %v5023
        %v5152 = vpack.c.b16 %v5032, %v5024
        %v5153 = vpack.c.b16 %v5033, %v5025
        %v5154 = vpack.c.b16 %v5034, %v5026
        %v5155 = vpack.c.b16 %v5035, %v5027
        %v5156 = vpack.c.b16 %v5036, %v5028
        %v5157 = vpack.c.b16 %v5037, %v5029
        %v5158 = vpack.c.b16 %v5046, %v5038
        %v5159 = vpack.c.b16 %v5047, %v5039
        %v5160 = vpack.c.b16 %v5048, %v5040
        %v5161 = vpack.c.b16 %v5049, %v5041
        %v5162 = vpack.c.b16 %v5050, %v5042
        %v5163 = vpack.c.b16 %v5051, %v5043
        %v5164 = vpack.c.b16 %v5052, %v5044
        %v5165 = vpack.c.b16 %v5053, %v5045
        %v5166 = vpack.c.b16 %v5062, %v5054
        %v5167 = vpack.c.b16 %v5063, %v5055
        %v5168 = vpack.c.b16 %v5064, %v5056
        %v5169 = vpack.c.b16 %v5065, %v5057
        %v5170 = vpack.c.b16 %v5066, %v5058
        %v5171 = vpack.c.b16 %v5067, %v5059
        %v5172 = vpack.c.b16 %v5068, %v5060
        %v5173 = vpack.c.b16 %v5069, %v5061
        %v5174 = vpack.c.b16 %v5078, %v5070
        %v5175 = vpack.c.b16 %v5079, %v5071
        %v5176 = vpack.c.b16 %v5080, %v5072
        %v5177 = vpack.c.b16 %v5081, %v5073
        %v5178 = vpack.c.b16 %v5082, %v5074
        %v5179 = vpack.c.b16 %v5083, %v5075
        %v5180 = vpack.c.b16 %v5084, %v5076
        %v5181 = vpack.c.b16 %v5085, %v5077
        %v5182 = vpack.c.b16 %v5094, %v5086
        %v5183 = vpack.c.b16 %v5095, %v5087
        %v5184 = vpack.c.b16 %v5096, %v5088
        %v5185 = vpack.c.b16 %v5097, %v5089
        %v5186 = vpack.c.b16 %v5098, %v5090
        %v5187 = vpack.c.b16 %v5099, %v5091
        %v5188 = vpack.c.b16 %v5100, %v5092
        %v5189 = vpack.c.b16 %v5101, %v5093
        %v5190 = vpack.c.b16 %v5110, %v5102
        %v5191 = vpack.c.b16 %v5111, %v5103
        %v5192 = vpack.c.b16 %v5112, %v5104
        %v5193 = vpack.c.b16 %v5113, %v5105
        %v5194 = vpack.c.b16 %v5114, %v5106
        %v5195 = vpack.c.b16 %v5115, %v5107
        %v5196 = vpack.c.b16 %v5116, %v5108
        %v5197 = vpack.c.b16 %v5117, %v5109
        %v5198 = vpack.c.b16 %v5126, %v5118
        %v5199 = vpack.c.b16 %v5127, %v5119
        %v5200 = vpack.c.b16 %v5128, %v5120
        %v5201 = vpack.c.b16 %v5129, %v5121
        %v5202 = vpack.c.b16 %v5130, %v5122
        %v5203 = vpack.c.b16 %v5131, %v5123
        %v5204 = vpack.c.b16 %v5132, %v5124
        %v5205 = vpack.c.b16 %v5133, %v5125
        %v5206 = vpack.c.b16 %v5142, %v5134
        %v5207 = vpack.c.b16 %v5143, %v5135
        %v5208 = vpack.c.b16 %v5144, %v5136
        %v5209 = vpack.c.b16 %v5145, %v5137
        %v5210 = vpack.c.b16 %v5146, %v5138
        %v5211 = vpack.c.b16 %v5147, %v5139
        %v5212 = vpack.c.b16 %v5148, %v5140
        %v5213 = vpack.c.b16 %v5149, %v5141
        %5278 = vmatprep.subr.bf16.mxu0 %v5151
        %5279 = vmatpush1.bf16.msra.mxu0 %v5150
        %5280 = vmatprep.subr.bf16.mxu0 %v5159
        %5281 = vmatpush1.bf16.msra.mxu0 %v5158
        %5282 = vmatprep.subr.bf16.mxu0 %v5167
        %5283 = vmatpush1.bf16.msra.mxu0 %v5166
        %5284 = vmatprep.subr.bf16.mxu0 %v5175
        %5285 = vmatpush1.bf16.msra.mxu0 %v5174
        %5286 = vmatprep.subr.bf16.mxu0 %v5183
        %5287 = vmatpush1.bf16.msra.mxu0 %v5182
        %5288 = vmatprep.subr.bf16.mxu0 %v5191
        %5289 = vmatpush1.bf16.msra.mxu0 %v5190
        %5290 = vmatprep.subr.bf16.mxu0 %v5199
        %5291 = vmatpush1.bf16.msra.mxu0 %v5198
        %5292 = vmatprep.subr.bf16.mxu0 %v5207
        %5293 = vmatpush1.bf16.msra.mxu0 %v5206
        %5294 = vmatprep.subr.bf16.mxu0 0
        %5295 = vmatpush1.bf16.msra.mxu0 0
        %5296 = vmatprep.subr.bf16.mxu0 0
        %5297 = vmatpush1.bf16.msra.mxu0 0
        %5298 = vmatprep.subr.bf16.mxu0 0
        %5299 = vmatpush1.bf16.msra.mxu0 0
        %5300 = vmatprep.subr.bf16.mxu0 0
        %5301 = vmatpush1.bf16.msra.mxu0 0
        %5302 = vmatprep.subr.bf16.mxu0 0
        %5303 = vmatpush1.bf16.msra.mxu0 0
        %5304 = vmatprep.subr.bf16.mxu0 0
        %5305 = vmatpush1.bf16.msra.mxu0 0
        %5306 = vmatprep.subr.bf16.mxu0 0
        %5307 = vmatpush1.bf16.msra.mxu0 0
        %5308 = vmatprep.subr.bf16.mxu0 0
        %5309 = vmatpush1.bf16.msra.mxu0 0
        %5310 = vmatprep.mubr.bf16.mxu0 0
        %5311 = vmatmul.mubr.bf16.gmra.mrb[0].mxu0 %v4956
        %v5312 = vpop.f32.mrb[0].mxu0
        %v5313 = vadd.f32 %v4915, %v5312
        %v5314 = vpop.f32.mrb[0].mxu0
        %v5315 = vadd.f32 %v4919, %v5314
        %v5316 = vpop.f32.mrb[0].mxu0
        %v5317 = vadd.f32 %v4915, %v5316
        %v5318 = vpop.f32.mrb[0].mxu0
        %v5319 = vadd.f32 %v4919, %v5318
        %5320 = vdwg.mxu0
        %5321 = vmatprep.subr.bf16.mxu0 %v5153
        %5322 = vmatpush1.bf16.msra.mxu0 %v5152
        %5323 = vmatprep.subr.bf16.mxu0 %v5161
        %5324 = vmatpush1.bf16.msra.mxu0 %v5160
        %5325 = vmatprep.subr.bf16.mxu0 %v5169
        %5326 = vmatpush1.bf16.msra.mxu0 %v5168
        %5327 = vmatprep.subr.bf16.mxu0 %v5177
        %5328 = vmatpush1.bf16.msra.mxu0 %v5176
        %5329 = vmatprep.subr.bf16.mxu0 %v5185
        %5330 = vmatpush1.bf16.msra.mxu0 %v5184
        %5331 = vmatprep.subr.bf16.mxu0 %v5193
        %5332 = vmatpush1.bf16.msra.mxu0 %v5192
        %5333 = vmatprep.subr.bf16.mxu0 %v5201
        %5334 = vmatpush1.bf16.msra.mxu0 %v5200
        %5335 = vmatprep.subr.bf16.mxu0 %v5209
        %5336 = vmatpush1.bf16.msra.mxu0 %v5208
        %5337 = vmatprep.subr.bf16.mxu0 0
        %5338 = vmatpush1.bf16.msra.mxu0 0
        %5339 = vmatprep.subr.bf16.mxu0 0
        %5340 = vmatpush1.bf16.msra.mxu0 0
        %5341 = vmatprep.subr.bf16.mxu0 0
        %5342 = vmatpush1.bf16.msra.mxu0 0
        %5343 = vmatprep.subr.bf16.mxu0 0
        %5344 = vmatpush1.bf16.msra.mxu0 0
        %5345 = vmatprep.subr.bf16.mxu0 0
        %5346 = vmatpush1.bf16.msra.mxu0 0
        %5347 = vmatprep.subr.bf16.mxu0 0
        %5348 = vmatpush1.bf16.msra.mxu0 0
        %5349 = vmatprep.subr.bf16.mxu0 0
        %5350 = vmatpush1.bf16.msra.mxu0 0
        %5351 = vmatprep.subr.bf16.mxu0 0
        %5352 = vmatpush1.bf16.msra.mxu0 0
        %5353 = vmatprep.mubr.bf16.mxu0 0
        %5354 = vmatmul.mubr.bf16.gmra.mrb[0].mxu0 %v4956
        %v5355 = vpop.f32.mrb[0].mxu0
        %v5356 = vadd.f32 %v4923, %v5355
        %v5357 = vpop.f32.mrb[0].mxu0
        %v5358 = vadd.f32 %v4927, %v5357
        %v5359 = vpop.f32.mrb[0].mxu0
        %v5360 = vadd.f32 %v4923, %v5359
        %v5361 = vpop.f32.mrb[0].mxu0
        %v5362 = vadd.f32 %v4927, %v5361
        %5363 = vdwg.mxu0
        %5364 = vmatprep.subr.bf16.mxu0 %v5155
        %5365 = vmatpush1.bf16.msra.mxu0 %v5154
        %5366 = vmatprep.subr.bf16.mxu0 %v5163
        %5367 = vmatpush1.bf16.msra.mxu0 %v5162
        %5368 = vmatprep.subr.bf16.mxu0 %v5171
        %5369 = vmatpush1.bf16.msra.mxu0 %v5170
        %5370 = vmatprep.subr.bf16.mxu0 %v5179
        %5371 = vmatpush1.bf16.msra.mxu0 %v5178
        %5372 = vmatprep.subr.bf16.mxu0 %v5187
        %5373 = vmatpush1.bf16.msra.mxu0 %v5186
        %5374 = vmatprep.subr.bf16.mxu0 %v5195
        %5375 = vmatpush1.bf16.msra.mxu0 %v5194
        %5376 = vmatprep.subr.bf16.mxu0 %v5203
        %5377 = vmatpush1.bf16.msra.mxu0 %v5202
        %5378 = vmatprep.subr.bf16.mxu0 %v5211
        %5379 = vmatpush1.bf16.msra.mxu0 %v5210
        %5380 = vmatprep.subr.bf16.mxu0 0
        %5381 = vmatpush1.bf16.msra.mxu0 0
        %5382 = vmatprep.subr.bf16.mxu0 0
        %5383 = vmatpush1.bf16.msra.mxu0 0
        %5384 = vmatprep.subr.bf16.mxu0 0
        %5385 = vmatpush1.bf16.msra.mxu0 0
        %5386 = vmatprep.subr.bf16.mxu0 0
        %5387 = vmatpush1.bf16.msra.mxu0 0
        %5388 = vmatprep.subr.bf16.mxu0 0
        %5389 = vmatpush1.bf16.msra.mxu0 0
        %5390 = vmatprep.subr.bf16.mxu0 0
        %5391 = vmatpush1.bf16.msra.mxu0 0
        %5392 = vmatprep.subr.bf16.mxu0 0
        %5393 = vmatpush1.bf16.msra.mxu0 0
        %5394 = vmatprep.subr.bf16.mxu0 0
        %5395 = vmatpush1.bf16.msra.mxu0 0
        %5396 = vmatprep.mubr.bf16.mxu0 0
        %5397 = vmatmul.mubr.bf16.gmra.mrb[0].mxu0 %v4956
        %v5398 = vpop.f32.mrb[0].mxu0
        %v5399 = vadd.f32 %v4931, %v5398
        %v5400 = vpop.f32.mrb[0].mxu0
        %v5401 = vadd.f32 %v4935, %v5400
        %v5402 = vpop.f32.mrb[0].mxu0
        %v5403 = vadd.f32 %v4931, %v5402
        %v5404 = vpop.f32.mrb[0].mxu0
        %v5405 = vadd.f32 %v4935, %v5404
        %5406 = vdwg.mxu0
        %5407 = vmatprep.subr.bf16.mxu0 %v5157
        %5408 = vmatpush1.bf16.msra.mxu0 %v5156
        %5409 = vmatprep.subr.bf16.mxu0 %v5165
        %5410 = vmatpush1.bf16.msra.mxu0 %v5164
        %5411 = vmatprep.subr.bf16.mxu0 %v5173
        %5412 = vmatpush1.bf16.msra.mxu0 %v5172
        %5413 = vmatprep.subr.bf16.mxu0 %v5181
        %5414 = vmatpush1.bf16.msra.mxu0 %v5180
        %5415 = vmatprep.subr.bf16.mxu0 %v5189
        %5416 = vmatpush1.bf16.msra.mxu0 %v5188
        %5417 = vmatprep.subr.bf16.mxu0 %v5197
        %5418 = vmatpush1.bf16.msra.mxu0 %v5196
        %5419 = vmatprep.subr.bf16.mxu0 %v5205
        %5420 = vmatpush1.bf16.msra.mxu0 %v5204
        %5421 = vmatprep.subr.bf16.mxu0 %v5213
        %5422 = vmatpush1.bf16.msra.mxu0 %v5212
        %5423 = vmatprep.subr.bf16.mxu0 0
        %5424 = vmatpush1.bf16.msra.mxu0 0
        %5425 = vmatprep.subr.bf16.mxu0 0
        %5426 = vmatpush1.bf16.msra.mxu0 0
        %5427 = vmatprep.subr.bf16.mxu0 0
        %5428 = vmatpush1.bf16.msra.mxu0 0
        %5429 = vmatprep.subr.bf16.mxu0 0
        %5430 = vmatpush1.bf16.msra.mxu0 0
        %5431 = vmatprep.subr.bf16.mxu0 0
        %5432 = vmatpush1.bf16.msra.mxu0 0
        %5433 = vmatprep.subr.bf16.mxu0 0
        %5434 = vmatpush1.bf16.msra.mxu0 0
        %5435 = vmatprep.subr.bf16.mxu0 0
        %5436 = vmatpush1.bf16.msra.mxu0 0
        %5437 = vmatprep.subr.bf16.mxu0 0
        %5438 = vmatpush1.bf16.msra.mxu0 0
        %5439 = vmatprep.mubr.bf16.mxu0 0
        %5440 = vmatmul.mubr.bf16.gmra.mrb[0].mxu0 %v4956
        %v5441 = vpop.f32.mrb[0].mxu0
        %v5442 = vadd.f32 %v4939, %v5441
        %v5443 = vpop.f32.mrb[0].mxu0
        %v5444 = vadd.f32 %v4943, %v5443
        %v5445 = vpop.f32.mrb[0].mxu0
        %v5446 = vadd.f32 %v4939, %v5445
        %v5447 = vpop.f32.mrb[0].mxu0
        %v5448 = vadd.f32 %v4943, %v5447
        %5449 = vdwg.mxu0
        %v5450 = vmax.f32 %v4892, %v5313
        %v5451 = vmax.f32 %v4893, %v5315
        %v5452 = vmax.f32 %v4894, %v5356
        %v5453 = vmax.f32 %v4895, %v5358
        %v5454 = vmax.f32 %v4896, %v5399
        %v5455 = vmax.f32 %v4897, %v5401
        %v5456 = vmax.f32 %v4898, %v5442
        %v5457 = vmax.f32 %v4899, %v5444
        %v5458 = vmax.f32 %v4900, %v5317
        %v5459 = vmax.f32 %v4901, %v5319
        %v5460 = vmax.f32 %v4902, %v5360
        %v5461 = vmax.f32 %v4903, %v5362
        %v5462 = vmax.f32 %v4904, %v5403
        %v5463 = vmax.f32 %v4905, %v5405
        %v5464 = vmax.f32 %v4906, %v5446
        %v5465 = vmax.f32 %v4907, %v5448
        %5466 = vst [vmem:[#allocation2] sm:$0xff] %v5450
        %5467 = vst [vmem:[#allocation2 + $0x8] sm:$0xff] %v5451
        %5468 = vst [vmem:[#allocation2 + $0x10] sm:$0xff] %v5452
        %5469 = vst [vmem:[#allocation2 + $0x18] sm:$0xff] %v5453
        %5470 = vst [vmem:[#allocation2 + $0x20] sm:$0xff] %v5454
        %5471 = vst [vmem:[#allocation2 + $0x28] sm:$0xff] %v5455
        %5472 = vst [vmem:[#allocation2 + $0x30] sm:$0xff] %v5456
        %5473 = vst [vmem:[#allocation2 + $0x38] sm:$0xff] %v5457
        %5474 = vst [vmem:[#allocation2 + $0x40] sm:$0xff] %v5458
        %5475 = vst [vmem:[#allocation2 + $0x48] sm:$0xff] %v5459
        %5476 = vst [vmem:[#allocation2 + $0x50] sm:$0xff] %v5460
        %5477 = vst [vmem:[#allocation2 + $0x58] sm:$0xff] %v5461
        %5478 = vst [vmem:[#allocation2 + $0x60] sm:$0xff] %v5462
        %5479 = vst [vmem:[#allocation2 + $0x68] sm:$0xff] %v5463
        %5480 = vst [vmem:[#allocation2 + $0x70] sm:$0xff] %v5464
        %5481 = vst [vmem:[#allocation2 + $0x78] sm:$0xff] %v5465
        %v5482 = vld [vmem:[#allocation2] sm:$0xff]
        %v5483 = vld [vmem:[#allocation2 + $0x8] sm:$0xff]
        %v5484 = vld [vmem:[#allocation2 + $0x10] sm:$0xff]
        %v5485 = vld [vmem:[#allocation2 + $0x18] sm:$0xff]
        %v5486 = vld [vmem:[#allocation2 + $0x20] sm:$0xff]
        %v5487 = vld [vmem:[#allocation2 + $0x28] sm:$0xff]
        %v5488 = vld [vmem:[#allocation2 + $0x30] sm:$0xff]
        %v5489 = vld [vmem:[#allocation2 + $0x38] sm:$0xff]
        %v5490 = vld [vmem:[#allocation2 + $0x40] sm:$0xff]
        %v5491 = vld [vmem:[#allocation2 + $0x48] sm:$0xff]
        %v5492 = vld [vmem:[#allocation2 + $0x50] sm:$0xff]
        %v5493 = vld [vmem:[#allocation2 + $0x58] sm:$0xff]
        %v5494 = vld [vmem:[#allocation2 + $0x60] sm:$0xff]
        %v5495 = vld [vmem:[#allocation2 + $0x68] sm:$0xff]
        %v5496 = vld [vmem:[#allocation2 + $0x70] sm:$0xff]
        %v5497 = vld [vmem:[#allocation2 + $0x78] sm:$0xff]
        %v5498 = vld [vmem:[%s282] sm:$0xff]
        %v5500 = vlaneseq
        %v5501 = vshrl.u32 %v5500, 7
        %v5502 = vsub.s32 0, %v5501
        %v5503 = vrot.slane %v5498, %v5502
        %v5504 = vlaneseq
        %v5505 = vshrl.u32 %v5504, 7
        %v5506 = vsub.s32 1, %v5505
        %v5507 = vrot.slane %v5498, %v5506
        %v5508 = vlaneseq
        %v5509 = vshrl.u32 %v5508, 7
        %v5510 = vsub.s32 2, %v5509
        %v5511 = vrot.slane %v5498, %v5510
        %v5512 = vlaneseq
        %v5513 = vshrl.u32 %v5512, 7
        %v5514 = vsub.s32 3, %v5513
        %v5515 = vrot.slane %v5498, %v5514
        %v5516 = vlaneseq
        %v5517 = vshrl.u32 %v5516, 7
        %v5518 = vsub.s32 4, %v5517
        %v5519 = vrot.slane %v5498, %v5518
        %v5520 = vlaneseq
        %v5521 = vshrl.u32 %v5520, 7
        %v5522 = vsub.s32 5, %v5521
        %v5523 = vrot.slane %v5498, %v5522
        %v5524 = vlaneseq
        %v5525 = vshrl.u32 %v5524, 7
        %v5526 = vsub.s32 6, %v5525
        %v5527 = vrot.slane %v5498, %v5526
        %v5528 = vlaneseq
        %v5529 = vshrl.u32 %v5528, 7
        %v5530 = vsub.s32 7, %v5529
        %v5531 = vrot.slane %v5498, %v5530
        %v5540 = vadd.f32 %v5482, %v5503
        %v5541 = vadd.f32 %v5483, %v5507
        %v5542 = vadd.f32 %v5484, %v5511
        %v5543 = vadd.f32 %v5485, %v5515
        %v5544 = vadd.f32 %v5486, %v5519
        %v5545 = vadd.f32 %v5487, %v5523
        %v5546 = vadd.f32 %v5488, %v5527
        %v5547 = vadd.f32 %v5489, %v5531
        %v5548 = vadd.f32 %v5490, %v5503
        %v5549 = vadd.f32 %v5491, %v5507
        %v5550 = vadd.f32 %v5492, %v5511
        %v5551 = vadd.f32 %v5493, %v5515
        %v5552 = vadd.f32 %v5494, %v5519
        %v5553 = vadd.f32 %v5495, %v5523
        %v5554 = vadd.f32 %v5496, %v5527
        %v5555 = vadd.f32 %v5497, %v5531
        %v5556 = vmax.f32 %v5540, 0.0
        %v5557 = vmax.f32 %v5541, 0.0
        %v5558 = vmax.f32 %v5542, 0.0
        %v5559 = vmax.f32 %v5543, 0.0
        %v5560 = vmax.f32 %v5544, 0.0
        %v5561 = vmax.f32 %v5545, 0.0
        %v5562 = vmax.f32 %v5546, 0.0
        %v5563 = vmax.f32 %v5547, 0.0
        %v5564 = vmax.f32 %v5548, 0.0
        %v5565 = vmax.f32 %v5549, 0.0
        %v5566 = vmax.f32 %v5550, 0.0
        %v5567 = vmax.f32 %v5551, 0.0
        %v5568 = vmax.f32 %v5552, 0.0
        %v5569 = vmax.f32 %v5553, 0.0
        %v5570 = vmax.f32 %v5554, 0.0
        %v5571 = vmax.f32 %v5555, 0.0
        %v5572 = vpack.c.bf16 %v5564, %v5556
        %v5573 = vpack.c.bf16 %v5565, %v5557
        %v5574 = vpack.c.bf16 %v5566, %v5558
        %v5575 = vpack.c.bf16 %v5567, %v5559
        %v5576 = vpack.c.bf16 %v5568, %v5560
        %v5577 = vpack.c.bf16 %v5569, %v5561
        %v5578 = vpack.c.bf16 %v5570, %v5562
        %v5579 = vpack.c.bf16 %v5571, %v5563
        %v5588 = vunpack.c.l.b16 %v5572
        %v5589 = vunpack.c.l.b16 %v5573
        %v5590 = vunpack.c.l.b16 %v5574
        %v5591 = vunpack.c.l.b16 %v5575
        %v5592 = vunpack.c.l.b16 %v5576
        %v5593 = vunpack.c.l.b16 %v5577
        %v5594 = vunpack.c.l.b16 %v5578
        %v5595 = vunpack.c.l.b16 %v5579
        %v5596 = vunpack.c.h.b16 %v5572
        %v5597 = vunpack.c.h.b16 %v5573
        %v5598 = vunpack.c.h.b16 %v5574
        %v5599 = vunpack.c.h.b16 %v5575
        %v5600 = vunpack.c.h.b16 %v5576
        %v5601 = vunpack.c.h.b16 %v5577
        %v5602 = vunpack.c.h.b16 %v5578
        %v5603 = vunpack.c.h.b16 %v5579
        %v5604 = vpack.c.b16 %v5589, %v5588
        %v5605 = vpack.c.b16 %v5591, %v5590
        %v5606 = vpack.c.b16 %v5593, %v5592
        %v5607 = vpack.c.b16 %v5595, %v5594
        %v5608 = vpack.c.b16 %v5597, %v5596
        %v5609 = vpack.c.b16 %v5599, %v5598
        %v5610 = vpack.c.b16 %v5601, %v5600
        %v5611 = vpack.c.b16 %v5603, %v5602
        %5620 = vst [vmem:[%s325] sm:$0xff] %v5604
        %5621 = vst [vmem:[%s325 + $0x8] sm:$0xff] %v5605
        %5622 = vst [vmem:[%s325 + $0x10] sm:$0xff] %v5606
        %5623 = vst [vmem:[%s325 + $0x18] sm:$0xff] %v5607
        %5624 = vst [vmem:[%s325 + $0x20] sm:$0xff] %v5608
        %5625 = vst [vmem:[%s325 + $0x28] sm:$0xff] %v5609
        %5626 = vst [vmem:[%s325 + $0x30] sm:$0xff] %v5610
        %5627 = vst [vmem:[%s325 + $0x38] sm:$0xff] %v5611
        %s5628 = sand.u32 %s151, 1
        %s5629 = scalar_lea.sflag [#allocation5], %s5628
        %s5630 = sand.u32 %s151, 1
        %s5631 = smul.addr %s5630, 64
        %s5632 = scalar_lea.vmem [#allocation11], %s5631
        // Predicated region
        $region60: #{tpu_custom_call.1} parent=35 // pred_check
          %p5633 = pneg %p161
        $region61: #{tpu_custom_call.1} parent=35 // pred_check_branch
          %5635 = sbr.rel (%p5633) target = $region63
        $region62: #{tpu_custom_call.1} parent=35 // pred_region
          %s5636 = smul.u32 2, %s29
          %s5637 = smul.u32 8, %s30
          %s5639 = ssub.s32 1024, 1024
          %5640 = vsyncadd %s5629, %s5639
          %s5641 = smul.addr %s5636, 16
          %s5642 = sadd.s32 %s5637, %s5641
          %s5643 = smul.addr %s5642, 64
          %s5644 = scalar_lea.hbm %s4, %s5643
          %s5645 = sshll.u32 %s5632, 4
          %s5646 = int_to_ptr.vmem [resolvable:$true] %s5645
          %5651 = dma.vmem_to_hbm [thread:$0]  %s5646, 1024, %s5644, %s5629, 512, 1024, 32
        $region63: #{tpu_custom_call.1} parent=35 // pred_fallthru
          _
      $region36: #{tpu_custom_call.1} parent=5 // pred_fallthru
        _
      %p5652 = scmp.le.s32.totalorder 2, %s20
      // Predicated region
      $region64: #{tpu_custom_call.1} parent=5 // pred_check
        %p5653 = pneg %p5652
      $region65: #{tpu_custom_call.1} parent=5 // pred_check_branch
        %5655 = sbr.rel (%p5653) target = $region67
      $region66: #{tpu_custom_call.1} parent=5 // pred_region
        %s5656 = ssub.s32 %s20, 2
        // Predicated region
        $region68: #{tpu_custom_call.1} parent=66 // pred_check
          %p5657 = pneg %p167
        $region69: #{tpu_custom_call.1} parent=66 // pred_check_branch
          %5659 = sbr.rel (%p5657) target = $region71
        $region70: #{tpu_custom_call.1} parent=66 // pred_region
          %s5660 = sand.u32 %s152, 1
          %s5661 = scalar_lea.sflag [#allocation5], %s5660
          %s5662 = sand.u32 %s152, 1
          %s5663 = smul.addr %s5662, 64
          %s5664 = scalar_lea.vmem [#allocation11], %s5663
          %5665 = dma.done %s5661, 1024
        $region71: #{tpu_custom_call.1} parent=66 // pred_fallthru
          _
      $region67: #{tpu_custom_call.1} parent=5 // pred_fallthru
        _
    $region6: #{tpu_custom_call.1} parent=1 // loop_footer
      %s24 = sadd.s32 1, %s20
    $region7: #{tpu_custom_call.1} parent=1 // loop_footer_branch
      %19 = sbr.rel target = $region3
    $region8: #{tpu_custom_call.1} parent=1 // loop_exit
      _
    %5666 = vsyncpa [#allocation4], 1
    %s5667 = scalar_lea.sflag [#allocation4], 1
    %5668 = vsyncpa %s5667, 1
    %5669 = vsyncpa [#allocation7], 1
    %s5670 = scalar_lea.sflag [#allocation7], 1
    %5671 = vsyncpa %s5670, 1
    %5672 = vsyncpa [#allocation10], 1
    %s5673 = scalar_lea.sflag [#allocation10], 1
    %5674 = vsyncpa %s5673, 1
    %5675 = vsyncpa [#allocation5], 1
    %s5676 = scalar_lea.sflag [#allocation5], 1
    %5677 = vsyncpa %s5676, 1

</llo_original>
